<compile_context>
chip_gen: v6e
topology: v6e:2x2x1
jax: 0.10.0
libtpu: 0.0.40
codegen_flags: <defaults>
</compile_context>

<pallas_src>
import functools
import math

import jax
import jax.numpy as jnp
from jax.experimental import pallas as pl
from jax.experimental.pallas import tpu as pltpu


def _mha_kernel(q_ref, k_ref, v_ref, mask_ref,
                wq_ref, bq_ref, wk_ref, bk_ref, wv_ref, bv_ref,
                wo_ref, bo_ref, gamma_ref, beta_ref,
                out_ref, *attn_refs, n_heads):
    d_model = q_ref.shape[-1]
    d_k = d_model // n_heads
    scale = 1.0 / math.sqrt(d_k)
    bf16 = jnp.bfloat16

    x_q = q_ref[0]                       # (TQ, D) f32 -- also the residual
    x_k = k_ref[0]                       # (Sk, D) f32
    x_v = v_ref[0]                       # (Sk, D) f32
    masked = mask_ref[0] > 0.5           # (TQ, Sk) bool; True == mask out (hoisted once)

    # ---- QKV projections: bf16 MXU operands, f32 accumulation ----
    q = jnp.dot(x_q.astype(bf16), wq_ref[...],
                preferred_element_type=jnp.float32) + bq_ref[...]
    k = jnp.dot(x_k.astype(bf16), wk_ref[...],
                preferred_element_type=jnp.float32) + bk_ref[...]
    v = jnp.dot(x_v.astype(bf16), wv_ref[...],
                preferred_element_type=jnp.float32) + bv_ref[...]

    # Fold the 1/sqrt(d_k) scale into q once (S*D muls instead of H*S^2).
    q = q * scale

    tq = q.shape[0]
    s_kv = k.shape[0]

    # Head-split views; all heads handled by batched einsums (no python loop,
    # no explicit per-head transpose / concatenate).
    qh = q.reshape(tq, n_heads, d_k).astype(bf16)
    kh = k.reshape(s_kv, n_heads, d_k).astype(bf16)
    vh = v.reshape(s_kv, n_heads, d_k).astype(bf16)

    # scores: (H, TQ, Sk) in f32
    scores = jnp.einsum('qhd,khd->hqk', qh, kh,
                        preferred_element_type=jnp.float32)
    # Exact masked_fill(-1e9) semantics: fully-masked rows -> uniform 1/S,
    # same as the PyTorch reference (do NOT replace with -inf).
    scores = jnp.where(masked[None, :, :], jnp.float32(-1e9), scores)

    # Softmax in f32; divide goes to the EUP via approximate reciprocal.
    m = jnp.max(scores, axis=-1, keepdims=True)
    e = jnp.exp(scores - m)
    inv = pl.reciprocal(jnp.sum(e, axis=-1, keepdims=True), approx=True)
    probs = e * inv                                         # (H, TQ, Sk) f32

    if attn_refs:                                           # optional output
        attn_refs[0][0] = probs.astype(attn_refs[0].dtype)

    # context: (TQ, H, d_k) -> (TQ, D)
    ctx = jnp.einsum('hqk,khd->qhd', probs.astype(bf16), vh,
                     preferred_element_type=jnp.float32)
    context = ctx.reshape(tq, d_model)

    # Output projection + residual (residual stays f32).
    y = (jnp.dot(context.astype(bf16), wo_ref[...],
                 preferred_element_type=jnp.float32)
         + bo_ref[...] + x_q)

    # LayerNorm over last dim, f32 math (eps = 1e-5, biased variance).
    mean = jnp.mean(y, axis=-1, keepdims=True)
    var = jnp.mean((y - mean) ** 2, axis=-1, keepdims=True)
    normed = (y - mean) * jax.lax.rsqrt(var + 1e-5)
    out_ref[0] = (normed * gamma_ref[...] + beta_ref[...]).astype(out_ref.dtype)


def _pick_block_q(seq_len, max_block=256):
    """Largest q-tile (multiple of 8, divisor of S) capped at max_block."""
    if seq_len <= max_block:
        return seq_len
    for bq in range(max_block, 7, -8):
        if seq_len % bq == 0:
            return bq
    return seq_len


def multihead_attention(Q, K, V, attn_mask, params, *, n_heads,
                        return_attn=True, attn_dtype=jnp.float32,
                        block_q=None):
    """Fused MHA forward. Returns (out, attn) ; attn is None if return_attn=False."""
    B, S_q, D = Q.shape
    S_k = K.shape[1]
    assert D % n_heads == 0

    bq_blk = block_q or _pick_block_q(S_q)
    assert S_q % bq_blk == 0, "block_q must divide the query length"

    mask_f = attn_mask.astype(jnp.float32)

    bf16 = jnp.bfloat16
    # Pre-transpose Linear weights [out, in] -> [in, out]; bf16 for the MXU.
    wq_t = params["W_Q_w"].T.astype(bf16)
    wk_t = params["W_K_w"].T.astype(bf16)
    wv_t = params["W_V_w"].T.astype(bf16)
    wo_t = params["li1_w"].T.astype(bf16)
    bq = params["W_Q_b"].reshape(1, D).astype(jnp.float32)
    bk = params["W_K_b"].reshape(1, D).astype(jnp.float32)
    bv = params["W_V_b"].reshape(1, D).astype(jnp.float32)
    bo = params["li1_b"].reshape(1, D).astype(jnp.float32)
    gamma = params["ln_gamma"].reshape(1, D).astype(jnp.float32)
    beta = params["ln_beta"].reshape(1, D).astype(jnp.float32)

    kernel = functools.partial(_mha_kernel, n_heads=n_heads)

    q_spec = pl.BlockSpec((1, bq_blk, D), lambda b, qi: (b, qi, 0))
    kv_spec = pl.BlockSpec((1, S_k, D), lambda b, qi: (b, 0, 0))     # q-invariant: no re-DMA per q tile
    mask_spec = pl.BlockSpec((1, bq_blk, S_k), lambda b, qi: (b, qi, 0))
    # Weights/biases are grid-invariant (constant index_map), so the pipeline
    # only fetches them once.  For very large D on v7x (64 MiB VMEM) consider
    # pipeline_mode=pl.Buffered(1) here to halve their VMEM reservation.
    w_spec = pl.BlockSpec((D, D), lambda b, qi: (0, 0))
    vec_spec = pl.BlockSpec((1, D), lambda b, qi: (0, 0))

    out_shapes = [jax.ShapeDtypeStruct((B, S_q, D), jnp.float32)]
    out_specs = [pl.BlockSpec((1, bq_blk, D), lambda b, qi: (b, qi, 0))]
    if return_attn:
        out_shapes.append(jax.ShapeDtypeStruct((B, n_heads, S_q, S_k), attn_dtype))
        out_specs.append(
            pl.BlockSpec((1, n_heads, bq_blk, S_k), lambda b, qi: (b, 0, qi, 0)))

    results = pl.pallas_call(
        kernel,
        out_shape=tuple(out_shapes),
        grid=(B, S_q // bq_blk),
        in_specs=[q_spec, kv_spec, kv_spec, mask_spec,
                  w_spec, vec_spec,      # W_Q, b_Q
                  w_spec, vec_spec,      # W_K, b_K
                  w_spec, vec_spec,      # W_V, b_V
                  w_spec, vec_spec,      # li1 W, b
                  vec_spec, vec_spec],   # layer_norm gamma, beta
        out_specs=tuple(out_specs),
        compiler_params=pltpu.CompilerParams(
            dimension_semantics=("parallel", "parallel")),
    )(Q, K, V, mask_f, wq_t, bq, wk_t, bk, wv_t, bv, wo_t, bo, gamma, beta)

    if return_attn:
        out, attn = results
        return out, attn
    return results[0], None


def init_params(key, d_model):
    ks = jax.random.split(key, 8)
    s = 1.0 / math.sqrt(d_model)
    return {
        "W_Q_w": jax.random.uniform(ks[0], (d_model, d_model), jnp.float32, -s, s),
        "W_Q_b": jax.random.uniform(ks[1], (d_model,), jnp.float32, -s, s),
        "W_K_w": jax.random.uniform(ks[2], (d_model, d_model), jnp.float32, -s, s),
        "W_K_b": jax.random.uniform(ks[3], (d_model,), jnp.float32, -s, s),
        "W_V_w": jax.random.uniform(ks[4], (d_model, d_model), jnp.float32, -s, s),
        "W_V_b": jax.random.uniform(ks[5], (d_model,), jnp.float32, -s, s),
        "li1_w": jax.random.uniform(ks[6], (d_model, d_model), jnp.float32, -s, s),
        "li1_b": jax.random.uniform(ks[7], (d_model,), jnp.float32, -s, s),
        "ln_gamma": jnp.ones((d_model,), jnp.float32),
        "ln_beta": jnp.zeros((d_model,), jnp.float32),
    }


def _reference(Q, K, V, attn_mask, params, n_heads):
    """Pure-JAX mirror of the PyTorch module (f32)."""
    B, S, D = Q.shape
    Sk = K.shape[1]
    dk = D // n_heads

    def lin(x, w, b):
        return x @ w.T + b

    q = lin(Q, params["W_Q_w"], params["W_Q_b"])
    k = lin(K, params["W_K_w"], params["W_K_b"])
    v = lin(V, params["W_V_w"], params["W_V_b"])

    def split(x):
        return x.reshape(x.shape[0], x.shape[1], n_heads, dk).transpose(0, 2, 1, 3)

    qh, kh, vh = split(q), split(k), split(v)
    scores = (qh @ kh.transpose(0, 1, 3, 2)) / math.sqrt(dk)
    scores = jnp.where(attn_mask[:, None, :, :], jnp.float32(-1e9), scores)
    attn = jax.nn.softmax(scores, axis=-1)
    ctx = (attn @ vh).transpose(0, 2, 1, 3).reshape(B, S, D)
    out = lin(ctx, params["li1_w"], params["li1_b"]) + Q
    mean = out.mean(-1, keepdims=True)
    var = ((out - mean) ** 2).mean(-1, keepdims=True)
    normed = (out - mean) / jnp.sqrt(var + 1e-5)
    return normed * params["ln_gamma"] + params["ln_beta"], attn


if __name__ == "__main__":
    B, S, D, H = 2, 8, 32, 4   # batch, seq, d_model, n_heads (d_k = 8)

    key = jax.random.PRNGKey(0)
    k_q, k_k, k_v, k_p = jax.random.split(key, 4)

    Q = jax.random.normal(k_q, (B, S, D), jnp.float32)
    K = jax.random.normal(k_k, (B, S, D), jnp.float32)
    V = jax.random.normal(k_v, (B, S, D), jnp.float32)

    # causal-style mask: True (1) = masked out, as in torch masked_fill_
    causal = jnp.triu(jnp.ones((S, S), jnp.bool_), k=1)
    attn_mask = jnp.broadcast_to(causal, (B, S, S))

    params = init_params(k_p, D)

    out, attn = multihead_attention(Q, K, V, attn_mask, params, n_heads=H)
    jax.block_until_ready((out, attn))
    assert out.shape == (B, S, D)
    assert attn.shape == (B, H, S, S)

    # Optional fast path: no attention-probability writeback at all.
    out_only, no_attn = multihead_attention(Q, K, V, attn_mask, params,
                                            n_heads=H, return_attn=False)
    jax.block_until_ready(out_only)
    assert no_attn is None and out_only.shape == (B, S, D)

    # Loose parity check vs. the f32 reference (bf16 MXU + approx reciprocal).
    ref_out, ref_attn = _reference(Q, K, V, attn_mask, params, H)
    err_out = float(jnp.max(jnp.abs(out - ref_out)))
    err_attn = float(jnp.max(jnp.abs(attn - ref_attn)))
    assert err_out < 5e-2, f"output mismatch {err_out}"
    assert err_attn < 5e-2, f"attn mismatch {err_attn}"

    print("KERNEL_OK")
</pallas_src>

<mosaic_0001>
module attributes {stable_mosaic.version = 11 : i64} {
  func.func @_mha_kernel(%arg0: i32, %arg1: i32, %arg2: memref<1x8x32xf32, #tpu.memory_space<vmem>>, %arg3: memref<1x8x32xf32, #tpu.memory_space<vmem>>, %arg4: memref<1x8x32xf32, #tpu.memory_space<vmem>>, %arg5: memref<1x8x8xf32, #tpu.memory_space<vmem>>, %arg6: memref<32x32xbf16, #tpu.memory_space<vmem>>, %arg7: memref<1x32xf32, #tpu.memory_space<vmem>>, %arg8: memref<32x32xbf16, #tpu.memory_space<vmem>>, %arg9: memref<1x32xf32, #tpu.memory_space<vmem>>, %arg10: memref<32x32xbf16, #tpu.memory_space<vmem>>, %arg11: memref<1x32xf32, #tpu.memory_space<vmem>>, %arg12: memref<32x32xbf16, #tpu.memory_space<vmem>>, %arg13: memref<1x32xf32, #tpu.memory_space<vmem>>, %arg14: memref<1x32xf32, #tpu.memory_space<vmem>>, %arg15: memref<1x32xf32, #tpu.memory_space<vmem>>, %arg16: memref<1x8x32xf32, #tpu.memory_space<vmem>>, %arg17: memref<1x4x8x8xf32, #tpu.memory_space<vmem>>) attributes {dimension_semantics = [#tpu.dimension_semantics<parallel>, #tpu.dimension_semantics<parallel>], iteration_bounds = array<i64: 2, 1>, scalar_prefetch = 0 : i64, scratch_operands = 0 : i64, tpu.core_type = #tpu.core_type<tc>, window_params = [{transform_indices = @transform_0, window_bounds = array<i64: 1, 8, 32>}, {transform_indices = @transform_1, window_bounds = array<i64: 1, 8, 32>}, {transform_indices = @transform_2, window_bounds = array<i64: 1, 8, 32>}, {transform_indices = @transform_3, window_bounds = array<i64: 1, 8, 8>}, {pipeline_mode = #tpu.pipeline_mode<synchronous>, transform_indices = @transform_4, window_bounds = array<i64: 32, 32>}, {pipeline_mode = #tpu.pipeline_mode<synchronous>, transform_indices = @transform_5, window_bounds = array<i64: 1, 32>}, {pipeline_mode = #tpu.pipeline_mode<synchronous>, transform_indices = @transform_6, window_bounds = array<i64: 32, 32>}, {pipeline_mode = #tpu.pipeline_mode<synchronous>, transform_indices = @transform_7, window_bounds = array<i64: 1, 32>}, {pipeline_mode = #tpu.pipeline_mode<synchronous>, transform_indices = @transform_8, window_bounds = array<i64: 32, 32>}, {pipeline_mode = #tpu.pipeline_mode<synchronous>, transform_indices = @transform_9, window_bounds = array<i64: 1, 32>}, {pipeline_mode = #tpu.pipeline_mode<synchronous>, transform_indices = @transform_10, window_bounds = array<i64: 32, 32>}, {pipeline_mode = #tpu.pipeline_mode<synchronous>, transform_indices = @transform_11, window_bounds = array<i64: 1, 32>}, {pipeline_mode = #tpu.pipeline_mode<synchronous>, transform_indices = @transform_12, window_bounds = array<i64: 1, 32>}, {pipeline_mode = #tpu.pipeline_mode<synchronous>, transform_indices = @transform_13, window_bounds = array<i64: 1, 32>}, {transform_indices = @transform_14, window_bounds = array<i64: 1, 8, 32>}, {transform_indices = @transform_15, window_bounds = array<i64: 1, 4, 8, 8>}]} {
    %c0 = arith.constant 0 : index
    %c0_0 = arith.constant 0 : index
    %c0_1 = arith.constant 0 : index
    %0 = vector.load %arg2[%c0, %c0_0, %c0_1] : memref<1x8x32xf32, #tpu.memory_space<vmem>>, vector<1x8x32xf32>
    %1 = vector.shape_cast %0 : vector<1x8x32xf32> to vector<8x32xf32>
    %c0_2 = arith.constant 0 : index
    %c0_3 = arith.constant 0 : index
    %c0_4 = arith.constant 0 : index
    %2 = vector.load %arg3[%c0_2, %c0_3, %c0_4] : memref<1x8x32xf32, #tpu.memory_space<vmem>>, vector<1x8x32xf32>
    %3 = vector.shape_cast %2 : vector<1x8x32xf32> to vector<8x32xf32>
    %c0_5 = arith.constant 0 : index
    %c0_6 = arith.constant 0 : index
    %c0_7 = arith.constant 0 : index
    %4 = vector.load %arg4[%c0_5, %c0_6, %c0_7] : memref<1x8x32xf32, #tpu.memory_space<vmem>>, vector<1x8x32xf32>
    %5 = vector.shape_cast %4 : vector<1x8x32xf32> to vector<8x32xf32>
    %c0_8 = arith.constant 0 : index
    %c0_9 = arith.constant 0 : index
    %c0_10 = arith.constant 0 : index
    %6 = vector.load %arg5[%c0_8, %c0_9, %c0_10] : memref<1x8x8xf32, #tpu.memory_space<vmem>>, vector<1x8x8xf32>
    %7 = vector.shape_cast %6 : vector<1x8x8xf32> to vector<8x8xf32>
    %cst = arith.constant 5.000000e-01 : f32
    %8 = vector.broadcast %cst : f32 to vector<8x8xf32>
    %9 = arith.cmpf ogt, %7, %8 : vector<8x8xf32>
    %10 = arith.truncf %1 : vector<8x32xf32> to vector<8x32xbf16>
    %c0_11 = arith.constant 0 : index
    %c0_12 = arith.constant 0 : index
    %11 = vector.load %arg6[%c0_11, %c0_12] : memref<32x32xbf16, #tpu.memory_space<vmem>>, vector<32x32xbf16>
    %cst_13 = arith.constant dense<0.000000e+00> : vector<8x32xf32>
    %12 = tpu.matmul %10, %11, %cst_13 {dimension_numbers = #tpu.dot_dimension_numbers<[1], [0], [0], [1], [0, 0, 1, 1], [], []>} : vector<8x32xbf16>, vector<32x32xbf16>, vector<8x32xf32> -> vector<8x32xf32>
    %c0_14 = arith.constant 0 : index
    %c0_15 = arith.constant 0 : index
    %13 = vector.load %arg7[%c0_14, %c0_15] : memref<1x32xf32, #tpu.memory_space<vmem>>, vector<1x32xf32>
    %14 = vector.broadcast %13 : vector<1x32xf32> to vector<8x32xf32>
    %15 = arith.addf %12, %14 : vector<8x32xf32>
    %16 = arith.truncf %3 : vector<8x32xf32> to vector<8x32xbf16>
    %c0_16 = arith.constant 0 : index
    %c0_17 = arith.constant 0 : index
    %17 = vector.load %arg8[%c0_16, %c0_17] : memref<32x32xbf16, #tpu.memory_space<vmem>>, vector<32x32xbf16>
    %cst_18 = arith.constant dense<0.000000e+00> : vector<8x32xf32>
    %18 = tpu.matmul %16, %17, %cst_18 {dimension_numbers = #tpu.dot_dimension_numbers<[1], [0], [0], [1], [0, 0, 1, 1], [], []>} : vector<8x32xbf16>, vector<32x32xbf16>, vector<8x32xf32> -> vector<8x32xf32>
    %c0_19 = arith.constant 0 : index
    %c0_20 = arith.constant 0 : index
    %19 = vector.load %arg9[%c0_19, %c0_20] : memref<1x32xf32, #tpu.memory_space<vmem>>, vector<1x32xf32>
    %20 = vector.broadcast %19 : vector<1x32xf32> to vector<8x32xf32>
    %21 = arith.addf %18, %20 : vector<8x32xf32>
    %22 = arith.truncf %5 : vector<8x32xf32> to vector<8x32xbf16>
    %c0_21 = arith.constant 0 : index
    %c0_22 = arith.constant 0 : index
    %23 = vector.load %arg10[%c0_21, %c0_22] : memref<32x32xbf16, #tpu.memory_space<vmem>>, vector<32x32xbf16>
    %cst_23 = arith.constant dense<0.000000e+00> : vector<8x32xf32>
    %24 = tpu.matmul %22, %23, %cst_23 {dimension_numbers = #tpu.dot_dimension_numbers<[1], [0], [0], [1], [0, 0, 1, 1], [], []>} : vector<8x32xbf16>, vector<32x32xbf16>, vector<8x32xf32> -> vector<8x32xf32>
    %c0_24 = arith.constant 0 : index
    %c0_25 = arith.constant 0 : index
    %25 = vector.load %arg11[%c0_24, %c0_25] : memref<1x32xf32, #tpu.memory_space<vmem>>, vector<1x32xf32>
    %26 = vector.broadcast %25 : vector<1x32xf32> to vector<8x32xf32>
    %27 = arith.addf %24, %26 : vector<8x32xf32>
    %cst_26 = arith.constant 0.353553385 : f32
    %28 = vector.broadcast %cst_26 : f32 to vector<8x32xf32>
    %29 = arith.mulf %15, %28 : vector<8x32xf32>
    %30 = vector.shape_cast %29 : vector<8x32xf32> to vector<8x4x8xf32>
    %31 = arith.truncf %30 : vector<8x4x8xf32> to vector<8x4x8xbf16>
    %32 = vector.shape_cast %21 : vector<8x32xf32> to vector<8x4x8xf32>
    %33 = arith.truncf %32 : vector<8x4x8xf32> to vector<8x4x8xbf16>
    %34 = vector.shape_cast %27 : vector<8x32xf32> to vector<8x4x8xf32>
    %35 = arith.truncf %34 : vector<8x4x8xf32> to vector<8x4x8xbf16>
    "tpu.trace_start"() <{level = 10 : i32, message = "qhd,khd->hqk"}> : () -> ()
    %cst_27 = arith.constant dense<0.000000e+00> : vector<4x8x8xf32>
    %36 = tpu.matmul %31, %33, %cst_27 {dimension_numbers = #tpu.dot_dimension_numbers<[2], [2], [0], [0], [0, 1, 0, 0, 1, 0], [1], [1]>} : vector<8x4x8xbf16>, vector<8x4x8xbf16>, vector<4x8x8xf32> -> vector<4x8x8xf32>
    "tpu.trace_stop"() : () -> ()
    %37 = vector.shape_cast %9 : vector<8x8xi1> to vector<1x8x8xi1>
    %cst_28 = arith.constant -1.000000e+09 : f32
    %38 = vector.shape_cast %37 : vector<1x8x8xi1> to vector<1x8x8xi1>
    %39 = vector.broadcast %38 : vector<1x8x8xi1> to vector<4x8x8xi1>
    %40 = vector.broadcast %cst_28 : f32 to vector<4x8x8xf32>
    %41 = arith.select %39, %40, %36 : vector<4x8x8xi1>, vector<4x8x8xf32>
    %cst_29 = arith.constant dense<0xFF800000> : vector<4x8xf32>
    %42 = vector.multi_reduction <maximumf>, %41, %cst_29 [2] : vector<4x8x8xf32> to vector<4x8xf32>
    %43 = vector.shape_cast %42 : vector<4x8xf32> to vector<4x8x1xf32>
    %44 = vector.broadcast %43 : vector<4x8x1xf32> to vector<4x8x8xf32>
    %45 = arith.subf %41, %44 : vector<4x8x8xf32>
    %46 = math.exp %45 : vector<4x8x8xf32>
    %cst_30 = arith.constant dense<0.000000e+00> : vector<4x8xf32>
    %47 = vector.multi_reduction <add>, %46, %cst_30 [2] : vector<4x8x8xf32> to vector<4x8xf32>
    %48 = vector.shape_cast %47 : vector<4x8xf32> to vector<4x8x1xf32>
    %49 = tpu.reciprocal %48 {approx = true} : vector<4x8x1xf32> -> vector<4x8x1xf32>
    %50 = vector.broadcast %49 : vector<4x8x1xf32> to vector<4x8x8xf32>
    %51 = arith.mulf %46, %50 : vector<4x8x8xf32>
    %c0_31 = arith.constant 0 : index
    %c0_32 = arith.constant 0 : index
    %c0_33 = arith.constant 0 : index
    %c0_34 = arith.constant 0 : index
    %52 = vector.load %arg17[%c0_31, %c0_32, %c0_33, %c0_34] : memref<1x4x8x8xf32, #tpu.memory_space<vmem>>, vector<1x4x8x8xf32>
    %53 = vector.shape_cast %52 : vector<1x4x8x8xf32> to vector<4x8x8xf32>
    %54 = vector.shape_cast %51 : vector<4x8x8xf32> to vector<1x4x8x8xf32>
    tpu.vector_store %arg17[%c0_31, %c0_32, %c0_33, %c0_34], %54 {strides = array<i32>} : memref<1x4x8x8xf32, #tpu.memory_space<vmem>>, vector<1x4x8x8xf32>,
    %55 = arith.truncf %51 : vector<4x8x8xf32> to vector<4x8x8xbf16>
    "tpu.trace_start"() <{level = 10 : i32, message = "hqk,khd->qhd"}> : () -> ()
    %cst_35 = arith.constant dense<0.000000e+00> : vector<4x8x8xf32>
    %56 = tpu.matmul %35, %55, %cst_35 {dimension_numbers = #tpu.dot_dimension_numbers<[0], [2], [2], [1], [0, 1, 0, 2, 1, 1], [1], [0]>} : vector<8x4x8xbf16>, vector<4x8x8xbf16>, vector<4x8x8xf32> -> vector<4x8x8xf32>
    %57 = tpu.transpose %56, [2, 0, 1] : vector<4x8x8xf32> -> vector<8x4x8xf32>
    "tpu.trace_stop"() : () -> ()
    %58 = vector.shape_cast %57 : vector<8x4x8xf32> to vector<8x32xf32>
    %59 = arith.truncf %58 : vector<8x32xf32> to vector<8x32xbf16>
    %c0_36 = arith.constant 0 : index
    %c0_37 = arith.constant 0 : index
    %60 = vector.load %arg12[%c0_36, %c0_37] : memref<32x32xbf16, #tpu.memory_space<vmem>>, vector<32x32xbf16>
    %cst_38 = arith.constant dense<0.000000e+00> : vector<8x32xf32>
    %61 = tpu.matmul %59, %60, %cst_38 {dimension_numbers = #tpu.dot_dimension_numbers<[1], [0], [0], [1], [0, 0, 1, 1], [], []>} : vector<8x32xbf16>, vector<32x32xbf16>, vector<8x32xf32> -> vector<8x32xf32>
    %c0_39 = arith.constant 0 : index
    %c0_40 = arith.constant 0 : index
    %62 = vector.load %arg13[%c0_39, %c0_40] : memref<1x32xf32, #tpu.memory_space<vmem>>, vector<1x32xf32>
    %63 = vector.broadcast %62 : vector<1x32xf32> to vector<8x32xf32>
    %64 = arith.addf %61, %63 : vector<8x32xf32>
    %65 = arith.addf %64, %1 : vector<8x32xf32>
    %cst_41 = arith.constant dense<0.000000e+00> : vector<8xf32>
    %66 = vector.multi_reduction <add>, %65, %cst_41 [1] : vector<8x32xf32> to vector<8xf32>
    %67 = vector.shape_cast %66 : vector<8xf32> to vector<8x1xf32>
    %cst_42 = arith.constant 3.200000e+01 : f32
    %68 = vector.broadcast %cst_42 : f32 to vector<8x1xf32>
    %69 = arith.divf %67, %68 : vector<8x1xf32>
    %70 = vector.broadcast %69 : vector<8x1xf32> to vector<8x32xf32>
    %71 = arith.subf %65, %70 : vector<8x32xf32>
    %72 = arith.mulf %71, %71 : vector<8x32xf32>
    %cst_43 = arith.constant dense<0.000000e+00> : vector<8xf32>
    %73 = vector.multi_reduction <add>, %72, %cst_43 [1] : vector<8x32xf32> to vector<8xf32>
    %74 = vector.shape_cast %73 : vector<8xf32> to vector<8x1xf32>
    %cst_44 = arith.constant 3.200000e+01 : f32
    %75 = vector.broadcast %cst_44 : f32 to vector<8x1xf32>
    %76 = arith.divf %74, %75 : vector<8x1xf32>
    %77 = vector.broadcast %69 : vector<8x1xf32> to vector<8x32xf32>
    %78 = arith.subf %65, %77 : vector<8x32xf32>
    %cst_45 = arith.constant 9.99999974E-6 : f32
    %79 = vector.broadcast %cst_45 : f32 to vector<8x1xf32>
    %80 = arith.addf %76, %79 : vector<8x1xf32>
    %81 = math.rsqrt %80 : vector<8x1xf32>
    %82 = vector.broadcast %81 : vector<8x1xf32> to vector<8x32xf32>
    %83 = arith.mulf %78, %82 : vector<8x32xf32>
    %c0_46 = arith.constant 0 : index
    %c0_47 = arith.constant 0 : index
    %84 = vector.load %arg14[%c0_46, %c0_47] : memref<1x32xf32, #tpu.memory_space<vmem>>, vector<1x32xf32>
    %85 = vector.broadcast %84 : vector<1x32xf32> to vector<8x32xf32>
    %86 = arith.mulf %83, %85 : vector<8x32xf32>
    %c0_48 = arith.constant 0 : index
    %c0_49 = arith.constant 0 : index
    %87 = vector.load %arg15[%c0_48, %c0_49] : memref<1x32xf32, #tpu.memory_space<vmem>>, vector<1x32xf32>
    %88 = vector.broadcast %87 : vector<1x32xf32> to vector<8x32xf32>
    %89 = arith.addf %86, %88 : vector<8x32xf32>
    %c0_50 = arith.constant 0 : index
    %c0_51 = arith.constant 0 : index
    %c0_52 = arith.constant 0 : index
    %90 = vector.load %arg16[%c0_50, %c0_51, %c0_52] : memref<1x8x32xf32, #tpu.memory_space<vmem>>, vector<1x8x32xf32>
    %91 = vector.shape_cast %90 : vector<1x8x32xf32> to vector<8x32xf32>
    %92 = vector.shape_cast %89 : vector<8x32xf32> to vector<1x8x32xf32>
    tpu.vector_store %arg16[%c0_50, %c0_51, %c0_52], %92 {strides = array<i32>} : memref<1x8x32xf32, #tpu.memory_space<vmem>>, vector<1x8x32xf32>,
    return
  }
  func.func @transform_0(%arg0: i32, %arg1: i32) -> (i32, i32, i32) {
    %c0_i32 = arith.constant 0 : i32
    %c0_i32_0 = arith.constant 0 : i32
    return %arg0, %arg1, %c0_i32 : i32, i32, i32
  }
  func.func @transform_1(%arg0: i32, %arg1: i32) -> (i32, i32, i32) {
    %c0_i32 = arith.constant 0 : i32
    %c0_i32_0 = arith.constant 0 : i32
    %c0_i32_1 = arith.constant 0 : i32
    return %arg0, %c0_i32, %c0_i32_0 : i32, i32, i32
  }
  func.func @transform_2(%arg0: i32, %arg1: i32) -> (i32, i32, i32) {
    %c0_i32 = arith.constant 0 : i32
    %c0_i32_0 = arith.constant 0 : i32
    %c0_i32_1 = arith.constant 0 : i32
    return %arg0, %c0_i32, %c0_i32_0 : i32, i32, i32
  }
  func.func @transform_3(%arg0: i32, %arg1: i32) -> (i32, i32, i32) {
    %c0_i32 = arith.constant 0 : i32
    %c0_i32_0 = arith.constant 0 : i32
    return %arg0, %arg1, %c0_i32 : i32, i32, i32
  }
  func.func @transform_4(%arg0: i32, %arg1: i32) -> (i32, i32) {
    %c0_i32 = arith.constant 0 : i32
    %c0_i32_0 = arith.constant 0 : i32
    %c0_i32_1 = arith.constant 0 : i32
    return %c0_i32, %c0_i32_0 : i32, i32
  }
  func.func @transform_5(%arg0: i32, %arg1: i32) -> (i32, i32) {
    %c0_i32 = arith.constant 0 : i32
    %c0_i32_0 = arith.constant 0 : i32
    %c0_i32_1 = arith.constant 0 : i32
    return %c0_i32, %c0_i32_0 : i32, i32
  }
  func.func @transform_6(%arg0: i32, %arg1: i32) -> (i32, i32) {
    %c0_i32 = arith.constant 0 : i32
    %c0_i32_0 = arith.constant 0 : i32
    %c0_i32_1 = arith.constant 0 : i32
    return %c0_i32, %c0_i32_0 : i32, i32
  }
  func.func @transform_7(%arg0: i32, %arg1: i32) -> (i32, i32) {
    %c0_i32 = arith.constant 0 : i32
    %c0_i32_0 = arith.constant 0 : i32
    %c0_i32_1 = arith.constant 0 : i32
    return %c0_i32, %c0_i32_0 : i32, i32
  }
  func.func @transform_8(%arg0: i32, %arg1: i32) -> (i32, i32) {
    %c0_i32 = arith.constant 0 : i32
    %c0_i32_0 = arith.constant 0 : i32
    %c0_i32_1 = arith.constant 0 : i32
    return %c0_i32, %c0_i32_0 : i32, i32
  }
  func.func @transform_9(%arg0: i32, %arg1: i32) -> (i32, i32) {
    %c0_i32 = arith.constant 0 : i32
    %c0_i32_0 = arith.constant 0 : i32
    %c0_i32_1 = arith.constant 0 : i32
    return %c0_i32, %c0_i32_0 : i32, i32
  }
  func.func @transform_10(%arg0: i32, %arg1: i32) -> (i32, i32) {
    %c0_i32 = arith.constant 0 : i32
    %c0_i32_0 = arith.constant 0 : i32
    %c0_i32_1 = arith.constant 0 : i32
    return %c0_i32, %c0_i32_0 : i32, i32
  }
  func.func @transform_11(%arg0: i32, %arg1: i32) -> (i32, i32) {
    %c0_i32 = arith.constant 0 : i32
    %c0_i32_0 = arith.constant 0 : i32
    %c0_i32_1 = arith.constant 0 : i32
    return %c0_i32, %c0_i32_0 : i32, i32
  }
  func.func @transform_12(%arg0: i32, %arg1: i32) -> (i32, i32) {
    %c0_i32 = arith.constant 0 : i32
    %c0_i32_0 = arith.constant 0 : i32
    %c0_i32_1 = arith.constant 0 : i32
    return %c0_i32, %c0_i32_0 : i32, i32
  }
  func.func @transform_13(%arg0: i32, %arg1: i32) -> (i32, i32) {
    %c0_i32 = arith.constant 0 : i32
    %c0_i32_0 = arith.constant 0 : i32
    %c0_i32_1 = arith.constant 0 : i32
    return %c0_i32, %c0_i32_0 : i32, i32
  }
  func.func @transform_14(%arg0: i32, %arg1: i32) -> (i32, i32, i32) {
    %c0_i32 = arith.constant 0 : i32
    %c0_i32_0 = arith.constant 0 : i32
    return %arg0, %arg1, %c0_i32 : i32, i32, i32
  }
  func.func @transform_15(%arg0: i32, %arg1: i32) -> (i32, i32, i32, i32) {
    %c0_i32 = arith.constant 0 : i32
    %c0_i32_0 = arith.constant 0 : i32
    %c0_i32_1 = arith.constant 0 : i32
    return %arg0, %c0_i32, %arg1, %c0_i32_0 : i32, i32, i32, i32
  }
}

</mosaic_0001>

<llo_original>
// kernel: tpu_custom_call.1
$region0: #{tpu_custom_call.1}
  #allocation0 [shape = 'u32[]', space=smem, size = 0x4, offset = 0x4, fixed_abs, tag = 'smem constant byte address 0x4 - core index']
  #allocation1 [shape = 'u32[144,128]{1,0:T(1,128)}', space=vmem, size = 0x12000, scoped, tag = 'internal scratch']
  %s0 = inlined_call_operand.hbm [shape: f32[2,8,32], index: 0, kind: input, shape index: {}]
  %s1 = inlined_call_operand.hbm [shape: f32[2,8,32], index: 1, kind: input, shape index: {}]
  %s2 = inlined_call_operand.hbm [shape: f32[2,8,32], index: 2, kind: input, shape index: {}]
  %s3 = inlined_call_operand.hbm [shape: f32[2,8,8], index: 3, kind: input, shape index: {}]
  %s4 = inlined_call_operand.hbm [shape: bf16[32,32], index: 4, kind: input, shape index: {}]
  %s5 = inlined_call_operand.vmem [shape: f32[1,32], index: 5, kind: input, shape index: {}]
  %s6 = inlined_call_operand.hbm [shape: bf16[32,32], index: 6, kind: input, shape index: {}]
  %s7 = inlined_call_operand.vmem [shape: f32[1,32], index: 7, kind: input, shape index: {}]
  %s8 = inlined_call_operand.hbm [shape: bf16[32,32], index: 8, kind: input, shape index: {}]
  %s9 = inlined_call_operand.hbm [shape: f32[1,32], index: 9, kind: input, shape index: {}]
  %s10 = inlined_call_operand.vmem [shape: bf16[32,32], index: 10, kind: input, shape index: {}]
  %s11 = inlined_call_operand.vmem [shape: f32[1,32], index: 11, kind: input, shape index: {}]
  %s12 = inlined_call_operand.vmem [shape: f32[1,32], index: 12, kind: input, shape index: {}]
  %s13 = inlined_call_operand.vmem [shape: f32[1,32], index: 13, kind: input, shape index: {}]
  %s14 = inlined_call_operand.hbm [shape: f32[2,8,32], index: 14, kind: output, shape index: {0}]
  %s15 = inlined_call_operand.hbm [shape: f32[2,4,8,8], index: 15, kind: output, shape index: {1}]
  %16 = xla_tuple %s14, %s15
  %s17 = sld [smem:[#allocation0]]
  $region129: #{tpu_custom_call.1} parent=0
    _
  %s19 = ssub.s32 1, %s17
  %s20 = scalar_select 0, %s19, %s17
  $region1: #{tpu_custom_call.1} parent=0
    #allocation2 [shape = 'u8[8192]{0}', space=vmem, size = 0x2000, scoped, tag = 'input window, operand 0']
    #allocation3 [shape = 's32[2]{0}', space=sflag, size = 0x8, scoped, tag = 'scoped memory for tpu_custom_call.1']
    #allocation4 [shape = 's32[2]{0}', space=sflag, size = 0x8, scoped, tag = 'scoped memory for tpu_custom_call.1']
    #allocation5 [shape = 'u8[8192]{0}', space=vmem, size = 0x2000, scoped, tag = 'input window, operand 1']
    #allocation6 [shape = 's32[2]{0}', space=sflag, size = 0x8, scoped, tag = 'scoped memory for tpu_custom_call.1']
    #allocation7 [shape = 'u8[8192]{0}', space=vmem, size = 0x2000, scoped, tag = 'input window, operand 2']
    #allocation8 [shape = 'u8[8192]{0}', space=vmem, size = 0x2000, scoped, tag = 'input window, operand 3']
    #allocation9 [shape = 's32[2]{0}', space=sflag, size = 0x8, scoped, tag = 'scoped memory for tpu_custom_call.1']
    #allocation10 [shape = 'u8[8192]{0}', space=vmem, size = 0x2000, scoped, tag = 'input window, operand 4, single buffered']
    #allocation11 [shape = 'u8[8192]{0}', space=vmem, size = 0x2000, scoped, tag = 'input window, operand 6, single buffered']
    #allocation12 [shape = 's32[1]{0}', space=sflag, size = 0x4, scoped, tag = 'scoped memory for tpu_custom_call.1']
    #allocation13 [shape = 'u8[8192]{0}', space=vmem, size = 0x2000, scoped, tag = 'input window, operand 8, single buffered']
    #allocation14 [shape = 'u8[512]{0}', space=vmem, size = 0x400, scoped, tag = 'input window, operand 9, single buffered']
    #allocation15 [shape = 's32[1]{0}', space=sflag, size = 0x4, scoped, tag = 'scoped memory for tpu_custom_call.1']
    #allocation16 [shape = 'u8[8192]{0}', space=vmem, size = 0x2000, scoped, tag = 'output window, operand 0']
    #allocation17 [shape = 'u8[32768]{0}', space=vmem, size = 0x8000, scoped, tag = 'output window, operand 1']
    #allocation18 [shape = 's32[2]{0}', space=sflag, size = 0x8, scoped, tag = 'scoped memory for tpu_custom_call.1']
    %21 = vsyncpa [#allocation3], 0
    %s22 = scalar_lea.sflag [#allocation3], 1
    %23 = vsyncpa %s22, 0
    %24 = vsyncpa [#allocation6], 0
    %s25 = scalar_lea.sflag [#allocation6], 1
    %26 = vsyncpa %s25, 0
    %27 = vsyncpa [#allocation9], 0
    %s28 = scalar_lea.sflag [#allocation9], 1
    %29 = vsyncpa %s28, 0
    %30 = vsyncpa [#allocation12], 0
    %31 = vsyncpa [#allocation15], 0
    %32 = vsyncpa [#allocation4], 0
    %s33 = scalar_lea.sflag [#allocation4], 1
    %34 = vsyncpa %s33, 0
    %35 = vsyncpa [#allocation18], 0
    %s36 = scalar_lea.sflag [#allocation18], 1
    %37 = vsyncpa %s36, 0
    loop: start=0, step=1, limit=4
    $region2: #{tpu_custom_call.1} parent=1 // loop_pre_header
      _
    $region3: #{tpu_custom_call.1} parent=1 // loop_header
      %s39 = sphi 0, %s43
      %p40 = scmp.ge.s32.totalorder %s39, 4
      %s46 = sphi 0, %s58
      %s47 = sphi 0, %s54
      %s48 = sphi 0, %s46
      %s49 = sphi 0, %s47
      %s50 = sphi 0, %s48
      %s51 = sphi 0, %s49
      %s63 = sphi 0, %s65
      %s66 = sphi 0, %s63
      %s67 = sphi 0, %s66
      %s83 = sphi 0, %s67
      %s89 = sphi 0, %s91
      %s92 = sphi 0, %s89
      %s93 = sphi 0, %s92
      %s109 = sphi 0, %s93
      %s115 = sphi 0, %s117
      %s118 = sphi 0, %s115
      %s119 = sphi 0, %s118
      %s135 = sphi 0, %s119
      %s143 = sphi 0, %s145
      %s146 = sphi 0, %s143
      %s147 = sphi 0, %s146
      %s163 = sphi 0, %s147
      %s167 = sphi 0, %s167
      %s169 = sphi 0, %s167
      %s170 = sphi 0, %s169
      %s184 = sphi 0, %s170
      %s188 = sphi 0, %s188
      %s190 = sphi 0, %s188
      %s191 = sphi 0, %s190
      %s205 = sphi 0, %s191
      %s209 = sphi 0, %s209
      %s211 = sphi 0, %s209
      %s212 = sphi 0, %s211
      %s226 = sphi 0, %s212
      %s230 = sphi 0, %s230
      %s232 = sphi 0, %s230
      %s233 = sphi 0, %s232
      %s247 = sphi 0, %s233
      %s251 = sphi 0, %s251
      %s253 = sphi 0, %s251
      %s254 = sphi 0, %s253
      %s268 = sphi 0, %s254
      %s272 = sphi 0, %s272
      %s274 = sphi 0, %s272
      %s275 = sphi 0, %s274
      %s289 = sphi 0, %s275
      %s293 = sphi 0, %s293
      %s295 = sphi 0, %s293
      %s296 = sphi 0, %s295
      %s310 = sphi 0, %s296
      %s314 = sphi 0, %s314
      %s316 = sphi 0, %s314
      %s317 = sphi 0, %s316
      %s331 = sphi 0, %s317
      %s335 = sphi 0, %s335
      %s337 = sphi 0, %s335
      %s338 = sphi 0, %s337
      %s352 = sphi 0, %s338
      %s356 = sphi 0, %s356
      %s358 = sphi 0, %s356
      %s359 = sphi 0, %s358
      %s373 = sphi 0, %s359
      %s381 = sphi 0, %s383
      %s384 = sphi 0, %s381
      %s385 = sphi 0, %s384
      %s401 = sphi 0, %s385
      %s409 = sphi 0, %s411
      %s412 = sphi 0, %s409
      %s413 = sphi 0, %s412
      %s429 = sphi 0, %s413
    $region4: #{tpu_custom_call.1} parent=1 // loop_header_branch
      %42 = sbr.rel (%p40) target = $region8
    $region5: #{tpu_custom_call.1} parent=1 // loop_body
      %s44 = ssub.s32 %s39, 1
      %s45 = ssub.s32 %s39, 2
      %s52 = sadd.s32 1, %s47
      %p53 = scmp.ge.s32.totalorder %s52, 1
      %s54 = scalar_select %p53, 0, %s52
      %s55 = sadd.s32 1, %s46
      %s56 = scalar_select %p53, %s55, %s46
      %p57 = scmp.ge.s32.totalorder %s56, 2
      %s58 = scalar_select %p57, 0, %s56
      %s59 = ssub.s32 %s46, %s58
      %s60 = ssub.s32 %s47, %s54
      %s61 = sor.u32 %s59, %s60
      %p62 = scmp.eq.s32.totalorder %s61, 0
      %s64 = sadd.s32 %s63, 1
      %s65 = scalar_select %p62, %s63, %s64
      %p68 = pneg %p62
      %p69 = scmp.eq.s32.totalorder %s39, 1
      %p70 = por %p68, %p69
      %p71 = scmp.ne.s32.totalorder %s63, %s66
      %p72 = scmp.eq.s32.totalorder %s39, 0
      %p73 = por %p71, %p72
      %p74 = scmp.ne.s32.totalorder %s63, %s66
      %p75 = scmp.eq.s32.totalorder %s44, 1
      %p76 = por %p74, %p75
      %p77 = scmp.ne.s32.totalorder %s66, %s67
      %p78 = scmp.eq.s32.totalorder %s44, 0
      %p79 = por %p77, %p78
      %p80 = scmp.ne.s32.totalorder %s66, %s67
      %p81 = scmp.eq.s32.totalorder %s45, 1
      %p82 = por %p80, %p81
      %p84 = scmp.ne.s32.totalorder %s67, %s83
      %p85 = scmp.eq.s32.totalorder %s45, 0
      %p86 = por %p84, %p85
      %s87 = ssub.s32 %s46, %s58
      %p88 = scmp.eq.s32.totalorder %s87, 0
      %s90 = sadd.s32 %s89, 1
      %s91 = scalar_select %p88, %s89, %s90
      %p94 = pneg %p88
      %p95 = scmp.eq.s32.totalorder %s39, 1
      %p96 = por %p94, %p95
      %p97 = scmp.ne.s32.totalorder %s89, %s92
      %p98 = scmp.eq.s32.totalorder %s39, 0
      %p99 = por %p97, %p98
      %p100 = scmp.ne.s32.totalorder %s89, %s92
      %p101 = scmp.eq.s32.totalorder %s44, 1
      %p102 = por %p100, %p101
      %p103 = scmp.ne.s32.totalorder %s92, %s93
      %p104 = scmp.eq.s32.totalorder %s44, 0
      %p105 = por %p103, %p104
      %p106 = scmp.ne.s32.totalorder %s92, %s93
      %p107 = scmp.eq.s32.totalorder %s45, 1
      %p108 = por %p106, %p107
      %p110 = scmp.ne.s32.totalorder %s93, %s109
      %p111 = scmp.eq.s32.totalorder %s45, 0
      %p112 = por %p110, %p111
      %s113 = ssub.s32 %s46, %s58
      %p114 = scmp.eq.s32.totalorder %s113, 0
      %s116 = sadd.s32 %s115, 1
      %s117 = scalar_select %p114, %s115, %s116
      %p120 = pneg %p114
      %p121 = scmp.eq.s32.totalorder %s39, 1
      %p122 = por %p120, %p121
      %p123 = scmp.ne.s32.totalorder %s115, %s118
      %p124 = scmp.eq.s32.totalorder %s39, 0
      %p125 = por %p123, %p124
      %p126 = scmp.ne.s32.totalorder %s115, %s118
      %p127 = scmp.eq.s32.totalorder %s44, 1
      %p128 = por %p126, %p127
      %p129 = scmp.ne.s32.totalorder %s118, %s119
      %p130 = scmp.eq.s32.totalorder %s44, 0
      %p131 = por %p129, %p130
      %p132 = scmp.ne.s32.totalorder %s118, %s119
      %p133 = scmp.eq.s32.totalorder %s45, 1
      %p134 = por %p132, %p133
      %p136 = scmp.ne.s32.totalorder %s119, %s135
      %p137 = scmp.eq.s32.totalorder %s45, 0
      %p138 = por %p136, %p137
      %s139 = ssub.s32 %s46, %s58
      %s140 = ssub.s32 %s47, %s54
      %s141 = sor.u32 %s139, %s140
      %p142 = scmp.eq.s32.totalorder %s141, 0
      %s144 = sadd.s32 %s143, 1
      %s145 = scalar_select %p142, %s143, %s144
      %p148 = pneg %p142
      %p149 = scmp.eq.s32.totalorder %s39, 1
      %p150 = por %p148, %p149
      %p151 = scmp.ne.s32.totalorder %s143, %s146
      %p152 = scmp.eq.s32.totalorder %s39, 0
      %p153 = por %p151, %p152
      %p154 = scmp.ne.s32.totalorder %s143, %s146
      %p155 = scmp.eq.s32.totalorder %s44, 1
      %p156 = por %p154, %p155
      %p157 = scmp.ne.s32.totalorder %s146, %s147
      %p158 = scmp.eq.s32.totalorder %s44, 0
      %p159 = por %p157, %p158
      %p160 = scmp.ne.s32.totalorder %s146, %s147
      %p161 = scmp.eq.s32.totalorder %s45, 1
      %p162 = por %p160, %p161
      %p164 = scmp.ne.s32.totalorder %s147, %s163
      %p165 = scmp.eq.s32.totalorder %s45, 0
      %p166 = por %p164, %p165
      %s168 = sadd.s32 %s167, 1
      %p171 = scmp.eq.s32.totalorder %s39, 1
      %p172 = scmp.ne.s32.totalorder %s167, %s169
      %p173 = scmp.eq.s32.totalorder %s39, 0
      %p174 = por %p172, %p173
      %p175 = scmp.ne.s32.totalorder %s167, %s169
      %p176 = scmp.eq.s32.totalorder %s44, 1
      %p177 = por %p175, %p176
      %p178 = scmp.ne.s32.totalorder %s169, %s170
      %p179 = scmp.eq.s32.totalorder %s44, 0
      %p180 = por %p178, %p179
      %p181 = scmp.ne.s32.totalorder %s169, %s170
      %p182 = scmp.eq.s32.totalorder %s45, 1
      %p183 = por %p181, %p182
      %p185 = scmp.ne.s32.totalorder %s170, %s184
      %p186 = scmp.eq.s32.totalorder %s45, 0
      %p187 = por %p185, %p186
      %s189 = sadd.s32 %s188, 1
      %p192 = scmp.eq.s32.totalorder %s39, 1
      %p193 = scmp.ne.s32.totalorder %s188, %s190
      %p194 = scmp.eq.s32.totalorder %s39, 0
      %p195 = por %p193, %p194
      %p196 = scmp.ne.s32.totalorder %s188, %s190
      %p197 = scmp.eq.s32.totalorder %s44, 1
      %p198 = por %p196, %p197
      %p199 = scmp.ne.s32.totalorder %s190, %s191
      %p200 = scmp.eq.s32.totalorder %s44, 0
      %p201 = por %p199, %p200
      %p202 = scmp.ne.s32.totalorder %s190, %s191
      %p203 = scmp.eq.s32.totalorder %s45, 1
      %p204 = por %p202, %p203
      %p206 = scmp.ne.s32.totalorder %s191, %s205
      %p207 = scmp.eq.s32.totalorder %s45, 0
      %p208 = por %p206, %p207
      %s210 = sadd.s32 %s209, 1
      %p213 = scmp.eq.s32.totalorder %s39, 1
      %p214 = scmp.ne.s32.totalorder %s209, %s211
      %p215 = scmp.eq.s32.totalorder %s39, 0
      %p216 = por %p214, %p215
      %p217 = scmp.ne.s32.totalorder %s209, %s211
      %p218 = scmp.eq.s32.totalorder %s44, 1
      %p219 = por %p217, %p218
      %p220 = scmp.ne.s32.totalorder %s211, %s212
      %p221 = scmp.eq.s32.totalorder %s44, 0
      %p222 = por %p220, %p221
      %p223 = scmp.ne.s32.totalorder %s211, %s212
      %p224 = scmp.eq.s32.totalorder %s45, 1
      %p225 = por %p223, %p224
      %p227 = scmp.ne.s32.totalorder %s212, %s226
      %p228 = scmp.eq.s32.totalorder %s45, 0
      %p229 = por %p227, %p228
      %s231 = sadd.s32 %s230, 1
      %p234 = scmp.eq.s32.totalorder %s39, 1
      %p235 = scmp.ne.s32.totalorder %s230, %s232
      %p236 = scmp.eq.s32.totalorder %s39, 0
      %p237 = por %p235, %p236
      %p238 = scmp.ne.s32.totalorder %s230, %s232
      %p239 = scmp.eq.s32.totalorder %s44, 1
      %p240 = por %p238, %p239
      %p241 = scmp.ne.s32.totalorder %s232, %s233
      %p242 = scmp.eq.s32.totalorder %s44, 0
      %p243 = por %p241, %p242
      %p244 = scmp.ne.s32.totalorder %s232, %s233
      %p245 = scmp.eq.s32.totalorder %s45, 1
      %p246 = por %p244, %p245
      %p248 = scmp.ne.s32.totalorder %s233, %s247
      %p249 = scmp.eq.s32.totalorder %s45, 0
      %p250 = por %p248, %p249
      %s252 = sadd.s32 %s251, 1
      %p255 = scmp.eq.s32.totalorder %s39, 1
      %p256 = scmp.ne.s32.totalorder %s251, %s253
      %p257 = scmp.eq.s32.totalorder %s39, 0
      %p258 = por %p256, %p257
      %p259 = scmp.ne.s32.totalorder %s251, %s253
      %p260 = scmp.eq.s32.totalorder %s44, 1
      %p261 = por %p259, %p260
      %p262 = scmp.ne.s32.totalorder %s253, %s254
      %p263 = scmp.eq.s32.totalorder %s44, 0
      %p264 = por %p262, %p263
      %p265 = scmp.ne.s32.totalorder %s253, %s254
      %p266 = scmp.eq.s32.totalorder %s45, 1
      %p267 = por %p265, %p266
      %p269 = scmp.ne.s32.totalorder %s254, %s268
      %p270 = scmp.eq.s32.totalorder %s45, 0
      %p271 = por %p269, %p270
      %s273 = sadd.s32 %s272, 1
      %p276 = scmp.eq.s32.totalorder %s39, 1
      %p277 = scmp.ne.s32.totalorder %s272, %s274
      %p278 = scmp.eq.s32.totalorder %s39, 0
      %p279 = por %p277, %p278
      %p280 = scmp.ne.s32.totalorder %s272, %s274
      %p281 = scmp.eq.s32.totalorder %s44, 1
      %p282 = por %p280, %p281
      %p283 = scmp.ne.s32.totalorder %s274, %s275
      %p284 = scmp.eq.s32.totalorder %s44, 0
      %p285 = por %p283, %p284
      %p286 = scmp.ne.s32.totalorder %s274, %s275
      %p287 = scmp.eq.s32.totalorder %s45, 1
      %p288 = por %p286, %p287
      %p290 = scmp.ne.s32.totalorder %s275, %s289
      %p291 = scmp.eq.s32.totalorder %s45, 0
      %p292 = por %p290, %p291
      %s294 = sadd.s32 %s293, 1
      %p297 = scmp.eq.s32.totalorder %s39, 1
      %p298 = scmp.ne.s32.totalorder %s293, %s295
      %p299 = scmp.eq.s32.totalorder %s39, 0
      %p300 = por %p298, %p299
      %p301 = scmp.ne.s32.totalorder %s293, %s295
      %p302 = scmp.eq.s32.totalorder %s44, 1
      %p303 = por %p301, %p302
      %p304 = scmp.ne.s32.totalorder %s295, %s296
      %p305 = scmp.eq.s32.totalorder %s44, 0
      %p306 = por %p304, %p305
      %p307 = scmp.ne.s32.totalorder %s295, %s296
      %p308 = scmp.eq.s32.totalorder %s45, 1
      %p309 = por %p307, %p308
      %p311 = scmp.ne.s32.totalorder %s296, %s310
      %p312 = scmp.eq.s32.totalorder %s45, 0
      %p313 = por %p311, %p312
      %s315 = sadd.s32 %s314, 1
      %p318 = scmp.eq.s32.totalorder %s39, 1
      %p319 = scmp.ne.s32.totalorder %s314, %s316
      %p320 = scmp.eq.s32.totalorder %s39, 0
      %p321 = por %p319, %p320
      %p322 = scmp.ne.s32.totalorder %s314, %s316
      %p323 = scmp.eq.s32.totalorder %s44, 1
      %p324 = por %p322, %p323
      %p325 = scmp.ne.s32.totalorder %s316, %s317
      %p326 = scmp.eq.s32.totalorder %s44, 0
      %p327 = por %p325, %p326
      %p328 = scmp.ne.s32.totalorder %s316, %s317
      %p329 = scmp.eq.s32.totalorder %s45, 1
      %p330 = por %p328, %p329
      %p332 = scmp.ne.s32.totalorder %s317, %s331
      %p333 = scmp.eq.s32.totalorder %s45, 0
      %p334 = por %p332, %p333
      %s336 = sadd.s32 %s335, 1
      %p339 = scmp.eq.s32.totalorder %s39, 1
      %p340 = scmp.ne.s32.totalorder %s335, %s337
      %p341 = scmp.eq.s32.totalorder %s39, 0
      %p342 = por %p340, %p341
      %p343 = scmp.ne.s32.totalorder %s335, %s337
      %p344 = scmp.eq.s32.totalorder %s44, 1
      %p345 = por %p343, %p344
      %p346 = scmp.ne.s32.totalorder %s337, %s338
      %p347 = scmp.eq.s32.totalorder %s44, 0
      %p348 = por %p346, %p347
      %p349 = scmp.ne.s32.totalorder %s337, %s338
      %p350 = scmp.eq.s32.totalorder %s45, 1
      %p351 = por %p349, %p350
      %p353 = scmp.ne.s32.totalorder %s338, %s352
      %p354 = scmp.eq.s32.totalorder %s45, 0
      %p355 = por %p353, %p354
      %s357 = sadd.s32 %s356, 1
      %p360 = scmp.eq.s32.totalorder %s39, 1
      %p361 = scmp.ne.s32.totalorder %s356, %s358
      %p362 = scmp.eq.s32.totalorder %s39, 0
      %p363 = por %p361, %p362
      %p364 = scmp.ne.s32.totalorder %s356, %s358
      %p365 = scmp.eq.s32.totalorder %s44, 1
      %p366 = por %p364, %p365
      %p367 = scmp.ne.s32.totalorder %s358, %s359
      %p368 = scmp.eq.s32.totalorder %s44, 0
      %p369 = por %p367, %p368
      %p370 = scmp.ne.s32.totalorder %s358, %s359
      %p371 = scmp.eq.s32.totalorder %s45, 1
      %p372 = por %p370, %p371
      %p374 = scmp.ne.s32.totalorder %s359, %s373
      %p375 = scmp.eq.s32.totalorder %s45, 0
      %p376 = por %p374, %p375
      %s377 = ssub.s32 %s46, %s58
      %s378 = ssub.s32 %s47, %s54
      %s379 = sor.u32 %s377, %s378
      %p380 = scmp.eq.s32.totalorder %s379, 0
      %s382 = sadd.s32 %s381, 1
      %s383 = scalar_select %p380, %s381, %s382
      %p386 = pneg %p380
      %p387 = scmp.eq.s32.totalorder %s39, 1
      %p388 = por %p386, %p387
      %p389 = scmp.ne.s32.totalorder %s381, %s384
      %p390 = scmp.eq.s32.totalorder %s39, 0
      %p391 = por %p389, %p390
      %p392 = scmp.ne.s32.totalorder %s381, %s384
      %p393 = scmp.eq.s32.totalorder %s44, 1
      %p394 = por %p392, %p393
      %p395 = scmp.ne.s32.totalorder %s384, %s385
      %p396 = scmp.eq.s32.totalorder %s44, 0
      %p397 = por %p395, %p396
      %p398 = scmp.ne.s32.totalorder %s384, %s385
      %p399 = scmp.eq.s32.totalorder %s45, 1
      %p400 = por %p398, %p399
      %p402 = scmp.ne.s32.totalorder %s385, %s401
      %p403 = scmp.eq.s32.totalorder %s45, 0
      %p404 = por %p402, %p403
      %s405 = ssub.s32 %s46, %s58
      %s406 = ssub.s32 %s47, %s54
      %s407 = sor.u32 %s405, %s406
      %p408 = scmp.eq.s32.totalorder %s407, 0
      %s410 = sadd.s32 %s409, 1
      %s411 = scalar_select %p408, %s409, %s410
      %p414 = pneg %p408
      %p415 = scmp.eq.s32.totalorder %s39, 1
      %p416 = por %p414, %p415
      %p417 = scmp.ne.s32.totalorder %s409, %s412
      %p418 = scmp.eq.s32.totalorder %s39, 0
      %p419 = por %p417, %p418
      %p420 = scmp.ne.s32.totalorder %s409, %s412
      %p421 = scmp.eq.s32.totalorder %s44, 1
      %p422 = por %p420, %p421
      %p423 = scmp.ne.s32.totalorder %s412, %s413
      %p424 = scmp.eq.s32.totalorder %s44, 0
      %p425 = por %p423, %p424
      %p426 = scmp.ne.s32.totalorder %s412, %s413
      %p427 = scmp.eq.s32.totalorder %s45, 1
      %p428 = por %p426, %p427
      %p430 = scmp.ne.s32.totalorder %s413, %s429
      %p431 = scmp.eq.s32.totalorder %s45, 0
      %p432 = por %p430, %p431
      %p433 = scmp.le.s32.totalorder 1, %s39
      %p434 = scmp.lt.s32.totalorder %s39, 3
      %p435 = pnand %p433, %p434
      %p436 = pneg %p435
      // Predicated region
      $region9: #{tpu_custom_call.1} parent=5 // pred_check
        _
      $region10: #{tpu_custom_call.1} parent=5 // pred_check_branch
        %438 = sbr.rel (%p435) target = $region12
      $region11: #{tpu_custom_call.1} parent=5 // pred_region
        %s439 = ssub.s32 %s39, 1
        // Predicated region
        $region13: #{tpu_custom_call.1} parent=11 // pred_check
          %p440 = pneg %p180
        $region14: #{tpu_custom_call.1} parent=11 // pred_check_branch
          %442 = sbr.rel (%p440) target = $region16
        $region15: #{tpu_custom_call.1} parent=11 // pred_region
          %s444 = ssub.s32 256, 256
          %445 = vsyncadd [#allocation9], %s444
          %s446 = sshll.u32 [#allocation10], 4
          %s447 = int_to_ptr.vmem [resolvable:$true] %s446
          %452 = dma.hbm_to_vmem [thread:$0]  %s4, 256, %s447, [#allocation9], 64, 64, 4
        $region16: #{tpu_custom_call.1} parent=11 // pred_fallthru
          _
        // Predicated region
        $region17: #{tpu_custom_call.1} parent=11 // pred_check
          %p453 = pneg %p201
        $region18: #{tpu_custom_call.1} parent=11 // pred_check_branch
          %455 = sbr.rel (%p453) target = $region20
        $region19: #{tpu_custom_call.1} parent=11 // pred_region
          _
        $region20: #{tpu_custom_call.1} parent=11 // pred_fallthru
          _
        // Predicated region
        $region21: #{tpu_custom_call.1} parent=11 // pred_check
          %p456 = pneg %p222
        $region22: #{tpu_custom_call.1} parent=11 // pred_check_branch
          %458 = sbr.rel (%p456) target = $region24
        $region23: #{tpu_custom_call.1} parent=11 // pred_region
          %s460 = ssub.s32 256, 256
          %461 = vsyncadd [#allocation12], %s460
          %s462 = sshll.u32 [#allocation11], 4
          %s463 = int_to_ptr.vmem [resolvable:$true] %s462
          %468 = dma.hbm_to_vmem [thread:$0]  %s6, 256, %s463, [#allocation12], 64, 64, 4
        $region24: #{tpu_custom_call.1} parent=11 // pred_fallthru
          _
        // Predicated region
        $region25: #{tpu_custom_call.1} parent=11 // pred_check
          %p469 = pneg %p243
        $region26: #{tpu_custom_call.1} parent=11 // pred_check_branch
          %471 = sbr.rel (%p469) target = $region28
        $region27: #{tpu_custom_call.1} parent=11 // pred_region
          _
        $region28: #{tpu_custom_call.1} parent=11 // pred_fallthru
          _
        // Predicated region
        $region29: #{tpu_custom_call.1} parent=11 // pred_check
          %p472 = pneg %p264
        $region30: #{tpu_custom_call.1} parent=11 // pred_check_branch
          %474 = sbr.rel (%p472) target = $region32
        $region31: #{tpu_custom_call.1} parent=11 // pred_region
          %s476 = ssub.s32 256, 256
          %477 = vsyncadd [#allocation12], %s476
          %s478 = sshll.u32 [#allocation13], 4
          %s479 = int_to_ptr.vmem [resolvable:$true] %s478
          %484 = dma.hbm_to_vmem [thread:$0]  %s8, 256, %s479, [#allocation12], 64, 64, 4
        $region32: #{tpu_custom_call.1} parent=11 // pred_fallthru
          _
        // Predicated region
        $region33: #{tpu_custom_call.1} parent=11 // pred_check
          %p485 = pneg %p285
        $region34: #{tpu_custom_call.1} parent=11 // pred_check_branch
          %487 = sbr.rel (%p485) target = $region36
        $region35: #{tpu_custom_call.1} parent=11 // pred_region
          %s489 = ssub.s32 16, 16
          %490 = vsyncadd [#allocation15], %s489
          %s492 = sshll.u32 [#allocation14], 4
          %s493 = int_to_ptr.vmem [resolvable:$true] %s492
          %495 = dma.hbm_to_vmem [thread:$0]  %s9, 16, %s493, [#allocation15]
        $region36: #{tpu_custom_call.1} parent=11 // pred_fallthru
          _
        // Predicated region
        $region37: #{tpu_custom_call.1} parent=11 // pred_check
          %p496 = pneg %p306
        $region38: #{tpu_custom_call.1} parent=11 // pred_check_branch
          %498 = sbr.rel (%p496) target = $region40
        $region39: #{tpu_custom_call.1} parent=11 // pred_region
          _
        $region40: #{tpu_custom_call.1} parent=11 // pred_fallthru
          _
        // Predicated region
        $region41: #{tpu_custom_call.1} parent=11 // pred_check
          %p499 = pneg %p327
        $region42: #{tpu_custom_call.1} parent=11 // pred_check_branch
          %501 = sbr.rel (%p499) target = $region44
        $region43: #{tpu_custom_call.1} parent=11 // pred_region
          _
        $region44: #{tpu_custom_call.1} parent=11 // pred_fallthru
          _
        // Predicated region
        $region45: #{tpu_custom_call.1} parent=11 // pred_check
          %p502 = pneg %p348
        $region46: #{tpu_custom_call.1} parent=11 // pred_check_branch
          %504 = sbr.rel (%p502) target = $region48
        $region47: #{tpu_custom_call.1} parent=11 // pred_region
          _
        $region48: #{tpu_custom_call.1} parent=11 // pred_fallthru
          _
        // Predicated region
        $region49: #{tpu_custom_call.1} parent=11 // pred_check
          %p505 = pneg %p369
        $region50: #{tpu_custom_call.1} parent=11 // pred_check_branch
          %507 = sbr.rel (%p505) target = $region52
        $region51: #{tpu_custom_call.1} parent=11 // pred_region
          _
        $region52: #{tpu_custom_call.1} parent=11 // pred_fallthru
          _
      $region12: #{tpu_custom_call.1} parent=5 // pred_fallthru
        _
      %p508 = scmp.lt.s32.totalorder %s39, 2
      // Predicated region
      $region53: #{tpu_custom_call.1} parent=5 // pred_check
        %p509 = pneg %p508
      $region54: #{tpu_custom_call.1} parent=5 // pred_check_branch
        %511 = sbr.rel (%p509) target = $region56
      $region55: #{tpu_custom_call.1} parent=5 // pred_region
        // Predicated region
        $region57: #{tpu_custom_call.1} parent=55 // pred_check
          %p512 = pneg %p73
        $region58: #{tpu_custom_call.1} parent=55 // pred_check_branch
          %514 = sbr.rel (%p512) target = $region60
        $region59: #{tpu_custom_call.1} parent=55 // pred_region
          %s515 = sand.u32 %s63, 1
          %s516 = scalar_lea.sflag [#allocation3], %s515
          %s517 = sand.u32 %s63, 1
          %s518 = smul.addr %s517, 8
          %s519 = scalar_lea.vmem [#allocation2], %s518
          %s521 = ssub.s32 128, 128
          %522 = vsyncadd %s516, %s521
          %s523 = sadd.s32 %s47, %s46
          %s524 = smul.addr %s523, 128
          %s525 = scalar_lea.hbm %s0, %s524
          %s527 = sshll.u32 %s519, 4
          %s528 = int_to_ptr.vmem [resolvable:$true] %s527
          %530 = dma.hbm_to_vmem [thread:$0]  %s525, 128, %s528, %s516
        $region60: #{tpu_custom_call.1} parent=55 // pred_fallthru
          _
        // Predicated region
        $region61: #{tpu_custom_call.1} parent=55 // pred_check
          %p531 = pneg %p99
        $region62: #{tpu_custom_call.1} parent=55 // pred_check_branch
          %533 = sbr.rel (%p531) target = $region64
        $region63: #{tpu_custom_call.1} parent=55 // pred_region
          %s534 = sand.u32 %s39, 1
          %s535 = scalar_lea.sflag [#allocation6], %s534
          %s536 = sand.u32 %s89, 1
          %s537 = smul.addr %s536, 8
          %s538 = scalar_lea.vmem [#allocation5], %s537
          %s540 = ssub.s32 128, 128
          %541 = vsyncadd %s535, %s540
          %s542 = smul.addr %s46, 128
          %s543 = scalar_lea.hbm %s1, %s542
          %s545 = sshll.u32 %s538, 4
          %s546 = int_to_ptr.vmem [resolvable:$true] %s545
          %548 = dma.hbm_to_vmem [thread:$0]  %s543, 128, %s546, %s535
        $region64: #{tpu_custom_call.1} parent=55 // pred_fallthru
          _
        // Predicated region
        $region65: #{tpu_custom_call.1} parent=55 // pred_check
          %p549 = pneg %p125
        $region66: #{tpu_custom_call.1} parent=55 // pred_check_branch
          %551 = sbr.rel (%p549) target = $region68
        $region67: #{tpu_custom_call.1} parent=55 // pred_region
          %s552 = sand.u32 %s39, 1
          %s553 = scalar_lea.sflag [#allocation6], %s552
          %s554 = sand.u32 %s115, 1
          %s555 = smul.addr %s554, 8
          %s556 = scalar_lea.vmem [#allocation7], %s555
          %s558 = ssub.s32 128, 128
          %559 = vsyncadd %s553, %s558
          %s560 = smul.addr %s46, 128
          %s561 = scalar_lea.hbm %s2, %s560
          %s563 = sshll.u32 %s556, 4
          %s564 = int_to_ptr.vmem [resolvable:$true] %s563
          %566 = dma.hbm_to_vmem [thread:$0]  %s561, 128, %s564, %s553
        $region68: #{tpu_custom_call.1} parent=55 // pred_fallthru
          _
        // Predicated region
        $region69: #{tpu_custom_call.1} parent=55 // pred_check
          %p567 = pneg %p153
        $region70: #{tpu_custom_call.1} parent=55 // pred_check_branch
          %569 = sbr.rel (%p567) target = $region72
        $region71: #{tpu_custom_call.1} parent=55 // pred_region
          %s570 = sand.u32 %s39, 1
          %s571 = scalar_lea.sflag [#allocation9], %s570
          %s572 = sand.u32 %s143, 1
          %s573 = smul.addr %s572, 8
          %s574 = scalar_lea.vmem [#allocation8], %s573
          %s576 = ssub.s32 128, 128
          %577 = vsyncadd %s571, %s576
          %s578 = sadd.s32 %s47, %s46
          %s579 = smul.addr %s578, 128
          %s580 = scalar_lea.hbm %s3, %s579
          %s582 = sshll.u32 %s574, 4
          %s583 = int_to_ptr.vmem [resolvable:$true] %s582
          %585 = dma.hbm_to_vmem [thread:$0]  %s580, 128, %s583, %s571
        $region72: #{tpu_custom_call.1} parent=55 // pred_fallthru
          _
      $region56: #{tpu_custom_call.1} parent=5 // pred_fallthru
        _
      %p586 = scmp.le.s32.totalorder 1, %s39
      %p587 = scmp.lt.s32.totalorder %s39, 3
      %p588 = pnand %p586, %p587
      %p589 = pneg %p588
      // Predicated region
      $region73: #{tpu_custom_call.1} parent=5 // pred_check
        _
      $region74: #{tpu_custom_call.1} parent=5 // pred_check_branch
        %591 = sbr.rel (%p588) target = $region76
      $region75: #{tpu_custom_call.1} parent=5 // pred_region
        %s592 = ssub.s32 %s39, 1
        %s593 = sand.u32 %s66, 1
        %s594 = scalar_lea.sflag [#allocation3], %s593
        %s595 = sand.u32 %s66, 1
        %s596 = smul.addr %s595, 8
        %s597 = scalar_lea.vmem [#allocation2], %s596
        // Predicated region
        $region77: #{tpu_custom_call.1} parent=75 // pred_check
          %p598 = pneg %p79
        $region78: #{tpu_custom_call.1} parent=75 // pred_check_branch
          %600 = sbr.rel (%p598) target = $region80
        $region79: #{tpu_custom_call.1} parent=75 // pred_region
          %601 = dma.done %s594, 128
        $region80: #{tpu_custom_call.1} parent=75 // pred_fallthru
          _
        %s602 = sand.u32 %s44, 1
        %s603 = scalar_lea.sflag [#allocation6], %s602
        %s604 = sand.u32 %s92, 1
        %s605 = smul.addr %s604, 8
        %s606 = scalar_lea.vmem [#allocation5], %s605
        // Predicated region
        $region81: #{tpu_custom_call.1} parent=75 // pred_check
          %p607 = pneg %p105
        $region82: #{tpu_custom_call.1} parent=75 // pred_check_branch
          %609 = sbr.rel (%p607) target = $region84
        $region83: #{tpu_custom_call.1} parent=75 // pred_region
          %610 = dma.done %s603, 128
        $region84: #{tpu_custom_call.1} parent=75 // pred_fallthru
          _
        %s611 = sand.u32 %s44, 1
        %s612 = scalar_lea.sflag [#allocation6], %s611
        %s613 = sand.u32 %s118, 1
        %s614 = smul.addr %s613, 8
        %s615 = scalar_lea.vmem [#allocation7], %s614
        // Predicated region
        $region85: #{tpu_custom_call.1} parent=75 // pred_check
          %p616 = pneg %p131
        $region86: #{tpu_custom_call.1} parent=75 // pred_check_branch
          %618 = sbr.rel (%p616) target = $region88
        $region87: #{tpu_custom_call.1} parent=75 // pred_region
          %619 = dma.done %s612, 128
        $region88: #{tpu_custom_call.1} parent=75 // pred_fallthru
          _
        %s620 = sand.u32 %s44, 1
        %s621 = scalar_lea.sflag [#allocation9], %s620
        %s622 = sand.u32 %s146, 1
        %s623 = smul.addr %s622, 8
        %s624 = scalar_lea.vmem [#allocation8], %s623
        // Predicated region
        $region89: #{tpu_custom_call.1} parent=75 // pred_check
          %p625 = pneg %p159
        $region90: #{tpu_custom_call.1} parent=75 // pred_check_branch
          %627 = sbr.rel (%p625) target = $region92
        $region91: #{tpu_custom_call.1} parent=75 // pred_region
          %628 = dma.done %s621, 128
        $region92: #{tpu_custom_call.1} parent=75 // pred_fallthru
          _
        // Predicated region
        $region93: #{tpu_custom_call.1} parent=75 // pred_check
          %p629 = pneg %p180
        $region94: #{tpu_custom_call.1} parent=75 // pred_check_branch
          %631 = sbr.rel (%p629) target = $region96
        $region95: #{tpu_custom_call.1} parent=75 // pred_region
          %632 = dma.done [#allocation9], 256
        $region96: #{tpu_custom_call.1} parent=75 // pred_fallthru
          _
        // Predicated region
        $region97: #{tpu_custom_call.1} parent=75 // pred_check
          %p633 = pneg %p222
        $region98: #{tpu_custom_call.1} parent=75 // pred_check_branch
          %635 = sbr.rel (%p633) target = $region100
        $region99: #{tpu_custom_call.1} parent=75 // pred_region
          %636 = dma.done [#allocation12], 256
        $region100: #{tpu_custom_call.1} parent=75 // pred_fallthru
          _
        // Predicated region
        $region101: #{tpu_custom_call.1} parent=75 // pred_check
          %p637 = pneg %p264
        $region102: #{tpu_custom_call.1} parent=75 // pred_check_branch
          %639 = sbr.rel (%p637) target = $region104
        $region103: #{tpu_custom_call.1} parent=75 // pred_region
          %640 = dma.done [#allocation12], 256
        $region104: #{tpu_custom_call.1} parent=75 // pred_fallthru
          _
        // Predicated region
        $region105: #{tpu_custom_call.1} parent=75 // pred_check
          %p641 = pneg %p285
        $region106: #{tpu_custom_call.1} parent=75 // pred_check_branch
          %643 = sbr.rel (%p641) target = $region108
        $region107: #{tpu_custom_call.1} parent=75 // pred_region
          %644 = dma.done [#allocation15], 16
        $region108: #{tpu_custom_call.1} parent=75 // pred_fallthru
          _
        %s645 = sand.u32 %s66, 1
        %s646 = scalar_lea.sflag [#allocation3], %s645
        %s647 = sand.u32 %s66, 1
        %s648 = smul.addr %s647, 8
        %s649 = scalar_lea.vmem [#allocation2], %s648
        %p650 = pneg %p79
        %p651 = pneg %p76
        %s652 = sand.u32 %s44, 1
        %s653 = scalar_lea.sflag [#allocation6], %s652
        %s654 = sand.u32 %s92, 1
        %s655 = smul.addr %s654, 8
        %s656 = scalar_lea.vmem [#allocation5], %s655
        %p657 = pneg %p105
        %p658 = pneg %p102
        %s659 = sand.u32 %s44, 1
        %s660 = scalar_lea.sflag [#allocation6], %s659
        %s661 = sand.u32 %s118, 1
        %s662 = smul.addr %s661, 8
        %s663 = scalar_lea.vmem [#allocation7], %s662
        %p664 = pneg %p131
        %p665 = pneg %p128
        %s666 = sand.u32 %s44, 1
        %s667 = scalar_lea.sflag [#allocation9], %s666
        %s668 = sand.u32 %s146, 1
        %s669 = smul.addr %s668, 8
        %s670 = scalar_lea.vmem [#allocation8], %s669
        %p671 = pneg %p159
        %p672 = pneg %p156
        %p673 = pneg %p180
        %p674 = pneg %p177
        %p675 = pneg %p201
        %p676 = pneg %p198
        %p677 = pneg %p222
        %p678 = pneg %p219
        %p679 = pneg %p243
        %p680 = pneg %p240
        %p681 = pneg %p264
        %p682 = pneg %p261
        %p683 = pneg %p285
        %p684 = pneg %p282
        %p685 = pneg %p306
        %p686 = pneg %p303
        %p687 = pneg %p327
        %p688 = pneg %p324
        %p689 = pneg %p348
        %p690 = pneg %p345
        %p691 = pneg %p369
        %p692 = pneg %p366
        %p693 = pneg %p397
        %p694 = pneg %p394
        %s695 = sand.u32 %s384, 1
        %s696 = scalar_lea.sflag [#allocation4], %s695
        %s697 = sand.u32 %s384, 1
        %s698 = smul.addr %s697, 8
        %s699 = scalar_lea.vmem [#allocation16], %s698
        %p700 = pneg %p425
        %p701 = pneg %p422
        %s702 = sand.u32 %s412, 1
        %s703 = scalar_lea.sflag [#allocation18], %s702
        %s704 = sand.u32 %s412, 1
        %s705 = smul.addr %s704, 32
        %s706 = scalar_lea.vmem [#allocation17], %s705
        %v708 = vld [vmem:[%s597] sm:$0xff]
        %v709 = vld [vmem:[%s606] sm:$0xff]
        %v710 = vld [vmem:[%s615] sm:$0xff]
        %v711 = vld [vmem:[%s624] sm:$0xff]
        %vm712 = vcmp.gt.f32.partialorder %v711, 0.5
        %v713 = vpack.c.bf16 %v708, %v708
        %v714 = vld [vmem:[#allocation10] sm:$0xf]
        %v715 = vld [vmem:[#allocation10 + $0x4] sm:$0xf]
        %v716 = vld [vmem:[#allocation10 + $0x8] sm:$0xf]
        %v717 = vld [vmem:[#allocation10 + $0xc] sm:$0xf]
        %v718 = vld [vmem:[%s5] sm:$0x1]
        %v720 = vlaneseq
        %v721 = vshrl.u32 %v720, 7
        %v722 = vsub.s32 0, %v721
        %v723 = vrot.slane %v718, %v722
        %v729 = vunpack.c.l.b16 %v714
        %v730 = vunpack.c.l.b16 %v715
        %v731 = vunpack.c.l.b16 %v716
        %v732 = vunpack.c.l.b16 %v717
        %v733 = vpack.c.b16 %v730, %v729
        %v734 = vpack.c.b16 %v732, %v731
        %vm737 = vcmask 261120
        %v739 = vsel %vm737, %v713, 0
        %741 = vmatprep.subr.bf16.mxu0 0
        %742 = vmatpush1.bf16.msra.mxu0 0
        %743 = vmatprep.subr.bf16.mxu0 0
        %744 = vmatpush1.bf16.msra.mxu0 0
        %745 = vmatprep.subr.bf16.mxu0 0
        %746 = vmatpush1.bf16.msra.mxu0 0
        %747 = vmatprep.subr.bf16.mxu0 0
        %748 = vmatpush1.bf16.msra.mxu0 0
        %749 = vmatprep.subr.bf16.mxu0 0
        %750 = vmatpush1.bf16.msra.mxu0 0
        %751 = vmatprep.subr.bf16.mxu0 0
        %752 = vmatpush1.bf16.msra.mxu0 0
        %753 = vmatprep.subr.bf16.mxu0 0
        %754 = vmatpush1.bf16.msra.mxu0 %v734
        %755 = vmatprep.subr.bf16.mxu0 0
        %756 = vmatpush1.bf16.msra.mxu0 %v733
        %757 = vmatprep.subr.bf16.mxu0 0
        %758 = vmatpush2.bf16.msra.mxu0 0
        %759 = vmatprep.subr.bf16.mxu0 0
        %760 = vmatpush2.bf16.msra.mxu0 0
        %761 = vmatprep.subr.bf16.mxu0 0
        %762 = vmatpush2.bf16.msra.mxu0 0
        %763 = vmatprep.subr.bf16.mxu0 0
        %764 = vmatpush2.bf16.msra.mxu0 0
        %765 = vmatprep.subr.bf16.mxu0 0
        %766 = vmatpush2.bf16.msra.mxu0 0
        %767 = vmatprep.subr.bf16.mxu0 0
        %768 = vmatpush2.bf16.msra.mxu0 0
        %769 = vmatprep.subr.bf16.mxu0 0
        %770 = vmatpush2.bf16.msra.mxu0 0
        %771 = vmatprep.subr.bf16.mxu0 0
        %772 = vmatpush2.bf16.msra.mxu0 0
        %773 = vmatprep.mubr.bf16.mxu0 0
        %774 = vmatmul.mubr.bf16.gmra.mxu0 %v739
        %v775 = vpop.f32.mrf.mxu0
        %v776 = vadd.f32 %v723, %v775
        %v777 = vpop.f32.mrf.mxu0
        %v778 = vpop.f32.mrf.mxu0
        %v779 = vpop.f32.mrf.mxu0
        %780 = vdwg.mxu0
        %v781 = vpack.c.bf16 %v709, %v709
        %v782 = vld [vmem:[#allocation11] sm:$0xf]
        %v783 = vld [vmem:[#allocation11 + $0x4] sm:$0xf]
        %v784 = vld [vmem:[#allocation11 + $0x8] sm:$0xf]
        %v785 = vld [vmem:[#allocation11 + $0xc] sm:$0xf]
        %v786 = vld [vmem:[%s7] sm:$0x1]
        %v788 = vlaneseq
        %v789 = vshrl.u32 %v788, 7
        %v790 = vsub.s32 0, %v789
        %v791 = vrot.slane %v786, %v790
        %v797 = vunpack.c.l.b16 %v782
        %v798 = vunpack.c.l.b16 %v783
        %v799 = vunpack.c.l.b16 %v784
        %v800 = vunpack.c.l.b16 %v785
        %v801 = vpack.c.b16 %v798, %v797
        %v802 = vpack.c.b16 %v800, %v799
        %v806 = vsel %vm737, %v781, 0
        %808 = vmatprep.subr.bf16.mxu0 0
        %809 = vmatpush1.bf16.msra.mxu0 0
        %810 = vmatprep.subr.bf16.mxu0 0
        %811 = vmatpush1.bf16.msra.mxu0 0
        %812 = vmatprep.subr.bf16.mxu0 0
        %813 = vmatpush1.bf16.msra.mxu0 0
        %814 = vmatprep.subr.bf16.mxu0 0
        %815 = vmatpush1.bf16.msra.mxu0 0
        %816 = vmatprep.subr.bf16.mxu0 0
        %817 = vmatpush1.bf16.msra.mxu0 0
        %818 = vmatprep.subr.bf16.mxu0 0
        %819 = vmatpush1.bf16.msra.mxu0 0
        %820 = vmatprep.subr.bf16.mxu0 0
        %821 = vmatpush1.bf16.msra.mxu0 %v802
        %822 = vmatprep.subr.bf16.mxu0 0
        %823 = vmatpush1.bf16.msra.mxu0 %v801
        %824 = vmatprep.subr.bf16.mxu0 0
        %825 = vmatpush2.bf16.msra.mxu0 0
        %826 = vmatprep.subr.bf16.mxu0 0
        %827 = vmatpush2.bf16.msra.mxu0 0
        %828 = vmatprep.subr.bf16.mxu0 0
        %829 = vmatpush2.bf16.msra.mxu0 0
        %830 = vmatprep.subr.bf16.mxu0 0
        %831 = vmatpush2.bf16.msra.mxu0 0
        %832 = vmatprep.subr.bf16.mxu0 0
        %833 = vmatpush2.bf16.msra.mxu0 0
        %834 = vmatprep.subr.bf16.mxu0 0
        %835 = vmatpush2.bf16.msra.mxu0 0
        %836 = vmatprep.subr.bf16.mxu0 0
        %837 = vmatpush2.bf16.msra.mxu0 0
        %838 = vmatprep.subr.bf16.mxu0 0
        %839 = vmatpush2.bf16.msra.mxu0 0
        %840 = vmatprep.mubr.bf16.mxu0 0
        %841 = vmatmul.mubr.bf16.gmra.mxu0 %v806
        %v842 = vpop.f32.mrf.mxu0
        %v843 = vadd.f32 %v791, %v842
        %v844 = vpop.f32.mrf.mxu0
        %v845 = vpop.f32.mrf.mxu0
        %v846 = vpop.f32.mrf.mxu0
        %847 = vdwg.mxu0
        %v848 = vpack.c.bf16 %v710, %v710
        %v849 = vld [vmem:[#allocation13] sm:$0xf]
        %v850 = vld [vmem:[#allocation13 + $0x4] sm:$0xf]
        %v851 = vld [vmem:[#allocation13 + $0x8] sm:$0xf]
        %v852 = vld [vmem:[#allocation13 + $0xc] sm:$0xf]
        %v853 = vld [vmem:[#allocation14] sm:$0x1]
        %v855 = vlaneseq
        %v856 = vshrl.u32 %v855, 7
        %v857 = vsub.s32 0, %v856
        %v858 = vrot.slane %v853, %v857
        %v864 = vunpack.c.l.b16 %v849
        %v865 = vunpack.c.l.b16 %v850
        %v866 = vunpack.c.l.b16 %v851
        %v867 = vunpack.c.l.b16 %v852
        %v868 = vpack.c.b16 %v865, %v864
        %v869 = vpack.c.b16 %v867, %v866
        %v873 = vsel %vm737, %v848, 0
        %875 = vmatprep.subr.bf16.mxu0 0
        %876 = vmatpush1.bf16.msra.mxu0 0
        %877 = vmatprep.subr.bf16.mxu0 0
        %878 = vmatpush1.bf16.msra.mxu0 0
        %879 = vmatprep.subr.bf16.mxu0 0
        %880 = vmatpush1.bf16.msra.mxu0 0
        %881 = vmatprep.subr.bf16.mxu0 0
        %882 = vmatpush1.bf16.msra.mxu0 0
        %883 = vmatprep.subr.bf16.mxu0 0
        %884 = vmatpush1.bf16.msra.mxu0 0
        %885 = vmatprep.subr.bf16.mxu0 0
        %886 = vmatpush1.bf16.msra.mxu0 0
        %887 = vmatprep.subr.bf16.mxu0 0
        %888 = vmatpush1.bf16.msra.mxu0 %v869
        %889 = vmatprep.subr.bf16.mxu0 0
        %890 = vmatpush1.bf16.msra.mxu0 %v868
        %891 = vmatprep.subr.bf16.mxu0 0
        %892 = vmatpush2.bf16.msra.mxu0 0
        %893 = vmatprep.subr.bf16.mxu0 0
        %894 = vmatpush2.bf16.msra.mxu0 0
        %895 = vmatprep.subr.bf16.mxu0 0
        %896 = vmatpush2.bf16.msra.mxu0 0
        %897 = vmatprep.subr.bf16.mxu0 0
        %898 = vmatpush2.bf16.msra.mxu0 0
        %899 = vmatprep.subr.bf16.mxu0 0
        %900 = vmatpush2.bf16.msra.mxu0 0
        %901 = vmatprep.subr.bf16.mxu0 0
        %902 = vmatpush2.bf16.msra.mxu0 0
        %903 = vmatprep.subr.bf16.mxu0 0
        %904 = vmatpush2.bf16.msra.mxu0 0
        %905 = vmatprep.subr.bf16.mxu0 0
        %906 = vmatpush2.bf16.msra.mxu0 0
        %907 = vmatprep.mubr.bf16.mxu0 0
        %908 = vmatmul.mubr.bf16.gmra.mxu0 %v873
        %v909 = vpop.f32.mrf.mxu0
        %v910 = vadd.f32 %v858, %v909
        %v911 = vpop.f32.mrf.mxu0
        %v912 = vpop.f32.mrf.mxu0
        %v913 = vpop.f32.mrf.mxu0
        %914 = vdwg.mxu0
        %v915 = vmul.f32 %v776, 0.35355338
        %917 = vrot.lane.b32.xlu0 %v915, 120
        %v918 = vpop.permute.xlu0 %917
        %920 = vrot.lane.b32.xlu0 %v915, 112
        %v921 = vpop.permute.xlu0 %920
        %923 = vrot.lane.b32.xlu0 %v915, 104
        %v924 = vpop.permute.xlu0 %923
        %v926 = vcombine.low %v915, %v921
        %v927 = vcombine.high %v915, %v921
        %v929 = vunpack.c.l.s4 1983009808
        %v930 = vunpack.c.0.s8 %v929
        %v931 = vlaneseq
        %v932 = vshrl.u32 %v931, 7
        %v933 = vsub.s32 %v930, %v932
        %v934 = vrot.slane %v926, %v933
        %v936 = vunpack.c.l.s4 1983009808
        %v937 = vunpack.c.0.s8 %v936
        %v938 = vlaneseq
        %v939 = vshrl.u32 %v938, 7
        %v940 = vsub.s32 %v937, %v939
        %v941 = vrot.slane %v927, %v940
        %v942 = vcombine.low %v918, %v924
        %v943 = vcombine.high %v918, %v924
        %v945 = vunpack.c.l.s4 1983009808
        %v946 = vunpack.c.0.s8 %v945
        %v947 = vlaneseq
        %v948 = vshrl.u32 %v947, 7
        %v949 = vsub.s32 %v946, %v948
        %v950 = vrot.slane %v942, %v949
        %v952 = vunpack.c.l.s4 1983009808
        %v953 = vunpack.c.0.s8 %v952
        %v954 = vlaneseq
        %v955 = vshrl.u32 %v954, 7
        %v956 = vsub.s32 %v953, %v955
        %v957 = vrot.slane %v943, %v956
        %v958 = vcombine.low %v934, %v950
        %v959 = vcombine.high %v934, %v950
        %v961 = vunpack.c.l.s4 1934713408
        %v962 = vunpack.c.0.s8 %v961
        %v963 = vlaneseq
        %v964 = vshrl.u32 %v963, 7
        %v965 = vsub.s32 %v962, %v964
        %v966 = vrot.slane %v958, %v965
        %v968 = vunpack.c.l.s4 1934713408
        %v969 = vunpack.c.0.s8 %v968
        %v970 = vlaneseq
        %v971 = vshrl.u32 %v970, 7
        %v972 = vsub.s32 %v969, %v971
        %v973 = vrot.slane %v959, %v972
        %v974 = vcombine.low %v941, %v957
        %v975 = vcombine.high %v941, %v957
        %v977 = vunpack.c.l.s4 1934713408
        %v978 = vunpack.c.0.s8 %v977
        %v979 = vlaneseq
        %v980 = vshrl.u32 %v979, 7
        %v981 = vsub.s32 %v978, %v980
        %v982 = vrot.slane %v974, %v981
        %v984 = vunpack.c.l.s4 1934713408
        %v985 = vunpack.c.0.s8 %v984
        %v986 = vlaneseq
        %v987 = vshrl.u32 %v986, 7
        %v988 = vsub.s32 %v985, %v987
        %v989 = vrot.slane %v975, %v988
        %v990 = vcombine.high %v966, 0.0
        %v991 = vcombine.high %v973, 0.0
        %v992 = vcombine.high %v982, 0.0
        %v993 = vcombine.high %v989, 0.0
        %v994 = vpack.c.bf16 %v966, %v966
        %v995 = vpack.c.bf16 %v990, %v990
        %v996 = vpack.c.bf16 %v973, %v973
        %v997 = vpack.c.bf16 %v991, %v991
        %v998 = vpack.c.bf16 %v982, %v982
        %v999 = vpack.c.bf16 %v992, %v992
        %v1000 = vpack.c.bf16 %v989, %v989
        %v1001 = vpack.c.bf16 %v993, %v993
        %1003 = vrot.lane.b32.xlu0 %v843, 120
        %v1004 = vpop.permute.xlu0 %1003
        %1006 = vrot.lane.b32.xlu0 %v843, 112
        %v1007 = vpop.permute.xlu0 %1006
        %1009 = vrot.lane.b32.xlu0 %v843, 104
        %v1010 = vpop.permute.xlu0 %1009
        %v1012 = vcombine.low %v843, %v1007
        %v1013 = vcombine.high %v843, %v1007
        %v1015 = vunpack.c.l.s4 1983009808
        %v1016 = vunpack.c.0.s8 %v1015
        %v1017 = vlaneseq
        %v1018 = vshrl.u32 %v1017, 7
        %v1019 = vsub.s32 %v1016, %v1018
        %v1020 = vrot.slane %v1012, %v1019
        %v1022 = vunpack.c.l.s4 1983009808
        %v1023 = vunpack.c.0.s8 %v1022
        %v1024 = vlaneseq
        %v1025 = vshrl.u32 %v1024, 7
        %v1026 = vsub.s32 %v1023, %v1025
        %v1027 = vrot.slane %v1013, %v1026
        %v1028 = vcombine.low %v1004, %v1010
        %v1029 = vcombine.high %v1004, %v1010
        %v1031 = vunpack.c.l.s4 1983009808
        %v1032 = vunpack.c.0.s8 %v1031
        %v1033 = vlaneseq
        %v1034 = vshrl.u32 %v1033, 7
        %v1035 = vsub.s32 %v1032, %v1034
        %v1036 = vrot.slane %v1028, %v1035
        %v1038 = vunpack.c.l.s4 1983009808
        %v1039 = vunpack.c.0.s8 %v1038
        %v1040 = vlaneseq
        %v1041 = vshrl.u32 %v1040, 7
        %v1042 = vsub.s32 %v1039, %v1041
        %v1043 = vrot.slane %v1029, %v1042
        %v1044 = vcombine.low %v1020, %v1036
        %v1045 = vcombine.high %v1020, %v1036
        %v1047 = vunpack.c.l.s4 1934713408
        %v1048 = vunpack.c.0.s8 %v1047
        %v1049 = vlaneseq
        %v1050 = vshrl.u32 %v1049, 7
        %v1051 = vsub.s32 %v1048, %v1050
        %v1052 = vrot.slane %v1044, %v1051
        %v1054 = vunpack.c.l.s4 1934713408
        %v1055 = vunpack.c.0.s8 %v1054
        %v1056 = vlaneseq
        %v1057 = vshrl.u32 %v1056, 7
        %v1058 = vsub.s32 %v1055, %v1057
        %v1059 = vrot.slane %v1045, %v1058
        %v1060 = vcombine.low %v1027, %v1043
        %v1061 = vcombine.high %v1027, %v1043
        %v1063 = vunpack.c.l.s4 1934713408
        %v1064 = vunpack.c.0.s8 %v1063
        %v1065 = vlaneseq
        %v1066 = vshrl.u32 %v1065, 7
        %v1067 = vsub.s32 %v1064, %v1066
        %v1068 = vrot.slane %v1060, %v1067
        %v1070 = vunpack.c.l.s4 1934713408
        %v1071 = vunpack.c.0.s8 %v1070
        %v1072 = vlaneseq
        %v1073 = vshrl.u32 %v1072, 7
        %v1074 = vsub.s32 %v1071, %v1073
        %v1075 = vrot.slane %v1061, %v1074
        %v1076 = vcombine.high %v1052, 0.0
        %v1077 = vcombine.high %v1059, 0.0
        %v1078 = vcombine.high %v1068, 0.0
        %v1079 = vcombine.high %v1075, 0.0
        %v1080 = vpack.c.bf16 %v1052, %v1052
        %v1081 = vpack.c.bf16 %v1076, %v1076
        %v1082 = vpack.c.bf16 %v1059, %v1059
        %v1083 = vpack.c.bf16 %v1077, %v1077
        %v1084 = vpack.c.bf16 %v1068, %v1068
        %v1085 = vpack.c.bf16 %v1078, %v1078
        %v1086 = vpack.c.bf16 %v1075, %v1075
        %v1087 = vpack.c.bf16 %v1079, %v1079
        %1089 = vrot.lane.b32.xlu0 %v910, 120
        %v1090 = vpop.permute.xlu0 %1089
        %1092 = vrot.lane.b32.xlu0 %v910, 112
        %v1093 = vpop.permute.xlu0 %1092
        %1095 = vrot.lane.b32.xlu0 %v910, 104
        %v1096 = vpop.permute.xlu0 %1095
        %v1098 = vcombine.low %v910, %v1093
        %v1099 = vcombine.high %v910, %v1093
        %v1101 = vunpack.c.l.s4 1983009808
        %v1102 = vunpack.c.0.s8 %v1101
        %v1103 = vlaneseq
        %v1104 = vshrl.u32 %v1103, 7
        %v1105 = vsub.s32 %v1102, %v1104
        %v1106 = vrot.slane %v1098, %v1105
        %v1108 = vunpack.c.l.s4 1983009808
        %v1109 = vunpack.c.0.s8 %v1108
        %v1110 = vlaneseq
        %v1111 = vshrl.u32 %v1110, 7
        %v1112 = vsub.s32 %v1109, %v1111
        %v1113 = vrot.slane %v1099, %v1112
        %v1114 = vcombine.low %v1090, %v1096
        %v1115 = vcombine.high %v1090, %v1096
        %v1117 = vunpack.c.l.s4 1983009808
        %v1118 = vunpack.c.0.s8 %v1117
        %v1119 = vlaneseq
        %v1120 = vshrl.u32 %v1119, 7
        %v1121 = vsub.s32 %v1118, %v1120
        %v1122 = vrot.slane %v1114, %v1121
        %v1124 = vunpack.c.l.s4 1983009808
        %v1125 = vunpack.c.0.s8 %v1124
        %v1126 = vlaneseq
        %v1127 = vshrl.u32 %v1126, 7
        %v1128 = vsub.s32 %v1125, %v1127
        %v1129 = vrot.slane %v1115, %v1128
        %v1130 = vcombine.low %v1106, %v1122
        %v1131 = vcombine.high %v1106, %v1122
        %v1133 = vunpack.c.l.s4 1934713408
        %v1134 = vunpack.c.0.s8 %v1133
        %v1135 = vlaneseq
        %v1136 = vshrl.u32 %v1135, 7
        %v1137 = vsub.s32 %v1134, %v1136
        %v1138 = vrot.slane %v1130, %v1137
        %v1140 = vunpack.c.l.s4 1934713408
        %v1141 = vunpack.c.0.s8 %v1140
        %v1142 = vlaneseq
        %v1143 = vshrl.u32 %v1142, 7
        %v1144 = vsub.s32 %v1141, %v1143
        %v1145 = vrot.slane %v1131, %v1144
        %v1146 = vcombine.low %v1113, %v1129
        %v1147 = vcombine.high %v1113, %v1129
        %v1149 = vunpack.c.l.s4 1934713408
        %v1150 = vunpack.c.0.s8 %v1149
        %v1151 = vlaneseq
        %v1152 = vshrl.u32 %v1151, 7
        %v1153 = vsub.s32 %v1150, %v1152
        %v1154 = vrot.slane %v1146, %v1153
        %v1156 = vunpack.c.l.s4 1934713408
        %v1157 = vunpack.c.0.s8 %v1156
        %v1158 = vlaneseq
        %v1159 = vshrl.u32 %v1158, 7
        %v1160 = vsub.s32 %v1157, %v1159
        %v1161 = vrot.slane %v1147, %v1160
        %v1162 = vcombine.high %v1138, 0.0
        %v1163 = vcombine.high %v1145, 0.0
        %v1164 = vcombine.high %v1154, 0.0
        %v1165 = vcombine.high %v1161, 0.0
        %v1166 = vpack.c.bf16 %v1138, %v1138
        %v1167 = vpack.c.bf16 %v1162, %v1162
        %v1168 = vpack.c.bf16 %v1145, %v1145
        %v1169 = vpack.c.bf16 %v1163, %v1163
        %v1170 = vpack.c.bf16 %v1154, %v1154
        %v1171 = vpack.c.bf16 %v1164, %v1164
        %v1172 = vpack.c.bf16 %v1161, %v1161
        %v1173 = vpack.c.bf16 %v1165, %v1165
        %v1174 = vcombine.low %v994, %v998
        %v1176 = vunpack.c.l.s4 1983009808
        %v1177 = vunpack.c.0.s8 %v1176
        %v1178 = vlaneseq
        %v1179 = vshrl.u32 %v1178, 7
        %v1180 = vsub.s32 %v1177, %v1179
        %v1181 = vrot.slane %v1174, %v1180
        %v1182 = vcombine.low %v996, %v1000
        %v1184 = vunpack.c.l.s4 1983009808
        %v1185 = vunpack.c.0.s8 %v1184
        %v1186 = vlaneseq
        %v1187 = vshrl.u32 %v1186, 7
        %v1188 = vsub.s32 %v1185, %v1187
        %v1189 = vrot.slane %v1182, %v1188
        %v1190 = vcombine.low %v1181, %v1189
        %v1192 = vunpack.c.l.s4 1934713408
        %v1193 = vunpack.c.0.s8 %v1192
        %v1194 = vlaneseq
        %v1195 = vshrl.u32 %v1194, 7
        %v1196 = vsub.s32 %v1193, %v1195
        %v1197 = vrot.slane %v1190, %v1196
        %v1198 = vcombine.high %v1197, 0
        %v1199 = vcombine.low %v995, %v999
        %v1201 = vunpack.c.l.s4 1983009808
        %v1202 = vunpack.c.0.s8 %v1201
        %v1203 = vlaneseq
        %v1204 = vshrl.u32 %v1203, 7
        %v1205 = vsub.s32 %v1202, %v1204
        %v1206 = vrot.slane %v1199, %v1205
        %v1207 = vcombine.low %v997, %v1001
        %v1209 = vunpack.c.l.s4 1983009808
        %v1210 = vunpack.c.0.s8 %v1209
        %v1211 = vlaneseq
        %v1212 = vshrl.u32 %v1211, 7
        %v1213 = vsub.s32 %v1210, %v1212
        %v1214 = vrot.slane %v1207, %v1213
        %v1215 = vcombine.low %v1206, %v1214
        %v1217 = vunpack.c.l.s4 1934713408
        %v1218 = vunpack.c.0.s8 %v1217
        %v1219 = vlaneseq
        %v1220 = vshrl.u32 %v1219, 7
        %v1221 = vsub.s32 %v1218, %v1220
        %v1222 = vrot.slane %v1215, %v1221
        %v1223 = vcombine.high %v1222, 0
        %v1226 = vpack.i.b16 %v1222, %v1197
        %v1227 = vshrl.u32 %v1197, 16
        %v1228 = vshrl.u32 %v1222, 16
        %v1229 = vpack.i.b16 %v1228, %v1227
        %v1232 = vpack.i.b16 %v1223, %v1198
        %v1233 = vshrl.u32 %v1198, 16
        %v1234 = vshrl.u32 %v1223, 16
        %v1235 = vpack.i.b16 %v1234, %v1233
        %1236 = vxpose.xlu0.c.b16.start [1/8] %v1080, 128
        %1237 = vxpose.xlu0.c.b16.cont [2/8] 0, 128
        %1238 = vxpose.xlu0.c.b16.cont [3/8] 0, 128
        %1239 = vxpose.xlu0.c.b16.cont [4/8] 0, 128
        %1240 = vxpose.xlu0.c.b16.cont [5/8] 0, 128
        %1241 = vxpose.xlu0.c.b16.cont [6/8] 0, 128
        %1242 = vxpose.xlu0.c.b16.cont [7/8] 0, 128
        %1243 = vxpose.xlu0.c.b16.end [8/8] 0, 128
        %v1244 = vpop.trf.xlu0
        %v1245 = vpop.trf.xlu0
        %v1246 = vpop.trf.xlu0
        %v1247 = vpop.trf.xlu0
        %v1248 = vpop.trf.xlu0
        %v1249 = vpop.trf.xlu0
        %v1250 = vpop.trf.xlu0
        %v1251 = vpop.trf.xlu0
        %1252 = vxpose.xlu0.c.b16.start [1/8] %v1081, 128
        %1253 = vxpose.xlu0.c.b16.cont [2/8] 0, 128
        %1254 = vxpose.xlu0.c.b16.cont [3/8] 0, 128
        %1255 = vxpose.xlu0.c.b16.cont [4/8] 0, 128
        %1256 = vxpose.xlu0.c.b16.cont [5/8] 0, 128
        %1257 = vxpose.xlu0.c.b16.cont [6/8] 0, 128
        %1258 = vxpose.xlu0.c.b16.cont [7/8] 0, 128
        %1259 = vxpose.xlu0.c.b16.end [8/8] 0, 128
        %v1260 = vpop.trf.xlu0
        %v1261 = vpop.trf.xlu0
        %v1262 = vpop.trf.xlu0
        %v1263 = vpop.trf.xlu0
        %v1264 = vpop.trf.xlu0
        %v1265 = vpop.trf.xlu0
        %v1266 = vpop.trf.xlu0
        %v1267 = vpop.trf.xlu0
        %1268 = vxpose.xlu0.c.b16.start [1/8] %v1082, 128
        %1269 = vxpose.xlu0.c.b16.cont [2/8] 0, 128
        %1270 = vxpose.xlu0.c.b16.cont [3/8] 0, 128
        %1271 = vxpose.xlu0.c.b16.cont [4/8] 0, 128
        %1272 = vxpose.xlu0.c.b16.cont [5/8] 0, 128
        %1273 = vxpose.xlu0.c.b16.cont [6/8] 0, 128
        %1274 = vxpose.xlu0.c.b16.cont [7/8] 0, 128
        %1275 = vxpose.xlu0.c.b16.end [8/8] 0, 128
        %v1276 = vpop.trf.xlu0
        %v1277 = vpop.trf.xlu0
        %v1278 = vpop.trf.xlu0
        %v1279 = vpop.trf.xlu0
        %v1280 = vpop.trf.xlu0
        %v1281 = vpop.trf.xlu0
        %v1282 = vpop.trf.xlu0
        %v1283 = vpop.trf.xlu0
        %1284 = vxpose.xlu0.c.b16.start [1/8] %v1083, 128
        %1285 = vxpose.xlu0.c.b16.cont [2/8] 0, 128
        %1286 = vxpose.xlu0.c.b16.cont [3/8] 0, 128
        %1287 = vxpose.xlu0.c.b16.cont [4/8] 0, 128
        %1288 = vxpose.xlu0.c.b16.cont [5/8] 0, 128
        %1289 = vxpose.xlu0.c.b16.cont [6/8] 0, 128
        %1290 = vxpose.xlu0.c.b16.cont [7/8] 0, 128
        %1291 = vxpose.xlu0.c.b16.end [8/8] 0, 128
        %v1292 = vpop.trf.xlu0
        %v1293 = vpop.trf.xlu0
        %v1294 = vpop.trf.xlu0
        %v1295 = vpop.trf.xlu0
        %v1296 = vpop.trf.xlu0
        %v1297 = vpop.trf.xlu0
        %v1298 = vpop.trf.xlu0
        %v1299 = vpop.trf.xlu0
        %1300 = vxpose.xlu0.c.b16.start [1/8] %v1084, 128
        %1301 = vxpose.xlu0.c.b16.cont [2/8] 0, 128
        %1302 = vxpose.xlu0.c.b16.cont [3/8] 0, 128
        %1303 = vxpose.xlu0.c.b16.cont [4/8] 0, 128
        %1304 = vxpose.xlu0.c.b16.cont [5/8] 0, 128
        %1305 = vxpose.xlu0.c.b16.cont [6/8] 0, 128
        %1306 = vxpose.xlu0.c.b16.cont [7/8] 0, 128
        %1307 = vxpose.xlu0.c.b16.end [8/8] 0, 128
        %v1308 = vpop.trf.xlu0
        %v1309 = vpop.trf.xlu0
        %v1310 = vpop.trf.xlu0
        %v1311 = vpop.trf.xlu0
        %v1312 = vpop.trf.xlu0
        %v1313 = vpop.trf.xlu0
        %v1314 = vpop.trf.xlu0
        %v1315 = vpop.trf.xlu0
        %1316 = vxpose.xlu0.c.b16.start [1/8] %v1085, 128
        %1317 = vxpose.xlu0.c.b16.cont [2/8] 0, 128
        %1318 = vxpose.xlu0.c.b16.cont [3/8] 0, 128
        %1319 = vxpose.xlu0.c.b16.cont [4/8] 0, 128
        %1320 = vxpose.xlu0.c.b16.cont [5/8] 0, 128
        %1321 = vxpose.xlu0.c.b16.cont [6/8] 0, 128
        %1322 = vxpose.xlu0.c.b16.cont [7/8] 0, 128
        %1323 = vxpose.xlu0.c.b16.end [8/8] 0, 128
        %v1324 = vpop.trf.xlu0
        %v1325 = vpop.trf.xlu0
        %v1326 = vpop.trf.xlu0
        %v1327 = vpop.trf.xlu0
        %v1328 = vpop.trf.xlu0
        %v1329 = vpop.trf.xlu0
        %v1330 = vpop.trf.xlu0
        %v1331 = vpop.trf.xlu0
        %1332 = vxpose.xlu0.c.b16.start [1/8] %v1086, 128
        %1333 = vxpose.xlu0.c.b16.cont [2/8] 0, 128
        %1334 = vxpose.xlu0.c.b16.cont [3/8] 0, 128
        %1335 = vxpose.xlu0.c.b16.cont [4/8] 0, 128
        %1336 = vxpose.xlu0.c.b16.cont [5/8] 0, 128
        %1337 = vxpose.xlu0.c.b16.cont [6/8] 0, 128
        %1338 = vxpose.xlu0.c.b16.cont [7/8] 0, 128
        %1339 = vxpose.xlu0.c.b16.end [8/8] 0, 128
        %v1340 = vpop.trf.xlu0
        %v1341 = vpop.trf.xlu0
        %v1342 = vpop.trf.xlu0
        %v1343 = vpop.trf.xlu0
        %v1344 = vpop.trf.xlu0
        %v1345 = vpop.trf.xlu0
        %v1346 = vpop.trf.xlu0
        %v1347 = vpop.trf.xlu0
        %1348 = vxpose.xlu0.c.b16.start [1/8] %v1087, 128
        %1349 = vxpose.xlu0.c.b16.cont [2/8] 0, 128
        %1350 = vxpose.xlu0.c.b16.cont [3/8] 0, 128
        %1351 = vxpose.xlu0.c.b16.cont [4/8] 0, 128
        %1352 = vxpose.xlu0.c.b16.cont [5/8] 0, 128
        %1353 = vxpose.xlu0.c.b16.cont [6/8] 0, 128
        %1354 = vxpose.xlu0.c.b16.cont [7/8] 0, 128
        %1355 = vxpose.xlu0.c.b16.end [8/8] 0, 128
        %v1356 = vpop.trf.xlu0
        %v1357 = vpop.trf.xlu0
        %v1358 = vpop.trf.xlu0
        %v1359 = vpop.trf.xlu0
        %v1360 = vpop.trf.xlu0
        %v1361 = vpop.trf.xlu0
        %v1362 = vpop.trf.xlu0
        %v1363 = vpop.trf.xlu0
        %v1364 = vcombine.low %v1244, %v1308
        %v1366 = vunpack.c.l.s4 1983009808
        %v1367 = vunpack.c.0.s8 %v1366
        %v1368 = vlaneseq
        %v1369 = vshrl.u32 %v1368, 7
        %v1370 = vsub.s32 %v1367, %v1369
        %v1371 = vrot.slane %v1364, %v1370
        %v1372 = vcombine.low %v1276, %v1340
        %v1374 = vunpack.c.l.s4 1983009808
        %v1375 = vunpack.c.0.s8 %v1374
        %v1376 = vlaneseq
        %v1377 = vshrl.u32 %v1376, 7
        %v1378 = vsub.s32 %v1375, %v1377
        %v1379 = vrot.slane %v1372, %v1378
        %v1380 = vcombine.low %v1371, %v1379
        %v1381 = vcombine.high %v1371, %v1379
        %v1383 = vunpack.c.l.s4 1934713408
        %v1384 = vunpack.c.0.s8 %v1383
        %v1385 = vlaneseq
        %v1386 = vshrl.u32 %v1385, 7
        %v1387 = vsub.s32 %v1384, %v1386
        %v1388 = vrot.slane %v1380, %v1387
        %v1390 = vunpack.c.l.s4 1934713408
        %v1391 = vunpack.c.0.s8 %v1390
        %v1392 = vlaneseq
        %v1393 = vshrl.u32 %v1392, 7
        %v1394 = vsub.s32 %v1391, %v1393
        %v1395 = vrot.slane %v1381, %v1394
        %v1396 = vcombine.high %v1388, 0
        %v1397 = vcombine.high %v1395, 0
        %v1398 = vcombine.low %v1260, %v1324
        %v1400 = vunpack.c.l.s4 1983009808
        %v1401 = vunpack.c.0.s8 %v1400
        %v1402 = vlaneseq
        %v1403 = vshrl.u32 %v1402, 7
        %v1404 = vsub.s32 %v1401, %v1403
        %v1405 = vrot.slane %v1398, %v1404
        %v1406 = vcombine.low %v1292, %v1356
        %v1408 = vunpack.c.l.s4 1983009808
        %v1409 = vunpack.c.0.s8 %v1408
        %v1410 = vlaneseq
        %v1411 = vshrl.u32 %v1410, 7
        %v1412 = vsub.s32 %v1409, %v1411
        %v1413 = vrot.slane %v1406, %v1412
        %v1414 = vcombine.low %v1405, %v1413
        %v1415 = vcombine.high %v1405, %v1413
        %v1417 = vunpack.c.l.s4 1934713408
        %v1418 = vunpack.c.0.s8 %v1417
        %v1419 = vlaneseq
        %v1420 = vshrl.u32 %v1419, 7
        %v1421 = vsub.s32 %v1418, %v1420
        %v1422 = vrot.slane %v1414, %v1421
        %v1424 = vunpack.c.l.s4 1934713408
        %v1425 = vunpack.c.0.s8 %v1424
        %v1426 = vlaneseq
        %v1427 = vshrl.u32 %v1426, 7
        %v1428 = vsub.s32 %v1425, %v1427
        %v1429 = vrot.slane %v1415, %v1428
        %v1430 = vcombine.high %v1422, 0
        %v1431 = vcombine.high %v1429, 0
        %v1434 = vpack.i.b16 %v1422, %v1388
        %v1436 = vshrl.u32 %v1388, 16
        %v1437 = vshrl.u32 %v1422, 16
        %v1438 = vpack.i.b16 %v1437, %v1436
        %v1442 = vpack.i.b16 %v1430, %v1396
        %v1444 = vshrl.u32 %v1396, 16
        %v1445 = vshrl.u32 %v1430, 16
        %v1446 = vpack.i.b16 %v1445, %v1444
        %v1450 = vpack.i.b16 %v1429, %v1395
        %v1452 = vshrl.u32 %v1395, 16
        %v1453 = vshrl.u32 %v1429, 16
        %v1454 = vpack.i.b16 %v1453, %v1452
        %v1458 = vpack.i.b16 %v1431, %v1397
        %v1460 = vshrl.u32 %v1397, 16
        %v1461 = vshrl.u32 %v1431, 16
        %v1462 = vpack.i.b16 %v1461, %v1460
        %1464 = vxpose.xlu0.c.b16.start [1/8] %v1434, 128
        %1465 = vxpose.xlu0.c.b16.cont [2/8] 0, 128
        %1466 = vxpose.xlu0.c.b16.cont [3/8] 0, 128
        %1467 = vxpose.xlu0.c.b16.cont [4/8] 0, 128
        %1468 = vxpose.xlu0.c.b16.cont [5/8] 0, 128
        %1469 = vxpose.xlu0.c.b16.cont [6/8] 0, 128
        %1470 = vxpose.xlu0.c.b16.cont [7/8] 0, 128
        %1471 = vxpose.xlu0.c.b16.end [8/8] 0, 128
        %v1472 = vpop.trf.xlu0
        %v1473 = vpop.trf.xlu0
        %v1474 = vpop.trf.xlu0
        %v1475 = vpop.trf.xlu0
        %v1476 = vpop.trf.xlu0
        %v1477 = vpop.trf.xlu0
        %v1478 = vpop.trf.xlu0
        %v1479 = vpop.trf.xlu0
        %1480 = vxpose.xlu0.c.b16.start [1/8] %v1438, 128
        %1481 = vxpose.xlu0.c.b16.cont [2/8] 0, 128
        %1482 = vxpose.xlu0.c.b16.cont [3/8] 0, 128
        %1483 = vxpose.xlu0.c.b16.cont [4/8] 0, 128
        %1484 = vxpose.xlu0.c.b16.cont [5/8] 0, 128
        %1485 = vxpose.xlu0.c.b16.cont [6/8] 0, 128
        %1486 = vxpose.xlu0.c.b16.cont [7/8] 0, 128
        %1487 = vxpose.xlu0.c.b16.end [8/8] 0, 128
        %v1488 = vpop.trf.xlu0
        %v1489 = vpop.trf.xlu0
        %v1490 = vpop.trf.xlu0
        %v1491 = vpop.trf.xlu0
        %v1492 = vpop.trf.xlu0
        %v1493 = vpop.trf.xlu0
        %v1494 = vpop.trf.xlu0
        %v1495 = vpop.trf.xlu0
        %1496 = vxpose.xlu0.c.b16.start [1/8] %v1442, 128
        %1497 = vxpose.xlu0.c.b16.cont [2/8] 0, 128
        %1498 = vxpose.xlu0.c.b16.cont [3/8] 0, 128
        %1499 = vxpose.xlu0.c.b16.cont [4/8] 0, 128
        %1500 = vxpose.xlu0.c.b16.cont [5/8] 0, 128
        %1501 = vxpose.xlu0.c.b16.cont [6/8] 0, 128
        %1502 = vxpose.xlu0.c.b16.cont [7/8] 0, 128
        %1503 = vxpose.xlu0.c.b16.end [8/8] 0, 128
        %v1504 = vpop.trf.xlu0
        %v1505 = vpop.trf.xlu0
        %v1506 = vpop.trf.xlu0
        %v1507 = vpop.trf.xlu0
        %v1508 = vpop.trf.xlu0
        %v1509 = vpop.trf.xlu0
        %v1510 = vpop.trf.xlu0
        %v1511 = vpop.trf.xlu0
        %1512 = vxpose.xlu0.c.b16.start [1/8] %v1446, 128
        %1513 = vxpose.xlu0.c.b16.cont [2/8] 0, 128
        %1514 = vxpose.xlu0.c.b16.cont [3/8] 0, 128
        %1515 = vxpose.xlu0.c.b16.cont [4/8] 0, 128
        %1516 = vxpose.xlu0.c.b16.cont [5/8] 0, 128
        %1517 = vxpose.xlu0.c.b16.cont [6/8] 0, 128
        %1518 = vxpose.xlu0.c.b16.cont [7/8] 0, 128
        %1519 = vxpose.xlu0.c.b16.end [8/8] 0, 128
        %v1520 = vpop.trf.xlu0
        %v1521 = vpop.trf.xlu0
        %v1522 = vpop.trf.xlu0
        %v1523 = vpop.trf.xlu0
        %v1524 = vpop.trf.xlu0
        %v1525 = vpop.trf.xlu0
        %v1526 = vpop.trf.xlu0
        %v1527 = vpop.trf.xlu0
        %1528 = vxpose.xlu0.c.b16.start [1/8] %v1450, 128
        %1529 = vxpose.xlu0.c.b16.cont [2/8] 0, 128
        %1530 = vxpose.xlu0.c.b16.cont [3/8] 0, 128
        %1531 = vxpose.xlu0.c.b16.cont [4/8] 0, 128
        %1532 = vxpose.xlu0.c.b16.cont [5/8] 0, 128
        %1533 = vxpose.xlu0.c.b16.cont [6/8] 0, 128
        %1534 = vxpose.xlu0.c.b16.cont [7/8] 0, 128
        %1535 = vxpose.xlu0.c.b16.end [8/8] 0, 128
        %v1536 = vpop.trf.xlu0
        %v1537 = vpop.trf.xlu0
        %v1538 = vpop.trf.xlu0
        %v1539 = vpop.trf.xlu0
        %v1540 = vpop.trf.xlu0
        %v1541 = vpop.trf.xlu0
        %v1542 = vpop.trf.xlu0
        %v1543 = vpop.trf.xlu0
        %1544 = vxpose.xlu0.c.b16.start [1/8] %v1454, 128
        %1545 = vxpose.xlu0.c.b16.cont [2/8] 0, 128
        %1546 = vxpose.xlu0.c.b16.cont [3/8] 0, 128
        %1547 = vxpose.xlu0.c.b16.cont [4/8] 0, 128
        %1548 = vxpose.xlu0.c.b16.cont [5/8] 0, 128
        %1549 = vxpose.xlu0.c.b16.cont [6/8] 0, 128
        %1550 = vxpose.xlu0.c.b16.cont [7/8] 0, 128
        %1551 = vxpose.xlu0.c.b16.end [8/8] 0, 128
        %v1552 = vpop.trf.xlu0
        %v1553 = vpop.trf.xlu0
        %v1554 = vpop.trf.xlu0
        %v1555 = vpop.trf.xlu0
        %v1556 = vpop.trf.xlu0
        %v1557 = vpop.trf.xlu0
        %v1558 = vpop.trf.xlu0
        %v1559 = vpop.trf.xlu0
        %1560 = vxpose.xlu0.c.b16.start [1/8] %v1458, 128
        %1561 = vxpose.xlu0.c.b16.cont [2/8] 0, 128
        %1562 = vxpose.xlu0.c.b16.cont [3/8] 0, 128
        %1563 = vxpose.xlu0.c.b16.cont [4/8] 0, 128
        %1564 = vxpose.xlu0.c.b16.cont [5/8] 0, 128
        %1565 = vxpose.xlu0.c.b16.cont [6/8] 0, 128
        %1566 = vxpose.xlu0.c.b16.cont [7/8] 0, 128
        %1567 = vxpose.xlu0.c.b16.end [8/8] 0, 128
        %v1568 = vpop.trf.xlu0
        %v1569 = vpop.trf.xlu0
        %v1570 = vpop.trf.xlu0
        %v1571 = vpop.trf.xlu0
        %v1572 = vpop.trf.xlu0
        %v1573 = vpop.trf.xlu0
        %v1574 = vpop.trf.xlu0
        %v1575 = vpop.trf.xlu0
        %1576 = vxpose.xlu0.c.b16.start [1/8] %v1462, 128
        %1577 = vxpose.xlu0.c.b16.cont [2/8] 0, 128
        %1578 = vxpose.xlu0.c.b16.cont [3/8] 0, 128
        %1579 = vxpose.xlu0.c.b16.cont [4/8] 0, 128
        %1580 = vxpose.xlu0.c.b16.cont [5/8] 0, 128
        %1581 = vxpose.xlu0.c.b16.cont [6/8] 0, 128
        %1582 = vxpose.xlu0.c.b16.cont [7/8] 0, 128
        %1583 = vxpose.xlu0.c.b16.end [8/8] 0, 128
        %v1584 = vpop.trf.xlu0
        %v1585 = vpop.trf.xlu0
        %v1586 = vpop.trf.xlu0
        %v1587 = vpop.trf.xlu0
        %v1588 = vpop.trf.xlu0
        %v1589 = vpop.trf.xlu0
        %v1590 = vpop.trf.xlu0
        %v1591 = vpop.trf.xlu0
        %v1592 = vcombine.low %v1472, %v1536
        %v1594 = vunpack.c.l.s4 1983009808
        %v1595 = vunpack.c.0.s8 %v1594
        %v1596 = vlaneseq
        %v1597 = vshrl.u32 %v1596, 7
        %v1598 = vsub.s32 %v1595, %v1597
        %v1599 = vrot.slane %v1592, %v1598
        %v1600 = vcombine.low %v1504, %v1568
        %v1602 = vunpack.c.l.s4 1983009808
        %v1603 = vunpack.c.0.s8 %v1602
        %v1604 = vlaneseq
        %v1605 = vshrl.u32 %v1604, 7
        %v1606 = vsub.s32 %v1603, %v1605
        %v1607 = vrot.slane %v1600, %v1606
        %v1608 = vcombine.low %v1599, %v1607
        %v1610 = vunpack.c.l.s4 1934713408
        %v1611 = vunpack.c.0.s8 %v1610
        %v1612 = vlaneseq
        %v1613 = vshrl.u32 %v1612, 7
        %v1614 = vsub.s32 %v1611, %v1613
        %v1615 = vrot.slane %v1608, %v1614
        %v1616 = vcombine.high %v1615, 0
        %v1617 = vcombine.low %v1488, %v1552
        %v1619 = vunpack.c.l.s4 1983009808
        %v1620 = vunpack.c.0.s8 %v1619
        %v1621 = vlaneseq
        %v1622 = vshrl.u32 %v1621, 7
        %v1623 = vsub.s32 %v1620, %v1622
        %v1624 = vrot.slane %v1617, %v1623
        %v1625 = vcombine.low %v1520, %v1584
        %v1627 = vunpack.c.l.s4 1983009808
        %v1628 = vunpack.c.0.s8 %v1627
        %v1629 = vlaneseq
        %v1630 = vshrl.u32 %v1629, 7
        %v1631 = vsub.s32 %v1628, %v1630
        %v1632 = vrot.slane %v1625, %v1631
        %v1633 = vcombine.low %v1624, %v1632
        %v1635 = vunpack.c.l.s4 1934713408
        %v1636 = vunpack.c.0.s8 %v1635
        %v1637 = vlaneseq
        %v1638 = vshrl.u32 %v1637, 7
        %v1639 = vsub.s32 %v1636, %v1638
        %v1640 = vrot.slane %v1633, %v1639
        %v1641 = vcombine.high %v1640, 0
        %v1644 = vpack.i.b16 %v1640, %v1615
        %v1645 = vshrl.u32 %v1615, 16
        %v1646 = vshrl.u32 %v1640, 16
        %v1647 = vpack.i.b16 %v1646, %v1645
        %v1650 = vpack.i.b16 %v1641, %v1616
        %v1651 = vshrl.u32 %v1616, 16
        %v1652 = vshrl.u32 %v1641, 16
        %v1653 = vpack.i.b16 %v1652, %v1651
        %vm1654 = vcmask 64512
        %v1656 = vsel %vm1654, %v1226, 0
        %vm1658 = vcmask 1043456
        %v1660 = vsel %vm1658, %v1644, 0
        %1662 = vmatprep.subr.bf16.mxu0 0
        %1663 = vmatpush1.bf16.msra.mxu0 0
        %1664 = vmatprep.subr.bf16.mxu0 0
        %1665 = vmatpush1.bf16.msra.mxu0 0
        %1666 = vmatprep.subr.bf16.mxu0 0
        %1667 = vmatpush1.bf16.msra.mxu0 0
        %1668 = vmatprep.subr.bf16.mxu0 0
        %1669 = vmatpush1.bf16.msra.mxu0 0
        %1670 = vmatprep.subr.bf16.mxu0 0
        %1671 = vmatpush1.bf16.msra.mxu0 0
        %1672 = vmatprep.subr.bf16.mxu0 0
        %1673 = vmatpush1.bf16.msra.mxu0 0
        %1674 = vmatprep.subr.bf16.mxu0 0
        %1675 = vmatpush1.bf16.msra.mxu0 0
        %1676 = vmatprep.subr.bf16.mxu0 0
        %1677 = vmatpush1.bf16.msra.mxu0 %v1660
        %1678 = vmatprep.subr.bf16.mxu0 0
        %1679 = vmatpush2.bf16.msra.mxu0 0
        %1680 = vmatprep.subr.bf16.mxu0 0
        %1681 = vmatpush2.bf16.msra.mxu0 0
        %1682 = vmatprep.subr.bf16.mxu0 0
        %1683 = vmatpush2.bf16.msra.mxu0 0
        %1684 = vmatprep.subr.bf16.mxu0 0
        %1685 = vmatpush2.bf16.msra.mxu0 0
        %1686 = vmatprep.subr.bf16.mxu0 0
        %1687 = vmatpush2.bf16.msra.mxu0 0
        %1688 = vmatprep.subr.bf16.mxu0 0
        %1689 = vmatpush2.bf16.msra.mxu0 0
        %1690 = vmatprep.subr.bf16.mxu0 0
        %1691 = vmatpush2.bf16.msra.mxu0 0
        %1692 = vmatprep.subr.bf16.mxu0 0
        %1693 = vmatpush2.bf16.msra.mxu0 0
        %1694 = vmatprep.mubr.bf16.mxu0 0
        %1695 = vmatmul.mubr.bf16.gmra.mxu0 %v1656
        %v1696 = vpop.f32.mrf.mxu0
        %v1697 = vadd.f32 0.0, %v1696
        %v1698 = vpop.f32.mrf.mxu0
        %v1699 = vpop.f32.mrf.mxu0
        %v1700 = vpop.f32.mrf.mxu0
        %1701 = vdwg.mxu0
        %v1703 = vsel %vm1654, %v1229, 0
        %v1706 = vsel %vm1658, %v1647, 0
        %1708 = vmatprep.subr.bf16.mxu0 0
        %1709 = vmatpush1.bf16.msra.mxu0 0
        %1710 = vmatprep.subr.bf16.mxu0 0
        %1711 = vmatpush1.bf16.msra.mxu0 0
        %1712 = vmatprep.subr.bf16.mxu0 0
        %1713 = vmatpush1.bf16.msra.mxu0 0
        %1714 = vmatprep.subr.bf16.mxu0 0
        %1715 = vmatpush1.bf16.msra.mxu0 0
        %1716 = vmatprep.subr.bf16.mxu0 0
        %1717 = vmatpush1.bf16.msra.mxu0 0
        %1718 = vmatprep.subr.bf16.mxu0 0
        %1719 = vmatpush1.bf16.msra.mxu0 0
        %1720 = vmatprep.subr.bf16.mxu0 0
        %1721 = vmatpush1.bf16.msra.mxu0 0
        %1722 = vmatprep.subr.bf16.mxu0 0
        %1723 = vmatpush1.bf16.msra.mxu0 %v1706
        %1724 = vmatprep.subr.bf16.mxu0 0
        %1725 = vmatpush2.bf16.msra.mxu0 0
        %1726 = vmatprep.subr.bf16.mxu0 0
        %1727 = vmatpush2.bf16.msra.mxu0 0
        %1728 = vmatprep.subr.bf16.mxu0 0
        %1729 = vmatpush2.bf16.msra.mxu0 0
        %1730 = vmatprep.subr.bf16.mxu0 0
        %1731 = vmatpush2.bf16.msra.mxu0 0
        %1732 = vmatprep.subr.bf16.mxu0 0
        %1733 = vmatpush2.bf16.msra.mxu0 0
        %1734 = vmatprep.subr.bf16.mxu0 0
        %1735 = vmatpush2.bf16.msra.mxu0 0
        %1736 = vmatprep.subr.bf16.mxu0 0
        %1737 = vmatpush2.bf16.msra.mxu0 0
        %1738 = vmatprep.subr.bf16.mxu0 0
        %1739 = vmatpush2.bf16.msra.mxu0 0
        %1740 = vmatprep.mubr.bf16.mxu0 0
        %1741 = vmatmul.mubr.bf16.gmra.mxu0 %v1703
        %v1742 = vpop.f32.mrf.mxu0
        %v1743 = vadd.f32 0.0, %v1742
        %v1744 = vpop.f32.mrf.mxu0
        %v1745 = vpop.f32.mrf.mxu0
        %v1746 = vpop.f32.mrf.mxu0
        %1747 = vdwg.mxu0
        %v1749 = vsel %vm1654, %v1232, 0
        %v1752 = vsel %vm1658, %v1650, 0
        %1754 = vmatprep.subr.bf16.mxu0 0
        %1755 = vmatpush1.bf16.msra.mxu0 0
        %1756 = vmatprep.subr.bf16.mxu0 0
        %1757 = vmatpush1.bf16.msra.mxu0 0
        %1758 = vmatprep.subr.bf16.mxu0 0
        %1759 = vmatpush1.bf16.msra.mxu0 0
        %1760 = vmatprep.subr.bf16.mxu0 0
        %1761 = vmatpush1.bf16.msra.mxu0 0
        %1762 = vmatprep.subr.bf16.mxu0 0
        %1763 = vmatpush1.bf16.msra.mxu0 0
        %1764 = vmatprep.subr.bf16.mxu0 0
        %1765 = vmatpush1.bf16.msra.mxu0 0
        %1766 = vmatprep.subr.bf16.mxu0 0
        %1767 = vmatpush1.bf16.msra.mxu0 0
        %1768 = vmatprep.subr.bf16.mxu0 0
        %1769 = vmatpush1.bf16.msra.mxu0 %v1752
        %1770 = vmatprep.subr.bf16.mxu0 0
        %1771 = vmatpush2.bf16.msra.mxu0 0
        %1772 = vmatprep.subr.bf16.mxu0 0
        %1773 = vmatpush2.bf16.msra.mxu0 0
        %1774 = vmatprep.subr.bf16.mxu0 0
        %1775 = vmatpush2.bf16.msra.mxu0 0
        %1776 = vmatprep.subr.bf16.mxu0 0
        %1777 = vmatpush2.bf16.msra.mxu0 0
        %1778 = vmatprep.subr.bf16.mxu0 0
        %1779 = vmatpush2.bf16.msra.mxu0 0
        %1780 = vmatprep.subr.bf16.mxu0 0
        %1781 = vmatpush2.bf16.msra.mxu0 0
        %1782 = vmatprep.subr.bf16.mxu0 0
        %1783 = vmatpush2.bf16.msra.mxu0 0
        %1784 = vmatprep.subr.bf16.mxu0 0
        %1785 = vmatpush2.bf16.msra.mxu0 0
        %1786 = vmatprep.mubr.bf16.mxu0 0
        %1787 = vmatmul.mubr.bf16.gmra.mxu0 %v1749
        %v1788 = vpop.f32.mrf.mxu0
        %v1789 = vadd.f32 0.0, %v1788
        %v1790 = vpop.f32.mrf.mxu0
        %v1791 = vpop.f32.mrf.mxu0
        %v1792 = vpop.f32.mrf.mxu0
        %1793 = vdwg.mxu0
        %v1795 = vsel %vm1654, %v1235, 0
        %v1798 = vsel %vm1658, %v1653, 0
        %1800 = vmatprep.subr.bf16.mxu0 0
        %1801 = vmatpush1.bf16.msra.mxu0 0
        %1802 = vmatprep.subr.bf16.mxu0 0
        %1803 = vmatpush1.bf16.msra.mxu0 0
        %1804 = vmatprep.subr.bf16.mxu0 0
        %1805 = vmatpush1.bf16.msra.mxu0 0
        %1806 = vmatprep.subr.bf16.mxu0 0
        %1807 = vmatpush1.bf16.msra.mxu0 0
        %1808 = vmatprep.subr.bf16.mxu0 0
        %1809 = vmatpush1.bf16.msra.mxu0 0
        %1810 = vmatprep.subr.bf16.mxu0 0
        %1811 = vmatpush1.bf16.msra.mxu0 0
        %1812 = vmatprep.subr.bf16.mxu0 0
        %1813 = vmatpush1.bf16.msra.mxu0 0
        %1814 = vmatprep.subr.bf16.mxu0 0
        %1815 = vmatpush1.bf16.msra.mxu0 %v1798
        %1816 = vmatprep.subr.bf16.mxu0 0
        %1817 = vmatpush2.bf16.msra.mxu0 0
        %1818 = vmatprep.subr.bf16.mxu0 0
        %1819 = vmatpush2.bf16.msra.mxu0 0
        %1820 = vmatprep.subr.bf16.mxu0 0
        %1821 = vmatpush2.bf16.msra.mxu0 0
        %1822 = vmatprep.subr.bf16.mxu0 0
        %1823 = vmatpush2.bf16.msra.mxu0 0
        %1824 = vmatprep.subr.bf16.mxu0 0
        %1825 = vmatpush2.bf16.msra.mxu0 0
        %1826 = vmatprep.subr.bf16.mxu0 0
        %1827 = vmatpush2.bf16.msra.mxu0 0
        %1828 = vmatprep.subr.bf16.mxu0 0
        %1829 = vmatpush2.bf16.msra.mxu0 0
        %1830 = vmatprep.subr.bf16.mxu0 0
        %1831 = vmatpush2.bf16.msra.mxu0 0
        %1832 = vmatprep.mubr.bf16.mxu0 0
        %1833 = vmatmul.mubr.bf16.gmra.mxu0 %v1795
        %v1834 = vpop.f32.mrf.mxu0
        %v1835 = vadd.f32 0.0, %v1834
        %v1836 = vpop.f32.mrf.mxu0
        %v1837 = vpop.f32.mrf.mxu0
        %v1838 = vpop.f32.mrf.mxu0
        %1839 = vdwg.mxu0
        %v1840 = vsel %vm712, 1, 0
        %vm1841 = vcmp.eq.s32.totalorder %v1840, 1
        %v1842 = vsel %vm1841, -1e+09, %v1697
        %v1843 = vsel %vm1841, -1e+09, %v1743
        %v1844 = vsel %vm1841, -1e+09, %v1789
        %v1845 = vsel %vm1841, -1e+09, %v1835
        %v1846 = vsel %vm1654, %v1842, -inf
        %1847 = vmax.xlane.f32.xlu0 %v1846
        %v1848 = vpop.xlane.xlu0 %1847
        %v1849 = vsel %vm1654, %v1843, -inf
        %1850 = vmax.xlane.f32.xlu0 %v1849
        %v1851 = vpop.xlane.xlu0 %1850
        %v1852 = vsel %vm1654, %v1844, -inf
        %1853 = vmax.xlane.f32.xlu0 %v1852
        %v1854 = vpop.xlane.xlu0 %1853
        %v1855 = vsel %vm1654, %v1845, -inf
        %1856 = vmax.xlane.f32.xlu0 %v1855
        %v1857 = vpop.xlane.xlu0 %1856
        %v1858 = vsub.f32 %v1842, %v1848
        %v1859 = vsub.f32 %v1843, %v1851
        %v1860 = vsub.f32 %v1844, %v1854
        %v1861 = vsub.f32 %v1845, %v1857
        %v1862 = vmul.f32 %v1858, 1.442695
        %v1863 = vpow.pop %v1862
        %v1864 = vmul.f32 %v1859, 1.442695
        %v1865 = vpow.pop %v1864
        %v1866 = vmul.f32 %v1860, 1.442695
        %v1867 = vpow.pop %v1866
        %v1868 = vmul.f32 %v1861, 1.442695
        %v1869 = vpow.pop %v1868
        %v1870 = vsel %vm1654, %v1863, 0.0
        %1871 = vadd.xlane.f32.xlu0 %v1870
        %v1872 = vpop.xlane.xlu0 %1871
        %v1873 = vsel %vm1654, %v1865, 0.0
        %1874 = vadd.xlane.f32.xlu0 %v1873
        %v1875 = vpop.xlane.xlu0 %1874
        %v1876 = vsel %vm1654, %v1867, 0.0
        %1877 = vadd.xlane.f32.xlu0 %v1876
        %v1878 = vpop.xlane.xlu0 %1877
        %v1879 = vsel %vm1654, %v1869, 0.0
        %1880 = vadd.xlane.f32.xlu0 %v1879
        %v1881 = vpop.xlane.xlu0 %1880
        %v1882 = vrcp.pop %v1872
        %v1883 = vrcp.pop %v1875
        %v1884 = vrcp.pop %v1878
        %v1885 = vrcp.pop %v1881
        %v1886 = vmul.f32 %v1863, %v1882
        %v1887 = vmul.f32 %v1865, %v1883
        %v1888 = vmul.f32 %v1867, %v1884
        %v1889 = vmul.f32 %v1869, %v1885
        %1890 = vst.msk [vmem:[%s706] sm:$0xff] %vm1654, %v1886
        %1891 = vst.msk [vmem:[%s706 + $0x8] sm:$0xff] %vm1654, %v1887
        %1892 = vst.msk [vmem:[%s706 + $0x10] sm:$0xff] %vm1654, %v1888
        %1893 = vst.msk [vmem:[%s706 + $0x18] sm:$0xff] %vm1654, %v1889
        %v1894 = vpack.c.bf16 %v1886, %v1886
        %v1895 = vpack.c.bf16 %v1887, %v1887
        %v1896 = vpack.c.bf16 %v1888, %v1888
        %v1897 = vpack.c.bf16 %v1889, %v1889
        %1898 = vxpose.xlu0.c.b16.start [1/8] %v1166, 128
        %1899 = vxpose.xlu0.c.b16.cont [2/8] 0, 128
        %1900 = vxpose.xlu0.c.b16.cont [3/8] 0, 128
        %1901 = vxpose.xlu0.c.b16.cont [4/8] 0, 128
        %1902 = vxpose.xlu0.c.b16.cont [5/8] 0, 128
        %1903 = vxpose.xlu0.c.b16.cont [6/8] 0, 128
        %1904 = vxpose.xlu0.c.b16.cont [7/8] 0, 128
        %1905 = vxpose.xlu0.c.b16.end [8/8] 0, 128
        %v1906 = vpop.trf.xlu0
        %v1907 = vpop.trf.xlu0
        %v1908 = vpop.trf.xlu0
        %v1909 = vpop.trf.xlu0
        %v1910 = vpop.trf.xlu0
        %v1911 = vpop.trf.xlu0
        %v1912 = vpop.trf.xlu0
        %v1913 = vpop.trf.xlu0
        %1914 = vxpose.xlu0.c.b16.start [1/8] %v1167, 128
        %1915 = vxpose.xlu0.c.b16.cont [2/8] 0, 128
        %1916 = vxpose.xlu0.c.b16.cont [3/8] 0, 128
        %1917 = vxpose.xlu0.c.b16.cont [4/8] 0, 128
        %1918 = vxpose.xlu0.c.b16.cont [5/8] 0, 128
        %1919 = vxpose.xlu0.c.b16.cont [6/8] 0, 128
        %1920 = vxpose.xlu0.c.b16.cont [7/8] 0, 128
        %1921 = vxpose.xlu0.c.b16.end [8/8] 0, 128
        %v1922 = vpop.trf.xlu0
        %v1923 = vpop.trf.xlu0
        %v1924 = vpop.trf.xlu0
        %v1925 = vpop.trf.xlu0
        %v1926 = vpop.trf.xlu0
        %v1927 = vpop.trf.xlu0
        %v1928 = vpop.trf.xlu0
        %v1929 = vpop.trf.xlu0
        %1930 = vxpose.xlu0.c.b16.start [1/8] %v1168, 128
        %1931 = vxpose.xlu0.c.b16.cont [2/8] 0, 128
        %1932 = vxpose.xlu0.c.b16.cont [3/8] 0, 128
        %1933 = vxpose.xlu0.c.b16.cont [4/8] 0, 128
        %1934 = vxpose.xlu0.c.b16.cont [5/8] 0, 128
        %1935 = vxpose.xlu0.c.b16.cont [6/8] 0, 128
        %1936 = vxpose.xlu0.c.b16.cont [7/8] 0, 128
        %1937 = vxpose.xlu0.c.b16.end [8/8] 0, 128
        %v1938 = vpop.trf.xlu0
        %v1939 = vpop.trf.xlu0
        %v1940 = vpop.trf.xlu0
        %v1941 = vpop.trf.xlu0
        %v1942 = vpop.trf.xlu0
        %v1943 = vpop.trf.xlu0
        %v1944 = vpop.trf.xlu0
        %v1945 = vpop.trf.xlu0
        %1946 = vxpose.xlu0.c.b16.start [1/8] %v1169, 128
        %1947 = vxpose.xlu0.c.b16.cont [2/8] 0, 128
        %1948 = vxpose.xlu0.c.b16.cont [3/8] 0, 128
        %1949 = vxpose.xlu0.c.b16.cont [4/8] 0, 128
        %1950 = vxpose.xlu0.c.b16.cont [5/8] 0, 128
        %1951 = vxpose.xlu0.c.b16.cont [6/8] 0, 128
        %1952 = vxpose.xlu0.c.b16.cont [7/8] 0, 128
        %1953 = vxpose.xlu0.c.b16.end [8/8] 0, 128
        %v1954 = vpop.trf.xlu0
        %v1955 = vpop.trf.xlu0
        %v1956 = vpop.trf.xlu0
        %v1957 = vpop.trf.xlu0
        %v1958 = vpop.trf.xlu0
        %v1959 = vpop.trf.xlu0
        %v1960 = vpop.trf.xlu0
        %v1961 = vpop.trf.xlu0
        %1962 = vxpose.xlu0.c.b16.start [1/8] %v1170, 128
        %1963 = vxpose.xlu0.c.b16.cont [2/8] 0, 128
        %1964 = vxpose.xlu0.c.b16.cont [3/8] 0, 128
        %1965 = vxpose.xlu0.c.b16.cont [4/8] 0, 128
        %1966 = vxpose.xlu0.c.b16.cont [5/8] 0, 128
        %1967 = vxpose.xlu0.c.b16.cont [6/8] 0, 128
        %1968 = vxpose.xlu0.c.b16.cont [7/8] 0, 128
        %1969 = vxpose.xlu0.c.b16.end [8/8] 0, 128
        %v1970 = vpop.trf.xlu0
        %v1971 = vpop.trf.xlu0
        %v1972 = vpop.trf.xlu0
        %v1973 = vpop.trf.xlu0
        %v1974 = vpop.trf.xlu0
        %v1975 = vpop.trf.xlu0
        %v1976 = vpop.trf.xlu0
        %v1977 = vpop.trf.xlu0
        %1978 = vxpose.xlu0.c.b16.start [1/8] %v1171, 128
        %1979 = vxpose.xlu0.c.b16.cont [2/8] 0, 128
        %1980 = vxpose.xlu0.c.b16.cont [3/8] 0, 128
        %1981 = vxpose.xlu0.c.b16.cont [4/8] 0, 128
        %1982 = vxpose.xlu0.c.b16.cont [5/8] 0, 128
        %1983 = vxpose.xlu0.c.b16.cont [6/8] 0, 128
        %1984 = vxpose.xlu0.c.b16.cont [7/8] 0, 128
        %1985 = vxpose.xlu0.c.b16.end [8/8] 0, 128
        %v1986 = vpop.trf.xlu0
        %v1987 = vpop.trf.xlu0
        %v1988 = vpop.trf.xlu0
        %v1989 = vpop.trf.xlu0
        %v1990 = vpop.trf.xlu0
        %v1991 = vpop.trf.xlu0
        %v1992 = vpop.trf.xlu0
        %v1993 = vpop.trf.xlu0
        %1994 = vxpose.xlu0.c.b16.start [1/8] %v1172, 128
        %1995 = vxpose.xlu0.c.b16.cont [2/8] 0, 128
        %1996 = vxpose.xlu0.c.b16.cont [3/8] 0, 128
        %1997 = vxpose.xlu0.c.b16.cont [4/8] 0, 128
        %1998 = vxpose.xlu0.c.b16.cont [5/8] 0, 128
        %1999 = vxpose.xlu0.c.b16.cont [6/8] 0, 128
        %2000 = vxpose.xlu0.c.b16.cont [7/8] 0, 128
        %2001 = vxpose.xlu0.c.b16.end [8/8] 0, 128
        %v2002 = vpop.trf.xlu0
        %v2003 = vpop.trf.xlu0
        %v2004 = vpop.trf.xlu0
        %v2005 = vpop.trf.xlu0
        %v2006 = vpop.trf.xlu0
        %v2007 = vpop.trf.xlu0
        %v2008 = vpop.trf.xlu0
        %v2009 = vpop.trf.xlu0
        %2010 = vxpose.xlu0.c.b16.start [1/8] %v1173, 128
        %2011 = vxpose.xlu0.c.b16.cont [2/8] 0, 128
        %2012 = vxpose.xlu0.c.b16.cont [3/8] 0, 128
        %2013 = vxpose.xlu0.c.b16.cont [4/8] 0, 128
        %2014 = vxpose.xlu0.c.b16.cont [5/8] 0, 128
        %2015 = vxpose.xlu0.c.b16.cont [6/8] 0, 128
        %2016 = vxpose.xlu0.c.b16.cont [7/8] 0, 128
        %2017 = vxpose.xlu0.c.b16.end [8/8] 0, 128
        %v2018 = vpop.trf.xlu0
        %v2019 = vpop.trf.xlu0
        %v2020 = vpop.trf.xlu0
        %v2021 = vpop.trf.xlu0
        %v2022 = vpop.trf.xlu0
        %v2023 = vpop.trf.xlu0
        %v2024 = vpop.trf.xlu0
        %v2025 = vpop.trf.xlu0
        %v2026 = vcombine.low %v1906, %v1970
        %v2028 = vunpack.c.l.s4 1983009808
        %v2029 = vunpack.c.0.s8 %v2028
        %v2030 = vlaneseq
        %v2031 = vshrl.u32 %v2030, 7
        %v2032 = vsub.s32 %v2029, %v2031
        %v2033 = vrot.slane %v2026, %v2032
        %v2034 = vcombine.low %v1938, %v2002
        %v2036 = vunpack.c.l.s4 1983009808
        %v2037 = vunpack.c.0.s8 %v2036
        %v2038 = vlaneseq
        %v2039 = vshrl.u32 %v2038, 7
        %v2040 = vsub.s32 %v2037, %v2039
        %v2041 = vrot.slane %v2034, %v2040
        %v2042 = vcombine.low %v2033, %v2041
        %v2043 = vcombine.high %v2033, %v2041
        %v2045 = vunpack.c.l.s4 1934713408
        %v2046 = vunpack.c.0.s8 %v2045
        %v2047 = vlaneseq
        %v2048 = vshrl.u32 %v2047, 7
        %v2049 = vsub.s32 %v2046, %v2048
        %v2050 = vrot.slane %v2042, %v2049
        %v2052 = vunpack.c.l.s4 1934713408
        %v2053 = vunpack.c.0.s8 %v2052
        %v2054 = vlaneseq
        %v2055 = vshrl.u32 %v2054, 7
        %v2056 = vsub.s32 %v2053, %v2055
        %v2057 = vrot.slane %v2043, %v2056
        %v2058 = vcombine.high %v2050, 0
        %v2059 = vcombine.high %v2057, 0
        %v2060 = vcombine.low %v1922, %v1986
        %v2062 = vunpack.c.l.s4 1983009808
        %v2063 = vunpack.c.0.s8 %v2062
        %v2064 = vlaneseq
        %v2065 = vshrl.u32 %v2064, 7
        %v2066 = vsub.s32 %v2063, %v2065
        %v2067 = vrot.slane %v2060, %v2066
        %v2068 = vcombine.low %v1954, %v2018
        %v2070 = vunpack.c.l.s4 1983009808
        %v2071 = vunpack.c.0.s8 %v2070
        %v2072 = vlaneseq
        %v2073 = vshrl.u32 %v2072, 7
        %v2074 = vsub.s32 %v2071, %v2073
        %v2075 = vrot.slane %v2068, %v2074
        %v2076 = vcombine.low %v2067, %v2075
        %v2077 = vcombine.high %v2067, %v2075
        %v2079 = vunpack.c.l.s4 1934713408
        %v2080 = vunpack.c.0.s8 %v2079
        %v2081 = vlaneseq
        %v2082 = vshrl.u32 %v2081, 7
        %v2083 = vsub.s32 %v2080, %v2082
        %v2084 = vrot.slane %v2076, %v2083
        %v2086 = vunpack.c.l.s4 1934713408
        %v2087 = vunpack.c.0.s8 %v2086
        %v2088 = vlaneseq
        %v2089 = vshrl.u32 %v2088, 7
        %v2090 = vsub.s32 %v2087, %v2089
        %v2091 = vrot.slane %v2077, %v2090
        %v2092 = vcombine.high %v2084, 0
        %v2093 = vcombine.high %v2091, 0
        %v2096 = vpack.i.b16 %v2084, %v2050
        %v2098 = vshrl.u32 %v2050, 16
        %v2099 = vshrl.u32 %v2084, 16
        %v2100 = vpack.i.b16 %v2099, %v2098
        %v2104 = vpack.i.b16 %v2092, %v2058
        %v2106 = vshrl.u32 %v2058, 16
        %v2107 = vshrl.u32 %v2092, 16
        %v2108 = vpack.i.b16 %v2107, %v2106
        %v2112 = vpack.i.b16 %v2091, %v2057
        %v2114 = vshrl.u32 %v2057, 16
        %v2115 = vshrl.u32 %v2091, 16
        %v2116 = vpack.i.b16 %v2115, %v2114
        %v2120 = vpack.i.b16 %v2093, %v2059
        %v2122 = vshrl.u32 %v2059, 16
        %v2123 = vshrl.u32 %v2093, 16
        %v2124 = vpack.i.b16 %v2123, %v2122
        %2126 = vxpose.xlu0.c.b16.start [1/8] %v2096, 128
        %2127 = vxpose.xlu0.c.b16.cont [2/8] 0, 128
        %2128 = vxpose.xlu0.c.b16.cont [3/8] 0, 128
        %2129 = vxpose.xlu0.c.b16.cont [4/8] 0, 128
        %2130 = vxpose.xlu0.c.b16.cont [5/8] 0, 128
        %2131 = vxpose.xlu0.c.b16.cont [6/8] 0, 128
        %2132 = vxpose.xlu0.c.b16.cont [7/8] 0, 128
        %2133 = vxpose.xlu0.c.b16.end [8/8] 0, 128
        %v2134 = vpop.trf.xlu0
        %v2135 = vpop.trf.xlu0
        %v2136 = vpop.trf.xlu0
        %v2137 = vpop.trf.xlu0
        %v2138 = vpop.trf.xlu0
        %v2139 = vpop.trf.xlu0
        %v2140 = vpop.trf.xlu0
        %v2141 = vpop.trf.xlu0
        %2142 = vxpose.xlu0.c.b16.start [1/8] %v2100, 128
        %2143 = vxpose.xlu0.c.b16.cont [2/8] 0, 128
        %2144 = vxpose.xlu0.c.b16.cont [3/8] 0, 128
        %2145 = vxpose.xlu0.c.b16.cont [4/8] 0, 128
        %2146 = vxpose.xlu0.c.b16.cont [5/8] 0, 128
        %2147 = vxpose.xlu0.c.b16.cont [6/8] 0, 128
        %2148 = vxpose.xlu0.c.b16.cont [7/8] 0, 128
        %2149 = vxpose.xlu0.c.b16.end [8/8] 0, 128
        %v2150 = vpop.trf.xlu0
        %v2151 = vpop.trf.xlu0
        %v2152 = vpop.trf.xlu0
        %v2153 = vpop.trf.xlu0
        %v2154 = vpop.trf.xlu0
        %v2155 = vpop.trf.xlu0
        %v2156 = vpop.trf.xlu0
        %v2157 = vpop.trf.xlu0
        %2158 = vxpose.xlu0.c.b16.start [1/8] %v2104, 128
        %2159 = vxpose.xlu0.c.b16.cont [2/8] 0, 128
        %2160 = vxpose.xlu0.c.b16.cont [3/8] 0, 128
        %2161 = vxpose.xlu0.c.b16.cont [4/8] 0, 128
        %2162 = vxpose.xlu0.c.b16.cont [5/8] 0, 128
        %2163 = vxpose.xlu0.c.b16.cont [6/8] 0, 128
        %2164 = vxpose.xlu0.c.b16.cont [7/8] 0, 128
        %2165 = vxpose.xlu0.c.b16.end [8/8] 0, 128
        %v2166 = vpop.trf.xlu0
        %v2167 = vpop.trf.xlu0
        %v2168 = vpop.trf.xlu0
        %v2169 = vpop.trf.xlu0
        %v2170 = vpop.trf.xlu0
        %v2171 = vpop.trf.xlu0
        %v2172 = vpop.trf.xlu0
        %v2173 = vpop.trf.xlu0
        %2174 = vxpose.xlu0.c.b16.start [1/8] %v2108, 128
        %2175 = vxpose.xlu0.c.b16.cont [2/8] 0, 128
        %2176 = vxpose.xlu0.c.b16.cont [3/8] 0, 128
        %2177 = vxpose.xlu0.c.b16.cont [4/8] 0, 128
        %2178 = vxpose.xlu0.c.b16.cont [5/8] 0, 128
        %2179 = vxpose.xlu0.c.b16.cont [6/8] 0, 128
        %2180 = vxpose.xlu0.c.b16.cont [7/8] 0, 128
        %2181 = vxpose.xlu0.c.b16.end [8/8] 0, 128
        %v2182 = vpop.trf.xlu0
        %v2183 = vpop.trf.xlu0
        %v2184 = vpop.trf.xlu0
        %v2185 = vpop.trf.xlu0
        %v2186 = vpop.trf.xlu0
        %v2187 = vpop.trf.xlu0
        %v2188 = vpop.trf.xlu0
        %v2189 = vpop.trf.xlu0
        %2190 = vxpose.xlu0.c.b16.start [1/8] %v2112, 128
        %2191 = vxpose.xlu0.c.b16.cont [2/8] 0, 128
        %2192 = vxpose.xlu0.c.b16.cont [3/8] 0, 128
        %2193 = vxpose.xlu0.c.b16.cont [4/8] 0, 128
        %2194 = vxpose.xlu0.c.b16.cont [5/8] 0, 128
        %2195 = vxpose.xlu0.c.b16.cont [6/8] 0, 128
        %2196 = vxpose.xlu0.c.b16.cont [7/8] 0, 128
        %2197 = vxpose.xlu0.c.b16.end [8/8] 0, 128
        %v2198 = vpop.trf.xlu0
        %v2199 = vpop.trf.xlu0
        %v2200 = vpop.trf.xlu0
        %v2201 = vpop.trf.xlu0
        %v2202 = vpop.trf.xlu0
        %v2203 = vpop.trf.xlu0
        %v2204 = vpop.trf.xlu0
        %v2205 = vpop.trf.xlu0
        %2206 = vxpose.xlu0.c.b16.start [1/8] %v2116, 128
        %2207 = vxpose.xlu0.c.b16.cont [2/8] 0, 128
        %2208 = vxpose.xlu0.c.b16.cont [3/8] 0, 128
        %2209 = vxpose.xlu0.c.b16.cont [4/8] 0, 128
        %2210 = vxpose.xlu0.c.b16.cont [5/8] 0, 128
        %2211 = vxpose.xlu0.c.b16.cont [6/8] 0, 128
        %2212 = vxpose.xlu0.c.b16.cont [7/8] 0, 128
        %2213 = vxpose.xlu0.c.b16.end [8/8] 0, 128
        %v2214 = vpop.trf.xlu0
        %v2215 = vpop.trf.xlu0
        %v2216 = vpop.trf.xlu0
        %v2217 = vpop.trf.xlu0
        %v2218 = vpop.trf.xlu0
        %v2219 = vpop.trf.xlu0
        %v2220 = vpop.trf.xlu0
        %v2221 = vpop.trf.xlu0
        %2222 = vxpose.xlu0.c.b16.start [1/8] %v2120, 128
        %2223 = vxpose.xlu0.c.b16.cont [2/8] 0, 128
        %2224 = vxpose.xlu0.c.b16.cont [3/8] 0, 128
        %2225 = vxpose.xlu0.c.b16.cont [4/8] 0, 128
        %2226 = vxpose.xlu0.c.b16.cont [5/8] 0, 128
        %2227 = vxpose.xlu0.c.b16.cont [6/8] 0, 128
        %2228 = vxpose.xlu0.c.b16.cont [7/8] 0, 128
        %2229 = vxpose.xlu0.c.b16.end [8/8] 0, 128
        %v2230 = vpop.trf.xlu0
        %v2231 = vpop.trf.xlu0
        %v2232 = vpop.trf.xlu0
        %v2233 = vpop.trf.xlu0
        %v2234 = vpop.trf.xlu0
        %v2235 = vpop.trf.xlu0
        %v2236 = vpop.trf.xlu0
        %v2237 = vpop.trf.xlu0
        %2238 = vxpose.xlu0.c.b16.start [1/8] %v2124, 128
        %2239 = vxpose.xlu0.c.b16.cont [2/8] 0, 128
        %2240 = vxpose.xlu0.c.b16.cont [3/8] 0, 128
        %2241 = vxpose.xlu0.c.b16.cont [4/8] 0, 128
        %2242 = vxpose.xlu0.c.b16.cont [5/8] 0, 128
        %2243 = vxpose.xlu0.c.b16.cont [6/8] 0, 128
        %2244 = vxpose.xlu0.c.b16.cont [7/8] 0, 128
        %2245 = vxpose.xlu0.c.b16.end [8/8] 0, 128
        %v2246 = vpop.trf.xlu0
        %v2247 = vpop.trf.xlu0
        %v2248 = vpop.trf.xlu0
        %v2249 = vpop.trf.xlu0
        %v2250 = vpop.trf.xlu0
        %v2251 = vpop.trf.xlu0
        %v2252 = vpop.trf.xlu0
        %v2253 = vpop.trf.xlu0
        %v2254 = vcombine.low %v2134, %v2198
        %v2256 = vunpack.c.l.s4 1983009808
        %v2257 = vunpack.c.0.s8 %v2256
        %v2258 = vlaneseq
        %v2259 = vshrl.u32 %v2258, 7
        %v2260 = vsub.s32 %v2257, %v2259
        %v2261 = vrot.slane %v2254, %v2260
        %v2262 = vcombine.low %v2166, %v2230
        %v2264 = vunpack.c.l.s4 1983009808
        %v2265 = vunpack.c.0.s8 %v2264
        %v2266 = vlaneseq
        %v2267 = vshrl.u32 %v2266, 7
        %v2268 = vsub.s32 %v2265, %v2267
        %v2269 = vrot.slane %v2262, %v2268
        %v2270 = vcombine.low %v2261, %v2269
        %v2272 = vunpack.c.l.s4 1934713408
        %v2273 = vunpack.c.0.s8 %v2272
        %v2274 = vlaneseq
        %v2275 = vshrl.u32 %v2274, 7
        %v2276 = vsub.s32 %v2273, %v2275
        %v2277 = vrot.slane %v2270, %v2276
        %v2278 = vcombine.high %v2277, 0
        %v2279 = vcombine.low %v2150, %v2214
        %v2281 = vunpack.c.l.s4 1983009808
        %v2282 = vunpack.c.0.s8 %v2281
        %v2283 = vlaneseq
        %v2284 = vshrl.u32 %v2283, 7
        %v2285 = vsub.s32 %v2282, %v2284
        %v2286 = vrot.slane %v2279, %v2285
        %v2287 = vcombine.low %v2182, %v2246
        %v2289 = vunpack.c.l.s4 1983009808
        %v2290 = vunpack.c.0.s8 %v2289
        %v2291 = vlaneseq
        %v2292 = vshrl.u32 %v2291, 7
        %v2293 = vsub.s32 %v2290, %v2292
        %v2294 = vrot.slane %v2287, %v2293
        %v2295 = vcombine.low %v2286, %v2294
        %v2297 = vunpack.c.l.s4 1934713408
        %v2298 = vunpack.c.0.s8 %v2297
        %v2299 = vlaneseq
        %v2300 = vshrl.u32 %v2299, 7
        %v2301 = vsub.s32 %v2298, %v2300
        %v2302 = vrot.slane %v2295, %v2301
        %v2303 = vcombine.high %v2302, 0
        %v2306 = vpack.i.b16 %v2302, %v2277
        %v2307 = vshrl.u32 %v2277, 16
        %v2308 = vshrl.u32 %v2302, 16
        %v2309 = vpack.i.b16 %v2308, %v2307
        %v2312 = vpack.i.b16 %v2303, %v2278
        %v2313 = vshrl.u32 %v2278, 16
        %v2314 = vshrl.u32 %v2303, 16
        %v2315 = vpack.i.b16 %v2314, %v2313
        %v2317 = vsel %vm1654, %v2306, 0
        %v2320 = vsel %vm1654, %v1894, 0
        %2322 = vmatprep.subr.bf16.mxu0 0
        %2323 = vmatpush1.bf16.xpose.msra.mxu0 0
        %2324 = vmatprep.subr.bf16.mxu0 0
        %2325 = vmatpush1.bf16.xpose.msra.mxu0 0
        %2326 = vmatprep.subr.bf16.mxu0 0
        %2327 = vmatpush1.bf16.xpose.msra.mxu0 0
        %2328 = vmatprep.subr.bf16.mxu0 0
        %2329 = vmatpush1.bf16.xpose.msra.mxu0 0
        %2330 = vmatprep.subr.bf16.mxu0 0
        %2331 = vmatpush1.bf16.xpose.msra.mxu0 0
        %2332 = vmatprep.subr.bf16.mxu0 0
        %2333 = vmatpush1.bf16.xpose.msra.mxu0 0
        %2334 = vmatprep.subr.bf16.mxu0 0
        %2335 = vmatpush1.bf16.xpose.msra.mxu0 0
        %2336 = vmatprep.subr.bf16.mxu0 0
        %2337 = vmatpush1.bf16.xpose.msra.mxu0 %v2320
        %2338 = vmatprep.subr.bf16.mxu0 0
        %2339 = vmatpush2.bf16.xpose.msra.mxu0 0
        %2340 = vmatprep.subr.bf16.mxu0 0
        %2341 = vmatpush2.bf16.xpose.msra.mxu0 0
        %2342 = vmatprep.subr.bf16.mxu0 0
        %2343 = vmatpush2.bf16.xpose.msra.mxu0 0
        %2344 = vmatprep.subr.bf16.mxu0 0
        %2345 = vmatpush2.bf16.xpose.msra.mxu0 0
        %2346 = vmatprep.subr.bf16.mxu0 0
        %2347 = vmatpush2.bf16.xpose.msra.mxu0 0
        %2348 = vmatprep.subr.bf16.mxu0 0
        %2349 = vmatpush2.bf16.xpose.msra.mxu0 0
        %2350 = vmatprep.subr.bf16.mxu0 0
        %2351 = vmatpush2.bf16.xpose.msra.mxu0 0
        %2352 = vmatprep.subr.bf16.mxu0 0
        %2353 = vmatpush2.bf16.xpose.msra.mxu0 0
        %2354 = vmatprep.mubr.bf16.mxu0 0
        %2355 = vmatmul.mubr.bf16.gmra.mxu0 %v2317
        %v2356 = vpop.f32.mrf.mxu0
        %v2357 = vadd.f32 0.0, %v2356
        %v2358 = vpop.f32.mrf.mxu0
        %v2359 = vpop.f32.mrf.mxu0
        %v2360 = vpop.f32.mrf.mxu0
        %2361 = vdwg.mxu0
        %v2363 = vsel %vm1654, %v2309, 0
        %v2366 = vsel %vm1654, %v1895, 0
        %2368 = vmatprep.subr.bf16.mxu0 0
        %2369 = vmatpush1.bf16.xpose.msra.mxu0 0
        %2370 = vmatprep.subr.bf16.mxu0 0
        %2371 = vmatpush1.bf16.xpose.msra.mxu0 0
        %2372 = vmatprep.subr.bf16.mxu0 0
        %2373 = vmatpush1.bf16.xpose.msra.mxu0 0
        %2374 = vmatprep.subr.bf16.mxu0 0
        %2375 = vmatpush1.bf16.xpose.msra.mxu0 0
        %2376 = vmatprep.subr.bf16.mxu0 0
        %2377 = vmatpush1.bf16.xpose.msra.mxu0 0
        %2378 = vmatprep.subr.bf16.mxu0 0
        %2379 = vmatpush1.bf16.xpose.msra.mxu0 0
        %2380 = vmatprep.subr.bf16.mxu0 0
        %2381 = vmatpush1.bf16.xpose.msra.mxu0 0
        %2382 = vmatprep.subr.bf16.mxu0 0
        %2383 = vmatpush1.bf16.xpose.msra.mxu0 %v2366
        %2384 = vmatprep.subr.bf16.mxu0 0
        %2385 = vmatpush2.bf16.xpose.msra.mxu0 0
        %2386 = vmatprep.subr.bf16.mxu0 0
        %2387 = vmatpush2.bf16.xpose.msra.mxu0 0
        %2388 = vmatprep.subr.bf16.mxu0 0
        %2389 = vmatpush2.bf16.xpose.msra.mxu0 0
        %2390 = vmatprep.subr.bf16.mxu0 0
        %2391 = vmatpush2.bf16.xpose.msra.mxu0 0
        %2392 = vmatprep.subr.bf16.mxu0 0
        %2393 = vmatpush2.bf16.xpose.msra.mxu0 0
        %2394 = vmatprep.subr.bf16.mxu0 0
        %2395 = vmatpush2.bf16.xpose.msra.mxu0 0
        %2396 = vmatprep.subr.bf16.mxu0 0
        %2397 = vmatpush2.bf16.xpose.msra.mxu0 0
        %2398 = vmatprep.subr.bf16.mxu0 0
        %2399 = vmatpush2.bf16.xpose.msra.mxu0 0
        %2400 = vmatprep.mubr.bf16.mxu0 0
        %2401 = vmatmul.mubr.bf16.gmra.mxu0 %v2363
        %v2402 = vpop.f32.mrf.mxu0
        %v2403 = vadd.f32 0.0, %v2402
        %v2404 = vpop.f32.mrf.mxu0
        %v2405 = vpop.f32.mrf.mxu0
        %v2406 = vpop.f32.mrf.mxu0
        %2407 = vdwg.mxu0
        %v2409 = vsel %vm1654, %v2312, 0
        %v2412 = vsel %vm1654, %v1896, 0
        %2414 = vmatprep.subr.bf16.mxu0 0
        %2415 = vmatpush1.bf16.xpose.msra.mxu0 0
        %2416 = vmatprep.subr.bf16.mxu0 0
        %2417 = vmatpush1.bf16.xpose.msra.mxu0 0
        %2418 = vmatprep.subr.bf16.mxu0 0
        %2419 = vmatpush1.bf16.xpose.msra.mxu0 0
        %2420 = vmatprep.subr.bf16.mxu0 0
        %2421 = vmatpush1.bf16.xpose.msra.mxu0 0
        %2422 = vmatprep.subr.bf16.mxu0 0
        %2423 = vmatpush1.bf16.xpose.msra.mxu0 0
        %2424 = vmatprep.subr.bf16.mxu0 0
        %2425 = vmatpush1.bf16.xpose.msra.mxu0 0
        %2426 = vmatprep.subr.bf16.mxu0 0
        %2427 = vmatpush1.bf16.xpose.msra.mxu0 0
        %2428 = vmatprep.subr.bf16.mxu0 0
        %2429 = vmatpush1.bf16.xpose.msra.mxu0 %v2412
        %2430 = vmatprep.subr.bf16.mxu0 0
        %2431 = vmatpush2.bf16.xpose.msra.mxu0 0
        %2432 = vmatprep.subr.bf16.mxu0 0
        %2433 = vmatpush2.bf16.xpose.msra.mxu0 0
        %2434 = vmatprep.subr.bf16.mxu0 0
        %2435 = vmatpush2.bf16.xpose.msra.mxu0 0
        %2436 = vmatprep.subr.bf16.mxu0 0
        %2437 = vmatpush2.bf16.xpose.msra.mxu0 0
        %2438 = vmatprep.subr.bf16.mxu0 0
        %2439 = vmatpush2.bf16.xpose.msra.mxu0 0
        %2440 = vmatprep.subr.bf16.mxu0 0
        %2441 = vmatpush2.bf16.xpose.msra.mxu0 0
        %2442 = vmatprep.subr.bf16.mxu0 0
        %2443 = vmatpush2.bf16.xpose.msra.mxu0 0
        %2444 = vmatprep.subr.bf16.mxu0 0
        %2445 = vmatpush2.bf16.xpose.msra.mxu0 0
        %2446 = vmatprep.mubr.bf16.mxu0 0
        %2447 = vmatmul.mubr.bf16.gmra.mxu0 %v2409
        %v2448 = vpop.f32.mrf.mxu0
        %v2449 = vadd.f32 0.0, %v2448
        %v2450 = vpop.f32.mrf.mxu0
        %v2451 = vpop.f32.mrf.mxu0
        %v2452 = vpop.f32.mrf.mxu0
        %2453 = vdwg.mxu0
        %v2455 = vsel %vm1654, %v2315, 0
        %v2458 = vsel %vm1654, %v1897, 0
        %2460 = vmatprep.subr.bf16.mxu0 0
        %2461 = vmatpush1.bf16.xpose.msra.mxu0 0
        %2462 = vmatprep.subr.bf16.mxu0 0
        %2463 = vmatpush1.bf16.xpose.msra.mxu0 0
        %2464 = vmatprep.subr.bf16.mxu0 0
        %2465 = vmatpush1.bf16.xpose.msra.mxu0 0
        %2466 = vmatprep.subr.bf16.mxu0 0
        %2467 = vmatpush1.bf16.xpose.msra.mxu0 0
        %2468 = vmatprep.subr.bf16.mxu0 0
        %2469 = vmatpush1.bf16.xpose.msra.mxu0 0
        %2470 = vmatprep.subr.bf16.mxu0 0
        %2471 = vmatpush1.bf16.xpose.msra.mxu0 0
        %2472 = vmatprep.subr.bf16.mxu0 0
        %2473 = vmatpush1.bf16.xpose.msra.mxu0 0
        %2474 = vmatprep.subr.bf16.mxu0 0
        %2475 = vmatpush1.bf16.xpose.msra.mxu0 %v2458
        %2476 = vmatprep.subr.bf16.mxu0 0
        %2477 = vmatpush2.bf16.xpose.msra.mxu0 0
        %2478 = vmatprep.subr.bf16.mxu0 0
        %2479 = vmatpush2.bf16.xpose.msra.mxu0 0
        %2480 = vmatprep.subr.bf16.mxu0 0
        %2481 = vmatpush2.bf16.xpose.msra.mxu0 0
        %2482 = vmatprep.subr.bf16.mxu0 0
        %2483 = vmatpush2.bf16.xpose.msra.mxu0 0
        %2484 = vmatprep.subr.bf16.mxu0 0
        %2485 = vmatpush2.bf16.xpose.msra.mxu0 0
        %2486 = vmatprep.subr.bf16.mxu0 0
        %2487 = vmatpush2.bf16.xpose.msra.mxu0 0
        %2488 = vmatprep.subr.bf16.mxu0 0
        %2489 = vmatpush2.bf16.xpose.msra.mxu0 0
        %2490 = vmatprep.subr.bf16.mxu0 0
        %2491 = vmatpush2.bf16.xpose.msra.mxu0 0
        %2492 = vmatprep.mubr.bf16.mxu0 0
        %2493 = vmatmul.mubr.bf16.gmra.mxu0 %v2455
        %v2494 = vpop.f32.mrf.mxu0
        %v2495 = vadd.f32 0.0, %v2494
        %v2496 = vpop.f32.mrf.mxu0
        %v2497 = vpop.f32.mrf.mxu0
        %v2498 = vpop.f32.mrf.mxu0
        %2499 = vdwg.mxu0
        %2500 = vxpose.xlu0.b32.start [1/16] %v2357, 128
        %2501 = vxpose.xlu0.b32.cont [2/16] 0.0, 128
        %2502 = vxpose.xlu0.b32.cont [3/16] 0.0, 128
        %2503 = vxpose.xlu0.b32.cont [4/16] 0.0, 128
        %2504 = vxpose.xlu0.b32.cont [5/16] 0.0, 128
        %2505 = vxpose.xlu0.b32.cont [6/16] 0.0, 128
        %2506 = vxpose.xlu0.b32.cont [7/16] 0.0, 128
        %2507 = vxpose.xlu0.b32.cont [8/16] 0.0, 128
        %2508 = vxpose.xlu0.b32.cont [9/16] 0.0, 128
        %2509 = vxpose.xlu0.b32.cont [10/16] 0.0, 128
        %2510 = vxpose.xlu0.b32.cont [11/16] 0.0, 128
        %2511 = vxpose.xlu0.b32.cont [12/16] 0.0, 128
        %2512 = vxpose.xlu0.b32.cont [13/16] 0.0, 128
        %2513 = vxpose.xlu0.b32.cont [14/16] 0.0, 128
        %2514 = vxpose.xlu0.b32.cont [15/16] 0.0, 128
        %2515 = vxpose.xlu0.b32.end [16/16] 0.0, 128
        %v2516 = vpop.trf.xlu0
        %v2517 = vpop.trf.xlu0
        %v2518 = vpop.trf.xlu0
        %v2519 = vpop.trf.xlu0
        %v2520 = vpop.trf.xlu0
        %v2521 = vpop.trf.xlu0
        %v2522 = vpop.trf.xlu0
        %v2523 = vpop.trf.xlu0
        %v2524 = vpop.trf.xlu0
        %v2525 = vpop.trf.xlu0
        %v2526 = vpop.trf.xlu0
        %v2527 = vpop.trf.xlu0
        %v2528 = vpop.trf.xlu0
        %v2529 = vpop.trf.xlu0
        %v2530 = vpop.trf.xlu0
        %v2531 = vpop.trf.xlu0
        %2532 = vxpose.xlu0.b32.start [1/16] %v2403, 128
        %2533 = vxpose.xlu0.b32.cont [2/16] 0.0, 128
        %2534 = vxpose.xlu0.b32.cont [3/16] 0.0, 128
        %2535 = vxpose.xlu0.b32.cont [4/16] 0.0, 128
        %2536 = vxpose.xlu0.b32.cont [5/16] 0.0, 128
        %2537 = vxpose.xlu0.b32.cont [6/16] 0.0, 128
        %2538 = vxpose.xlu0.b32.cont [7/16] 0.0, 128
        %2539 = vxpose.xlu0.b32.cont [8/16] 0.0, 128
        %2540 = vxpose.xlu0.b32.cont [9/16] 0.0, 128
        %2541 = vxpose.xlu0.b32.cont [10/16] 0.0, 128
        %2542 = vxpose.xlu0.b32.cont [11/16] 0.0, 128
        %2543 = vxpose.xlu0.b32.cont [12/16] 0.0, 128
        %2544 = vxpose.xlu0.b32.cont [13/16] 0.0, 128
        %2545 = vxpose.xlu0.b32.cont [14/16] 0.0, 128
        %2546 = vxpose.xlu0.b32.cont [15/16] 0.0, 128
        %2547 = vxpose.xlu0.b32.end [16/16] 0.0, 128
        %v2548 = vpop.trf.xlu0
        %v2549 = vpop.trf.xlu0
        %v2550 = vpop.trf.xlu0
        %v2551 = vpop.trf.xlu0
        %v2552 = vpop.trf.xlu0
        %v2553 = vpop.trf.xlu0
        %v2554 = vpop.trf.xlu0
        %v2555 = vpop.trf.xlu0
        %v2556 = vpop.trf.xlu0
        %v2557 = vpop.trf.xlu0
        %v2558 = vpop.trf.xlu0
        %v2559 = vpop.trf.xlu0
        %v2560 = vpop.trf.xlu0
        %v2561 = vpop.trf.xlu0
        %v2562 = vpop.trf.xlu0
        %v2563 = vpop.trf.xlu0
        %2564 = vxpose.xlu0.b32.start [1/16] %v2449, 128
        %2565 = vxpose.xlu0.b32.cont [2/16] 0.0, 128
        %2566 = vxpose.xlu0.b32.cont [3/16] 0.0, 128
        %2567 = vxpose.xlu0.b32.cont [4/16] 0.0, 128
        %2568 = vxpose.xlu0.b32.cont [5/16] 0.0, 128
        %2569 = vxpose.xlu0.b32.cont [6/16] 0.0, 128
        %2570 = vxpose.xlu0.b32.cont [7/16] 0.0, 128
        %2571 = vxpose.xlu0.b32.cont [8/16] 0.0, 128
        %2572 = vxpose.xlu0.b32.cont [9/16] 0.0, 128
        %2573 = vxpose.xlu0.b32.cont [10/16] 0.0, 128
        %2574 = vxpose.xlu0.b32.cont [11/16] 0.0, 128
        %2575 = vxpose.xlu0.b32.cont [12/16] 0.0, 128
        %2576 = vxpose.xlu0.b32.cont [13/16] 0.0, 128
        %2577 = vxpose.xlu0.b32.cont [14/16] 0.0, 128
        %2578 = vxpose.xlu0.b32.cont [15/16] 0.0, 128
        %2579 = vxpose.xlu0.b32.end [16/16] 0.0, 128
        %v2580 = vpop.trf.xlu0
        %v2581 = vpop.trf.xlu0
        %v2582 = vpop.trf.xlu0
        %v2583 = vpop.trf.xlu0
        %v2584 = vpop.trf.xlu0
        %v2585 = vpop.trf.xlu0
        %v2586 = vpop.trf.xlu0
        %v2587 = vpop.trf.xlu0
        %v2588 = vpop.trf.xlu0
        %v2589 = vpop.trf.xlu0
        %v2590 = vpop.trf.xlu0
        %v2591 = vpop.trf.xlu0
        %v2592 = vpop.trf.xlu0
        %v2593 = vpop.trf.xlu0
        %v2594 = vpop.trf.xlu0
        %v2595 = vpop.trf.xlu0
        %2596 = vxpose.xlu0.b32.start [1/16] %v2495, 128
        %2597 = vxpose.xlu0.b32.cont [2/16] 0.0, 128
        %2598 = vxpose.xlu0.b32.cont [3/16] 0.0, 128
        %2599 = vxpose.xlu0.b32.cont [4/16] 0.0, 128
        %2600 = vxpose.xlu0.b32.cont [5/16] 0.0, 128
        %2601 = vxpose.xlu0.b32.cont [6/16] 0.0, 128
        %2602 = vxpose.xlu0.b32.cont [7/16] 0.0, 128
        %2603 = vxpose.xlu0.b32.cont [8/16] 0.0, 128
        %2604 = vxpose.xlu0.b32.cont [9/16] 0.0, 128
        %2605 = vxpose.xlu0.b32.cont [10/16] 0.0, 128
        %2606 = vxpose.xlu0.b32.cont [11/16] 0.0, 128
        %2607 = vxpose.xlu0.b32.cont [12/16] 0.0, 128
        %2608 = vxpose.xlu0.b32.cont [13/16] 0.0, 128
        %2609 = vxpose.xlu0.b32.cont [14/16] 0.0, 128
        %2610 = vxpose.xlu0.b32.cont [15/16] 0.0, 128
        %2611 = vxpose.xlu0.b32.end [16/16] 0.0, 128
        %v2612 = vpop.trf.xlu0
        %v2613 = vpop.trf.xlu0
        %v2614 = vpop.trf.xlu0
        %v2615 = vpop.trf.xlu0
        %v2616 = vpop.trf.xlu0
        %v2617 = vpop.trf.xlu0
        %v2618 = vpop.trf.xlu0
        %v2619 = vpop.trf.xlu0
        %v2620 = vpop.trf.xlu0
        %v2621 = vpop.trf.xlu0
        %v2622 = vpop.trf.xlu0
        %v2623 = vpop.trf.xlu0
        %v2624 = vpop.trf.xlu0
        %v2625 = vpop.trf.xlu0
        %v2626 = vpop.trf.xlu0
        %v2627 = vpop.trf.xlu0
        %v2628 = vcombine.low %v2516, %v2580
        %v2629 = vcombine.high %v2516, %v2580
        %v2631 = vunpack.c.l.s4 1983009808
        %v2632 = vunpack.c.0.s8 %v2631
        %v2633 = vlaneseq
        %v2634 = vshrl.u32 %v2633, 7
        %v2635 = vsub.s32 %v2632, %v2634
        %v2636 = vrot.slane %v2628, %v2635
        %v2638 = vunpack.c.l.s4 1983009808
        %v2639 = vunpack.c.0.s8 %v2638
        %v2640 = vlaneseq
        %v2641 = vshrl.u32 %v2640, 7
        %v2642 = vsub.s32 %v2639, %v2641
        %v2643 = vrot.slane %v2629, %v2642
        %v2644 = vcombine.low %v2548, %v2612
        %v2645 = vcombine.high %v2548, %v2612
        %v2647 = vunpack.c.l.s4 1983009808
        %v2648 = vunpack.c.0.s8 %v2647
        %v2649 = vlaneseq
        %v2650 = vshrl.u32 %v2649, 7
        %v2651 = vsub.s32 %v2648, %v2650
        %v2652 = vrot.slane %v2644, %v2651
        %v2654 = vunpack.c.l.s4 1983009808
        %v2655 = vunpack.c.0.s8 %v2654
        %v2656 = vlaneseq
        %v2657 = vshrl.u32 %v2656, 7
        %v2658 = vsub.s32 %v2655, %v2657
        %v2659 = vrot.slane %v2645, %v2658
        %v2660 = vcombine.low %v2636, %v2652
        %v2661 = vcombine.high %v2636, %v2652
        %v2663 = vunpack.c.l.s4 1934713408
        %v2664 = vunpack.c.0.s8 %v2663
        %v2665 = vlaneseq
        %v2666 = vshrl.u32 %v2665, 7
        %v2667 = vsub.s32 %v2664, %v2666
        %v2668 = vrot.slane %v2660, %v2667
        %v2670 = vunpack.c.l.s4 1934713408
        %v2671 = vunpack.c.0.s8 %v2670
        %v2672 = vlaneseq
        %v2673 = vshrl.u32 %v2672, 7
        %v2674 = vsub.s32 %v2671, %v2673
        %v2675 = vrot.slane %v2661, %v2674
        %v2676 = vcombine.low %v2643, %v2659
        %v2677 = vcombine.high %v2643, %v2659
        %v2679 = vunpack.c.l.s4 1934713408
        %v2680 = vunpack.c.0.s8 %v2679
        %v2681 = vlaneseq
        %v2682 = vshrl.u32 %v2681, 7
        %v2683 = vsub.s32 %v2680, %v2682
        %v2684 = vrot.slane %v2676, %v2683
        %v2686 = vunpack.c.l.s4 1934713408
        %v2687 = vunpack.c.0.s8 %v2686
        %v2688 = vlaneseq
        %v2689 = vshrl.u32 %v2688, 7
        %v2690 = vsub.s32 %v2687, %v2689
        %v2691 = vrot.slane %v2677, %v2690
        %v2692 = vcombine.high %v2668, 0.0
        %v2693 = vcombine.high %v2675, 0.0
        %v2694 = vcombine.high %v2684, 0.0
        %v2695 = vcombine.high %v2691, 0.0
        %v2696 = vcombine.low %v2668, %v2675
        %v2698 = vunpack.c.l.s4 1983009808
        %v2699 = vunpack.c.0.s8 %v2698
        %v2700 = vlaneseq
        %v2701 = vshrl.u32 %v2700, 7
        %v2702 = vsub.s32 %v2699, %v2701
        %v2703 = vrot.slane %v2696, %v2702
        %v2704 = vcombine.low %v2692, %v2693
        %v2706 = vunpack.c.l.s4 1983009808
        %v2707 = vunpack.c.0.s8 %v2706
        %v2708 = vlaneseq
        %v2709 = vshrl.u32 %v2708, 7
        %v2710 = vsub.s32 %v2707, %v2709
        %v2711 = vrot.slane %v2704, %v2710
        %v2712 = vcombine.low %v2684, %v2691
        %v2714 = vunpack.c.l.s4 1983009808
        %v2715 = vunpack.c.0.s8 %v2714
        %v2716 = vlaneseq
        %v2717 = vshrl.u32 %v2716, 7
        %v2718 = vsub.s32 %v2715, %v2717
        %v2719 = vrot.slane %v2712, %v2718
        %v2720 = vcombine.low %v2694, %v2695
        %v2722 = vunpack.c.l.s4 1983009808
        %v2723 = vunpack.c.0.s8 %v2722
        %v2724 = vlaneseq
        %v2725 = vshrl.u32 %v2724, 7
        %v2726 = vsub.s32 %v2723, %v2725
        %v2727 = vrot.slane %v2720, %v2726
        %v2728 = vcombine.low %v2703, %v2711
        %v2729 = vcombine.high %v2703, %v2711
        %v2731 = vunpack.c.l.s4 1934713408
        %v2732 = vunpack.c.0.s8 %v2731
        %v2733 = vlaneseq
        %v2734 = vshrl.u32 %v2733, 7
        %v2735 = vsub.s32 %v2732, %v2734
        %v2736 = vrot.slane %v2728, %v2735
        %v2738 = vunpack.c.l.s4 1934713408
        %v2739 = vunpack.c.0.s8 %v2738
        %v2740 = vlaneseq
        %v2741 = vshrl.u32 %v2740, 7
        %v2742 = vsub.s32 %v2739, %v2741
        %v2743 = vrot.slane %v2729, %v2742
        %v2744 = vcombine.low %v2719, %v2727
        %v2745 = vcombine.high %v2719, %v2727
        %v2747 = vunpack.c.l.s4 1934713408
        %v2748 = vunpack.c.0.s8 %v2747
        %v2749 = vlaneseq
        %v2750 = vshrl.u32 %v2749, 7
        %v2751 = vsub.s32 %v2748, %v2750
        %v2752 = vrot.slane %v2744, %v2751
        %v2754 = vunpack.c.l.s4 1934713408
        %v2755 = vunpack.c.0.s8 %v2754
        %v2756 = vlaneseq
        %v2757 = vshrl.u32 %v2756, 7
        %v2758 = vsub.s32 %v2755, %v2757
        %v2759 = vrot.slane %v2745, %v2758
        %v2760 = vcombine.low %v2736, %v2752
        %v2761 = vcombine.high %v2736, %v2752
        %v2762 = vcombine.low %v2743, %v2759
        %v2763 = vcombine.high %v2743, %v2759
        %2765 = vrot.lane.b32.xlu0 %v2761, 8
        %v2766 = vpop.permute.xlu0 %2765
        %2769 = vrot.lane.b32.xlu0 %v2762, 16
        %v2770 = vpop.permute.xlu0 %2769
        %2773 = vrot.lane.b32.xlu0 %v2763, 24
        %v2774 = vpop.permute.xlu0 %2773
        %v2776 = vsel %vm1654, %v2760, %v2766
        %vm2777 = vcmask 130048
        %v2778 = vsel %vm2777, %v2776, %v2770
        %vm2779 = vcmask 195584
        %v2780 = vsel %vm2779, %v2778, %v2774
        %v2781 = vpack.c.bf16 %v2780, %v2780
        %v2782 = vld [vmem:[%s10] sm:$0xf]
        %v2783 = vld [vmem:[%s10 + $0x4] sm:$0xf]
        %v2784 = vld [vmem:[%s10 + $0x8] sm:$0xf]
        %v2785 = vld [vmem:[%s10 + $0xc] sm:$0xf]
        %v2786 = vld [vmem:[%s11] sm:$0x1]
        %v2788 = vlaneseq
        %v2789 = vshrl.u32 %v2788, 7
        %v2790 = vsub.s32 0, %v2789
        %v2791 = vrot.slane %v2786, %v2790
        %v2797 = vunpack.c.l.b16 %v2782
        %v2798 = vunpack.c.l.b16 %v2783
        %v2799 = vunpack.c.l.b16 %v2784
        %v2800 = vunpack.c.l.b16 %v2785
        %v2801 = vpack.c.b16 %v2798, %v2797
        %v2802 = vpack.c.b16 %v2800, %v2799
        %v2806 = vsel %vm737, %v2781, 0
        %2808 = vmatprep.subr.bf16.mxu0 0
        %2809 = vmatpush1.bf16.msra.mxu0 0
        %2810 = vmatprep.subr.bf16.mxu0 0
        %2811 = vmatpush1.bf16.msra.mxu0 0
        %2812 = vmatprep.subr.bf16.mxu0 0
        %2813 = vmatpush1.bf16.msra.mxu0 0
        %2814 = vmatprep.subr.bf16.mxu0 0
        %2815 = vmatpush1.bf16.msra.mxu0 0
        %2816 = vmatprep.subr.bf16.mxu0 0
        %2817 = vmatpush1.bf16.msra.mxu0 0
        %2818 = vmatprep.subr.bf16.mxu0 0
        %2819 = vmatpush1.bf16.msra.mxu0 0
        %2820 = vmatprep.subr.bf16.mxu0 0
        %2821 = vmatpush1.bf16.msra.mxu0 %v2802
        %2822 = vmatprep.subr.bf16.mxu0 0
        %2823 = vmatpush1.bf16.msra.mxu0 %v2801
        %2824 = vmatprep.subr.bf16.mxu0 0
        %2825 = vmatpush2.bf16.msra.mxu0 0
        %2826 = vmatprep.subr.bf16.mxu0 0
        %2827 = vmatpush2.bf16.msra.mxu0 0
        %2828 = vmatprep.subr.bf16.mxu0 0
        %2829 = vmatpush2.bf16.msra.mxu0 0
        %2830 = vmatprep.subr.bf16.mxu0 0
        %2831 = vmatpush2.bf16.msra.mxu0 0
        %2832 = vmatprep.subr.bf16.mxu0 0
        %2833 = vmatpush2.bf16.msra.mxu0 0
        %2834 = vmatprep.subr.bf16.mxu0 0
        %2835 = vmatpush2.bf16.msra.mxu0 0
        %2836 = vmatprep.subr.bf16.mxu0 0
        %2837 = vmatpush2.bf16.msra.mxu0 0
        %2838 = vmatprep.subr.bf16.mxu0 0
        %2839 = vmatpush2.bf16.msra.mxu0 0
        %2840 = vmatprep.mubr.bf16.mxu0 0
        %2841 = vmatmul.mubr.bf16.gmra.mxu0 %v2806
        %v2842 = vpop.f32.mrf.mxu0
        %v2843 = vadd.f32 %v2791, %v2842
        %v2844 = vpop.f32.mrf.mxu0
        %v2845 = vpop.f32.mrf.mxu0
        %v2846 = vpop.f32.mrf.mxu0
        %2847 = vdwg.mxu0
        %v2848 = vadd.f32 %v2843, %v708
        %v2849 = vsel %vm737, %v2848, 0.0
        %2850 = vadd.xlane.f32.xlu0 %v2849
        %v2851 = vpop.xlane.xlu0 %2850
        %v2852 = vrcp.pop 32.0
        %v2853 = vmul.f32 %v2851, %v2852
        %v2854 = vsub.f32 %v2848, %v2853
        %v2855 = vmul.f32 %v2854, %v2854
        %v2856 = vsel %vm737, %v2855, 0.0
        %2857 = vadd.xlane.f32.xlu0 %v2856
        %v2858 = vpop.xlane.xlu0 %2857
        %v2859 = vmul.f32 %v2858, %v2852
        %v2860 = vadd.f32 %v2859, 1e-05
        %v2861 = vrsqrt.pop %v2860
        %v2862 = vmul.f32 %v2854, %v2861
        %v2863 = vld [vmem:[%s12] sm:$0x1]
        %v2865 = vlaneseq
        %v2866 = vshrl.u32 %v2865, 7
        %v2867 = vsub.s32 0, %v2866
        %v2868 = vrot.slane %v2863, %v2867
        %v2870 = vmul.f32 %v2862, %v2868
        %v2871 = vld [vmem:[%s13] sm:$0x1]
        %v2873 = vlaneseq
        %v2874 = vshrl.u32 %v2873, 7
        %v2875 = vsub.s32 0, %v2874
        %v2876 = vrot.slane %v2871, %v2875
        %v2878 = vadd.f32 %v2870, %v2876
        %2879 = vst.msk [vmem:[%s699] sm:$0xff] %vm737, %v2878
        %s2880 = sand.u32 %s384, 1
        %s2881 = scalar_lea.sflag [#allocation4], %s2880
        %s2882 = sand.u32 %s384, 1
        %s2883 = smul.addr %s2882, 8
        %s2884 = scalar_lea.vmem [#allocation16], %s2883
        %s2885 = sand.u32 %s412, 1
        %s2886 = scalar_lea.sflag [#allocation18], %s2885
        %s2887 = sand.u32 %s412, 1
        %s2888 = smul.addr %s2887, 32
        %s2889 = scalar_lea.vmem [#allocation17], %s2888
        // Predicated region
        $region109: #{tpu_custom_call.1} parent=75 // pred_check
          %p2890 = pneg %p394
        $region110: #{tpu_custom_call.1} parent=75 // pred_check_branch
          %2892 = sbr.rel (%p2890) target = $region112
        $region111: #{tpu_custom_call.1} parent=75 // pred_region
          %s2894 = ssub.s32 128, 128
          %2895 = vsyncadd %s2881, %s2894
          %s2896 = sadd.s32 %s49, %s48
          %s2897 = smul.addr %s2896, 128
          %s2898 = scalar_lea.hbm %s14, %s2897
          %s2900 = sshll.u32 %s2884, 4
          %s2901 = int_to_ptr.vmem [resolvable:$true] %s2900
          %2903 = dma.vmem_to_hbm [thread:$0]  %s2901, 128, %s2898, %s2881
        $region112: #{tpu_custom_call.1} parent=75 // pred_fallthru
          _
        // Predicated region
        $region113: #{tpu_custom_call.1} parent=75 // pred_check
          %p2904 = pneg %p422
        $region114: #{tpu_custom_call.1} parent=75 // pred_check_branch
          %2906 = sbr.rel (%p2904) target = $region116
        $region115: #{tpu_custom_call.1} parent=75 // pred_region
          %s2908 = ssub.s32 512, 512
          %2909 = vsyncadd %s2886, %s2908
          %s2910 = smul.addr %s48, 4
          %s2911 = sadd.s32 %s49, %s2910
          %s2912 = smul.addr %s2911, 128
          %s2913 = scalar_lea.hbm %s15, %s2912
          %s2914 = sshll.u32 %s2889, 4
          %s2915 = int_to_ptr.vmem [resolvable:$true] %s2914
          %2920 = dma.vmem_to_hbm [thread:$0]  %s2915, 512, %s2913, %s2886, 128, 128, 8
        $region116: #{tpu_custom_call.1} parent=75 // pred_fallthru
          _
      $region76: #{tpu_custom_call.1} parent=5 // pred_fallthru
        _
      %p2921 = scmp.le.s32.totalorder 2, %s39
      // Predicated region
      $region117: #{tpu_custom_call.1} parent=5 // pred_check
        %p2922 = pneg %p2921
      $region118: #{tpu_custom_call.1} parent=5 // pred_check_branch
        %2924 = sbr.rel (%p2922) target = $region120
      $region119: #{tpu_custom_call.1} parent=5 // pred_region
        %s2925 = ssub.s32 %s39, 2
        // Predicated region
        $region121: #{tpu_custom_call.1} parent=119 // pred_check
          %p2926 = pneg %p400
        $region122: #{tpu_custom_call.1} parent=119 // pred_check_branch
          %2928 = sbr.rel (%p2926) target = $region124
        $region123: #{tpu_custom_call.1} parent=119 // pred_region
          %s2929 = sand.u32 %s385, 1
          %s2930 = scalar_lea.sflag [#allocation4], %s2929
          %s2931 = sand.u32 %s385, 1
          %s2932 = smul.addr %s2931, 8
          %s2933 = scalar_lea.vmem [#allocation16], %s2932
          %2934 = dma.done %s2930, 128
        $region124: #{tpu_custom_call.1} parent=119 // pred_fallthru
          _
        // Predicated region
        $region125: #{tpu_custom_call.1} parent=119 // pred_check
          %p2935 = pneg %p428
        $region126: #{tpu_custom_call.1} parent=119 // pred_check_branch
          %2937 = sbr.rel (%p2935) target = $region128
        $region127: #{tpu_custom_call.1} parent=119 // pred_region
          %s2938 = sand.u32 %s413, 1
          %s2939 = scalar_lea.sflag [#allocation18], %s2938
          %s2940 = sand.u32 %s413, 1
          %s2941 = smul.addr %s2940, 32
          %s2942 = scalar_lea.vmem [#allocation17], %s2941
          %2943 = dma.done %s2939, 512
        $region128: #{tpu_custom_call.1} parent=119 // pred_fallthru
          _
      $region120: #{tpu_custom_call.1} parent=5 // pred_fallthru
        _
    $region6: #{tpu_custom_call.1} parent=1 // loop_footer
      %s43 = sadd.s32 1, %s39
    $region7: #{tpu_custom_call.1} parent=1 // loop_footer_branch
      %38 = sbr.rel target = $region3
    $region8: #{tpu_custom_call.1} parent=1 // loop_exit
      _
    %2944 = vsyncpa [#allocation3], 1
    %s2945 = scalar_lea.sflag [#allocation3], 1
    %2946 = vsyncpa %s2945, 1
    %2947 = vsyncpa [#allocation6], 1
    %s2948 = scalar_lea.sflag [#allocation6], 1
    %2949 = vsyncpa %s2948, 1
    %2950 = vsyncpa [#allocation9], 1
    %s2951 = scalar_lea.sflag [#allocation9], 1
    %2952 = vsyncpa %s2951, 1
    %2953 = vsyncpa [#allocation12], 1
    %2954 = vsyncpa [#allocation15], 1
    %2955 = vsyncpa [#allocation4], 1
    %s2956 = scalar_lea.sflag [#allocation4], 1
    %2957 = vsyncpa %s2956, 1
    %2958 = vsyncpa [#allocation18], 1
    %s2959 = scalar_lea.sflag [#allocation18], 1
    %2960 = vsyncpa %s2959, 1

</llo_original>
